<compile_context>
chip_gen: v7x
topology: tpu7x:2x2x1
jax: 0.10.0
libtpu: 0.0.40
codegen_flags: <defaults>
</compile_context>

<pallas_src>
import math

import jax
import jax.numpy as jnp
from jax import lax
from jax.experimental import pallas as pl
from jax.experimental.pallas import tpu as pltpu

# -------- module hyper-parameters (ArcFaceWithTimm defaults, small num_labels) ----
BACKBONE_DIM = 768          # timm convnext_small feature dim
MIDDLE = 512                # teacher_embed_size
FC2_OUT = 4 * 64            # int(out_features * 4) = 256
EMBED_DIM = 64
NUM_LABELS = 256            # "small" class count for the demo
ARC_SCALE = 30.0
ARC_MARGIN = 0.3
LN_EPS = 1e-5
L2_EPS = 1e-12

_COS_M = math.cos(ARC_MARGIN)
_SIN_M = math.sin(ARC_MARGIN)
_TH = math.cos(math.pi - ARC_MARGIN)
_MM = math.sin(math.pi - ARC_MARGIN) * ARC_MARGIN
_SQRT1_2 = 1.0 / math.sqrt(2.0)


def _arcface_head_kernel(x_ref, w1t_ref, b1_ref, pool_ref, w2t_ref, b2_ref,
                         gamma_ref, beta_ref, w3t_ref, b3_ref, wctn_ref,
                         labels_ref, logits_ref):
    x = x_ref[...]                                                    # [TB, 768] bf16

    # ---- Projection.fc1 (bf16 operands, f32 accumulation on the MXU) ----
    h1 = jnp.dot(x, w1t_ref[...], preferred_element_type=jnp.float32) + b1_ref[...]
    h1_bf = h1.astype(jnp.bfloat16)

    # ---- AdaptiveAvgPool1d(64) over the 512 features (window avg of 8) ----
    # expressed as a matmul with a constant [512, 64] block-averaging matrix
    baseline = jnp.dot(h1_bf, pool_ref[...],
                       preferred_element_type=jnp.float32)            # [TB, 64]

    # ---- Projection.fc2 ----
    h2 = jnp.dot(h1_bf, w2t_ref[...],
                 preferred_element_type=jnp.float32) + b2_ref[...]    # [TB, 256]

    # ---- Projection.norm (LayerNorm over last dim, biased variance) ----
    mu = jnp.mean(h2, axis=-1, keepdims=True)
    var = jnp.mean(jnp.square(h2 - mu), axis=-1, keepdims=True)
    h2 = (h2 - mu) * lax.rsqrt(var + LN_EPS) * gamma_ref[...] + beta_ref[...]

    # ---- Projection.gelu (exact erf form, matches nn.GELU default) ----
    # TODO(synk): tanh-approx GELU would route through the EUP slot; exact erf kept
    #             for fidelity to nn.GELU().
    h2 = 0.5 * h2 * (1.0 + lax.erf(h2 * _SQRT1_2))

    # ---- Projection.fc3 + baseline residual ----
    emb = (jnp.dot(h2.astype(jnp.bfloat16), w3t_ref[...],
                   preferred_element_type=jnp.float32)
           + b3_ref[...] + baseline)                                  # [TB, 64]

    # ---- ArcMarginProduct_subcenter (k=1): cosine(normalize(emb), normalized centers)
    # F.normalize: x / max(||x||, eps)  ==  x * rsqrt(max(||x||^2, eps^2))
    sq = jnp.sum(emb * emb, axis=-1, keepdims=True)
    emb_n = emb * lax.rsqrt(jnp.maximum(sq, L2_EPS * L2_EPS))
    cosine = jnp.dot(emb_n, wctn_ref[...],
                     preferred_element_type=jnp.float32)              # [TB, NUM_LABELS]

    # ---- ArcFace margin (logits already float32) ----
    sine = jnp.sqrt(jnp.maximum(1.0 - cosine * cosine, 0.0))
    phi = cosine * _COS_M - sine * _SIN_M
    phi = jnp.where(cosine > _TH, phi, cosine - _MM)
    classes = lax.broadcasted_iota(jnp.int32, cosine.shape, 1)
    logits_ref[...] = jnp.where(classes == labels_ref[...], phi, cosine) * ARC_SCALE


def arcface_head(features, labels, params, *, tb=256):
    """features: [B, 768] f32, labels: [B] int32 -> logits [B, NUM_LABELS] f32.

    tb: batch tile.  Sweep 128-512; prefer multiples of 256 on v6e, 128 on v5e,
    and tb <= B/2 on v7x so >=2 parallel grid steps land on the two TensorCores.
    """
    B = features.shape[0]

    # clamp tile to the batch, keep it a multiple of 8 (sublane), pad B if needed
    tb_eff = max(8, min(tb, B))
    tb_eff = ((tb_eff + 7) // 8) * 8
    Bp = pl.cdiv(B, tb_eff) * tb_eff
    if Bp != B:
        features = jnp.pad(features, ((0, Bp - B), (0, 0)))
        labels = jnp.pad(labels, (0, Bp - B))
    grid = (Bp // tb_eff,)

    # ---- host-side precompute (hoisted out of the kernel) ----
    x_bf = features.astype(jnp.bfloat16)
    w1t = params["w1t"].astype(jnp.bfloat16)
    pool = params["pool"].astype(jnp.bfloat16)     # 1/8 entries: exact in bf16
    w2t = params["w2t"].astype(jnp.bfloat16)
    w3t = params["w3t"].astype(jnp.bfloat16)
    # class-center normalization is constant -> precompute once (f32 for accuracy)
    wct = params["wct"]
    wct_n = wct * (1.0 / jnp.maximum(
        jnp.sqrt(jnp.sum(wct * wct, axis=0, keepdims=True)), L2_EPS))
    labels2d = labels.reshape(Bp, 1).astype(jnp.int32)

    def full(shape):
        return pl.BlockSpec(shape, lambda i, _n=len(shape): (0,) * _n)

    in_specs = [
        pl.BlockSpec((tb_eff, BACKBONE_DIM), lambda i: (i, 0)),   # features (bf16)
        full((BACKBONE_DIM, MIDDLE)),                             # w1t (bf16)
        full((1, MIDDLE)),                                        # b1
        full((MIDDLE, EMBED_DIM)),                                # pooling matrix (bf16)
        full((MIDDLE, FC2_OUT)),                                  # w2t (bf16)
        full((1, FC2_OUT)),                                       # b2
        full((1, FC2_OUT)),                                       # ln gamma
        full((1, FC2_OUT)),                                       # ln beta
        full((FC2_OUT, EMBED_DIM)),                               # w3t (bf16)
        full((1, EMBED_DIM)),                                     # b3
        full((EMBED_DIM, NUM_LABELS)),                            # normalized centers (f32)
        pl.BlockSpec((tb_eff, 1), lambda i: (i, 0)),              # labels
    ]
    out_specs = pl.BlockSpec((tb_eff, NUM_LABELS), lambda i: (i, 0))

    # advisory cost estimate for the XLA scheduler
    matmul_flops = 2 * Bp * (BACKBONE_DIM * MIDDLE + MIDDLE * EMBED_DIM
                             + MIDDLE * FC2_OUT + FC2_OUT * EMBED_DIM
                             + EMBED_DIM * NUM_LABELS)
    weight_bytes = (2 * (BACKBONE_DIM * MIDDLE + MIDDLE * EMBED_DIM
                         + MIDDLE * FC2_OUT + FC2_OUT * EMBED_DIM)
                    + 4 * EMBED_DIM * NUM_LABELS
                    + 4 * (MIDDLE + 3 * FC2_OUT + EMBED_DIM))
    bytes_accessed = (weight_bytes * grid[0]
                      + Bp * BACKBONE_DIM * 2 + Bp * NUM_LABELS * 4 + Bp * 4)
    cost = pl.CostEstimate(flops=matmul_flops,
                           transcendentals=Bp * (FC2_OUT + 2),
                           bytes_accessed=bytes_accessed)

    out = pl.pallas_call(
        _arcface_head_kernel,
        grid=grid,
        in_specs=in_specs,
        out_specs=out_specs,
        out_shape=jax.ShapeDtypeStruct((Bp, NUM_LABELS), jnp.float32),
        compiler_params=pltpu.CompilerParams(
            dimension_semantics=("parallel",),
            vmem_limit_bytes=64 * 1024 * 1024,
        ),
        cost_estimate=cost,
    )(x_bf, w1t, params["b1"], pool, w2t, params["b2"],
      params["gamma"], params["beta"], w3t, params["b3"], wct_n, labels2d)

    return out[:B] if Bp != B else out


# ----------------------------- plain-JAX reference (f32) -----------------------------
def reference_head(x, labels, p):
    h1 = x @ p["w1t"] + p["b1"]
    baseline = h1 @ p["pool"]
    h2 = h1 @ p["w2t"] + p["b2"]
    mu = jnp.mean(h2, -1, keepdims=True)
    var = jnp.mean((h2 - mu) ** 2, -1, keepdims=True)
    h2 = (h2 - mu) * lax.rsqrt(var + LN_EPS) * p["gamma"] + p["beta"]
    h2 = 0.5 * h2 * (1.0 + lax.erf(h2 / math.sqrt(2.0)))
    emb = h2 @ p["w3t"] + p["b3"] + baseline
    emb_n = emb / jnp.maximum(jnp.linalg.norm(emb, axis=-1, keepdims=True), L2_EPS)
    wct_n = p["wct"] / jnp.maximum(jnp.linalg.norm(p["wct"], axis=0, keepdims=True), L2_EPS)
    cosine = emb_n @ wct_n
    sine = jnp.sqrt(jnp.maximum(1.0 - cosine ** 2, 0.0))
    phi = cosine * _COS_M - sine * _SIN_M
    phi = jnp.where(cosine > _TH, phi, cosine - _MM)
    onehot = jax.nn.one_hot(labels, NUM_LABELS, dtype=jnp.float32)
    return (onehot * phi + (1.0 - onehot) * cosine) * ARC_SCALE


def init_params(key):
    ks = jax.random.split(key, 8)

    def lin(k, fan_in, fan_out):
        bound = 1.0 / math.sqrt(fan_in)
        kw, kb = jax.random.split(k)
        w = jax.random.uniform(kw, (fan_in, fan_out), jnp.float32, -bound, bound)
        b = jax.random.uniform(kb, (1, fan_out), jnp.float32, -bound, bound)
        return w, b

    w1t, b1 = lin(ks[0], BACKBONE_DIM, MIDDLE)
    w2t, b2 = lin(ks[1], MIDDLE, FC2_OUT)
    w3t, b3 = lin(ks[2], FC2_OUT, EMBED_DIM)
    # AdaptiveAvgPool1d(64) on length 512 => average of non-overlapping windows of 8
    rows = jnp.arange(MIDDLE)[:, None]
    cols = jnp.arange(EMBED_DIM)[None, :]
    pool = jnp.where(rows // (MIDDLE // EMBED_DIM) == cols, 1.0 / (MIDDLE // EMBED_DIM), 0.0)
    wct = jax.random.uniform(ks[3], (EMBED_DIM, NUM_LABELS), jnp.float32, -1.0, 1.0)
    return dict(
        w1t=w1t, b1=b1, pool=pool.astype(jnp.float32),
        w2t=w2t, b2=b2,
        gamma=jnp.ones((1, FC2_OUT), jnp.float32),
        beta=jnp.zeros((1, FC2_OUT), jnp.float32),
        w3t=w3t, b3=b3, wct=wct,
    )


if __name__ == "__main__":
    key = jax.random.PRNGKey(0)
    k_feat, k_lab, k_par = jax.random.split(key, 3)

    B = 32
    features = jax.random.normal(k_feat, (B, BACKBONE_DIM), jnp.float32)
    labels = jax.random.randint(k_lab, (B,), 0, NUM_LABELS, jnp.int32)
    params = init_params(k_par)

    logits = jax.block_until_ready(arcface_head(features, labels, params))

    # cross-entropy loss (problem_type == "single_label_classification") — glue only
    logp = jax.nn.log_softmax(logits, axis=-1)
    loss = -jnp.mean(logp[jnp.arange(B), labels])
    jax.block_until_ready(loss)

    ref = reference_head(features, labels, params)
    assert logits.shape == (B, NUM_LABELS)
    # bf16 matmuls introduce ~1e-3-level deviation at the cosine scale; require the
    # (x30-scaled) logits to agree to better than 1e-2 of the cosine range.
    max_err = float(jnp.max(jnp.abs(logits - ref)))
    assert max_err < ARC_SCALE * 1e-2, f"max |diff| = {max_err}"

    print("KERNEL_OK")
</pallas_src>

<mosaic_0001>
module attributes {stable_mosaic.version = 11 : i64} {
  func.func @_arcface_head_kernel(%arg0: i32, %arg1: memref<32x768xbf16, #tpu.memory_space<vmem>>, %arg2: memref<768x512xbf16, #tpu.memory_space<vmem>>, %arg3: memref<1x512xf32, #tpu.memory_space<vmem>>, %arg4: memref<512x64xbf16, #tpu.memory_space<vmem>>, %arg5: memref<512x256xbf16, #tpu.memory_space<vmem>>, %arg6: memref<1x256xf32, #tpu.memory_space<vmem>>, %arg7: memref<1x256xf32, #tpu.memory_space<vmem>>, %arg8: memref<1x256xf32, #tpu.memory_space<vmem>>, %arg9: memref<256x64xbf16, #tpu.memory_space<vmem>>, %arg10: memref<1x64xf32, #tpu.memory_space<vmem>>, %arg11: memref<64x256xf32, #tpu.memory_space<vmem>>, %arg12: memref<32x1xi32, #tpu.memory_space<vmem>>, %arg13: memref<32x256xf32, #tpu.memory_space<vmem>>) attributes {dimension_semantics = [#tpu.dimension_semantics<parallel>], iteration_bounds = array<i64: 1>, scalar_prefetch = 0 : i64, scratch_operands = 0 : i64, tpu.core_type = #tpu.core_type<tc>, window_params = [{transform_indices = @transform_0, window_bounds = array<i64: 32, 768>}, {pipeline_mode = #tpu.pipeline_mode<synchronous>, transform_indices = @transform_1, window_bounds = array<i64: 768, 512>}, {pipeline_mode = #tpu.pipeline_mode<synchronous>, transform_indices = @transform_2, window_bounds = array<i64: 1, 512>}, {pipeline_mode = #tpu.pipeline_mode<synchronous>, transform_indices = @transform_3, window_bounds = array<i64: 512, 64>}, {pipeline_mode = #tpu.pipeline_mode<synchronous>, transform_indices = @transform_4, window_bounds = array<i64: 512, 256>}, {pipeline_mode = #tpu.pipeline_mode<synchronous>, transform_indices = @transform_5, window_bounds = array<i64: 1, 256>}, {pipeline_mode = #tpu.pipeline_mode<synchronous>, transform_indices = @transform_6, window_bounds = array<i64: 1, 256>}, {pipeline_mode = #tpu.pipeline_mode<synchronous>, transform_indices = @transform_7, window_bounds = array<i64: 1, 256>}, {pipeline_mode = #tpu.pipeline_mode<synchronous>, transform_indices = @transform_8, window_bounds = array<i64: 256, 64>}, {pipeline_mode = #tpu.pipeline_mode<synchronous>, transform_indices = @transform_9, window_bounds = array<i64: 1, 64>}, {pipeline_mode = #tpu.pipeline_mode<synchronous>, transform_indices = @transform_10, window_bounds = array<i64: 64, 256>}, {transform_indices = @transform_11, window_bounds = array<i64: 32, 1>}, {transform_indices = @transform_12, window_bounds = array<i64: 32, 256>}]} {
    %c0 = arith.constant 0 : index
    %c0_0 = arith.constant 0 : index
    %0 = vector.load %arg1[%c0, %c0_0] : memref<32x768xbf16, #tpu.memory_space<vmem>>, vector<32x768xbf16>
    %c0_1 = arith.constant 0 : index
    %c0_2 = arith.constant 0 : index
    %1 = vector.load %arg2[%c0_1, %c0_2] : memref<768x512xbf16, #tpu.memory_space<vmem>>, vector<768x512xbf16>
    %cst = arith.constant dense<0.000000e+00> : vector<32x512xf32>
    %2 = tpu.matmul %0, %1, %cst {dimension_numbers = #tpu.dot_dimension_numbers<[1], [0], [0], [1], [0, 0, 1, 1], [], []>} : vector<32x768xbf16>, vector<768x512xbf16>, vector<32x512xf32> -> vector<32x512xf32>
    %c0_3 = arith.constant 0 : index
    %c0_4 = arith.constant 0 : index
    %3 = vector.load %arg3[%c0_3, %c0_4] : memref<1x512xf32, #tpu.memory_space<vmem>>, vector<1x512xf32>
    %4 = vector.broadcast %3 : vector<1x512xf32> to vector<32x512xf32>
    %5 = arith.addf %2, %4 : vector<32x512xf32>
    %6 = arith.truncf %5 : vector<32x512xf32> to vector<32x512xbf16>
    %c0_5 = arith.constant 0 : index
    %c0_6 = arith.constant 0 : index
    %7 = vector.load %arg4[%c0_5, %c0_6] : memref<512x64xbf16, #tpu.memory_space<vmem>>, vector<512x64xbf16>
    %cst_7 = arith.constant dense<0.000000e+00> : vector<32x64xf32>
    %8 = tpu.matmul %6, %7, %cst_7 {dimension_numbers = #tpu.dot_dimension_numbers<[1], [0], [0], [1], [0, 0, 1, 1], [], []>} : vector<32x512xbf16>, vector<512x64xbf16>, vector<32x64xf32> -> vector<32x64xf32>
    %c0_8 = arith.constant 0 : index
    %c0_9 = arith.constant 0 : index
    %9 = vector.load %arg5[%c0_8, %c0_9] : memref<512x256xbf16, #tpu.memory_space<vmem>>, vector<512x256xbf16>
    %cst_10 = arith.constant dense<0.000000e+00> : vector<32x256xf32>
    %10 = tpu.matmul %6, %9, %cst_10 {dimension_numbers = #tpu.dot_dimension_numbers<[1], [0], [0], [1], [0, 0, 1, 1], [], []>} : vector<32x512xbf16>, vector<512x256xbf16>, vector<32x256xf32> -> vector<32x256xf32>
    %c0_11 = arith.constant 0 : index
    %c0_12 = arith.constant 0 : index
    %11 = vector.load %arg6[%c0_11, %c0_12] : memref<1x256xf32, #tpu.memory_space<vmem>>, vector<1x256xf32>
    %12 = vector.broadcast %11 : vector<1x256xf32> to vector<32x256xf32>
    %13 = arith.addf %10, %12 : vector<32x256xf32>
    %cst_13 = arith.constant dense<0.000000e+00> : vector<32xf32>
    %14 = vector.multi_reduction <add>, %13, %cst_13 [1] : vector<32x256xf32> to vector<32xf32>
    %15 = vector.shape_cast %14 : vector<32xf32> to vector<32x1xf32>
    %cst_14 = arith.constant 2.560000e+02 : f32
    %16 = vector.broadcast %cst_14 : f32 to vector<32x1xf32>
    %17 = arith.divf %15, %16 : vector<32x1xf32>
    %18 = vector.broadcast %17 : vector<32x1xf32> to vector<32x256xf32>
    %19 = arith.subf %13, %18 : vector<32x256xf32>
    %20 = arith.mulf %19, %19 : vector<32x256xf32>
    %cst_15 = arith.constant dense<0.000000e+00> : vector<32xf32>
    %21 = vector.multi_reduction <add>, %20, %cst_15 [1] : vector<32x256xf32> to vector<32xf32>
    %22 = vector.shape_cast %21 : vector<32xf32> to vector<32x1xf32>
    %cst_16 = arith.constant 2.560000e+02 : f32
    %23 = vector.broadcast %cst_16 : f32 to vector<32x1xf32>
    %24 = arith.divf %22, %23 : vector<32x1xf32>
    %25 = vector.broadcast %17 : vector<32x1xf32> to vector<32x256xf32>
    %26 = arith.subf %13, %25 : vector<32x256xf32>
    %cst_17 = arith.constant 9.99999974E-6 : f32
    %27 = vector.broadcast %cst_17 : f32 to vector<32x1xf32>
    %28 = arith.addf %24, %27 : vector<32x1xf32>
    %29 = math.rsqrt %28 : vector<32x1xf32>
    %30 = vector.broadcast %29 : vector<32x1xf32> to vector<32x256xf32>
    %31 = arith.mulf %26, %30 : vector<32x256xf32>
    %c0_18 = arith.constant 0 : index
    %c0_19 = arith.constant 0 : index
    %32 = vector.load %arg7[%c0_18, %c0_19] : memref<1x256xf32, #tpu.memory_space<vmem>>, vector<1x256xf32>
    %33 = vector.broadcast %32 : vector<1x256xf32> to vector<32x256xf32>
    %34 = arith.mulf %31, %33 : vector<32x256xf32>
    %c0_20 = arith.constant 0 : index
    %c0_21 = arith.constant 0 : index
    %35 = vector.load %arg8[%c0_20, %c0_21] : memref<1x256xf32, #tpu.memory_space<vmem>>, vector<1x256xf32>
    %36 = vector.broadcast %35 : vector<1x256xf32> to vector<32x256xf32>
    %37 = arith.addf %34, %36 : vector<32x256xf32>
    %cst_22 = arith.constant 5.000000e-01 : f32
    %38 = vector.broadcast %cst_22 : f32 to vector<32x256xf32>
    %39 = arith.mulf %38, %37 : vector<32x256xf32>
    %cst_23 = arith.constant 0.707106769 : f32
    %40 = vector.broadcast %cst_23 : f32 to vector<32x256xf32>
    %41 = arith.mulf %37, %40 : vector<32x256xf32>
    %42 = math.erf %41 : vector<32x256xf32>
    %cst_24 = arith.constant 1.000000e+00 : f32
    %43 = vector.broadcast %cst_24 : f32 to vector<32x256xf32>
    %44 = arith.addf %43, %42 : vector<32x256xf32>
    %45 = arith.mulf %39, %44 : vector<32x256xf32>
    %46 = arith.truncf %45 : vector<32x256xf32> to vector<32x256xbf16>
    %c0_25 = arith.constant 0 : index
    %c0_26 = arith.constant 0 : index
    %47 = vector.load %arg9[%c0_25, %c0_26] : memref<256x64xbf16, #tpu.memory_space<vmem>>, vector<256x64xbf16>
    %cst_27 = arith.constant dense<0.000000e+00> : vector<32x64xf32>
    %48 = tpu.matmul %46, %47, %cst_27 {dimension_numbers = #tpu.dot_dimension_numbers<[1], [0], [0], [1], [0, 0, 1, 1], [], []>} : vector<32x256xbf16>, vector<256x64xbf16>, vector<32x64xf32> -> vector<32x64xf32>
    %c0_28 = arith.constant 0 : index
    %c0_29 = arith.constant 0 : index
    %49 = vector.load %arg10[%c0_28, %c0_29] : memref<1x64xf32, #tpu.memory_space<vmem>>, vector<1x64xf32>
    %50 = vector.broadcast %49 : vector<1x64xf32> to vector<32x64xf32>
    %51 = arith.addf %48, %50 : vector<32x64xf32>
    %52 = arith.addf %51, %8 : vector<32x64xf32>
    %53 = arith.mulf %52, %52 : vector<32x64xf32>
    %cst_30 = arith.constant dense<0.000000e+00> : vector<32xf32>
    %54 = vector.multi_reduction <add>, %53, %cst_30 [1] : vector<32x64xf32> to vector<32xf32>
    %55 = vector.shape_cast %54 : vector<32xf32> to vector<32x1xf32>
    %cst_31 = arith.constant 1.000000e-24 : f32
    %56 = vector.broadcast %cst_31 : f32 to vector<32x1xf32>
    %57 = arith.maximumf %55, %56 : vector<32x1xf32>
    %58 = math.rsqrt %57 : vector<32x1xf32>
    %59 = vector.broadcast %58 : vector<32x1xf32> to vector<32x64xf32>
    %60 = arith.mulf %52, %59 : vector<32x64xf32>
    %c0_32 = arith.constant 0 : index
    %c0_33 = arith.constant 0 : index
    %61 = vector.load %arg11[%c0_32, %c0_33] : memref<64x256xf32, #tpu.memory_space<vmem>>, vector<64x256xf32>
    %cst_34 = arith.constant dense<0.000000e+00> : vector<32x256xf32>
    %62 = tpu.matmul %60, %61, %cst_34 {dimension_numbers = #tpu.dot_dimension_numbers<[1], [0], [0], [1], [0, 0, 1, 1], [], []>} : vector<32x64xf32>, vector<64x256xf32>, vector<32x256xf32> -> vector<32x256xf32>
    %63 = arith.mulf %62, %62 : vector<32x256xf32>
    %cst_35 = arith.constant 1.000000e+00 : f32
    %64 = vector.broadcast %cst_35 : f32 to vector<32x256xf32>
    %65 = arith.subf %64, %63 : vector<32x256xf32>
    %cst_36 = arith.constant 0.000000e+00 : f32
    %66 = vector.broadcast %cst_36 : f32 to vector<32x256xf32>
    %67 = arith.maximumf %65, %66 : vector<32x256xf32>
    %68 = math.sqrt %67 : vector<32x256xf32>
    %cst_37 = arith.constant 0.955336511 : f32
    %69 = vector.broadcast %cst_37 : f32 to vector<32x256xf32>
    %70 = arith.mulf %62, %69 : vector<32x256xf32>
    %cst_38 = arith.constant 0.295520216 : f32
    %71 = vector.broadcast %cst_38 : f32 to vector<32x256xf32>
    %72 = arith.mulf %68, %71 : vector<32x256xf32>
    %73 = arith.subf %70, %72 : vector<32x256xf32>
    %cst_39 = arith.constant -0.955336511 : f32
    %74 = vector.broadcast %cst_39 : f32 to vector<32x256xf32>
    %75 = arith.cmpf ogt, %62, %74 : vector<32x256xf32>
    %cst_40 = arith.constant 0.0886560603 : f32
    %76 = vector.broadcast %cst_40 : f32 to vector<32x256xf32>
    %77 = arith.subf %62, %76 : vector<32x256xf32>
    %78 = arith.select %75, %73, %77 : vector<32x256xi1>, vector<32x256xf32>
    %79 = tpu.iota {dimensions = array<i32: 1>} : vector<32x256xi32>
    %c0_41 = arith.constant 0 : index
    %c0_42 = arith.constant 0 : index
    %80 = vector.load %arg12[%c0_41, %c0_42] : memref<32x1xi32, #tpu.memory_space<vmem>>, vector<32x1xi32>
    %81 = vector.broadcast %80 : vector<32x1xi32> to vector<32x256xi32>
    %82 = arith.cmpi eq, %79, %81 : vector<32x256xi32>
    %83 = arith.select %82, %78, %62 : vector<32x256xi1>, vector<32x256xf32>
    %cst_43 = arith.constant 3.000000e+01 : f32
    %84 = vector.broadcast %cst_43 : f32 to vector<32x256xf32>
    %85 = arith.mulf %83, %84 : vector<32x256xf32>
    %c0_44 = arith.constant 0 : index
    %c0_45 = arith.constant 0 : index
    %86 = vector.load %arg13[%c0_44, %c0_45] : memref<32x256xf32, #tpu.memory_space<vmem>>, vector<32x256xf32>
    tpu.vector_store %arg13[%c0_44, %c0_45], %85 {strides = array<i32>} : memref<32x256xf32, #tpu.memory_space<vmem>>, vector<32x256xf32>,
    return
  }
  func.func @transform_0(%arg0: i32) -> (i32, i32) {
    %c0_i32 = arith.constant 0 : i32
    %c0_i32_0 = arith.constant 0 : i32
    return %arg0, %c0_i32 : i32, i32
  }
  func.func @transform_1(%arg0: i32) -> (i32, i32) {
    %c0_i32 = arith.constant 0 : i32
    %c0_i32_0 = arith.constant 0 : i32
    %c0_i32_1 = arith.constant 0 : i32
    return %c0_i32, %c0_i32_0 : i32, i32
  }
  func.func @transform_2(%arg0: i32) -> (i32, i32) {
    %c0_i32 = arith.constant 0 : i32
    %c0_i32_0 = arith.constant 0 : i32
    %c0_i32_1 = arith.constant 0 : i32
    return %c0_i32, %c0_i32_0 : i32, i32
  }
  func.func @transform_3(%arg0: i32) -> (i32, i32) {
    %c0_i32 = arith.constant 0 : i32
    %c0_i32_0 = arith.constant 0 : i32
    %c0_i32_1 = arith.constant 0 : i32
    return %c0_i32, %c0_i32_0 : i32, i32
  }
  func.func @transform_4(%arg0: i32) -> (i32, i32) {
    %c0_i32 = arith.constant 0 : i32
    %c0_i32_0 = arith.constant 0 : i32
    %c0_i32_1 = arith.constant 0 : i32
    return %c0_i32, %c0_i32_0 : i32, i32
  }
  func.func @transform_5(%arg0: i32) -> (i32, i32) {
    %c0_i32 = arith.constant 0 : i32
    %c0_i32_0 = arith.constant 0 : i32
    %c0_i32_1 = arith.constant 0 : i32
    return %c0_i32, %c0_i32_0 : i32, i32
  }
  func.func @transform_6(%arg0: i32) -> (i32, i32) {
    %c0_i32 = arith.constant 0 : i32
    %c0_i32_0 = arith.constant 0 : i32
    %c0_i32_1 = arith.constant 0 : i32
    return %c0_i32, %c0_i32_0 : i32, i32
  }
  func.func @transform_7(%arg0: i32) -> (i32, i32) {
    %c0_i32 = arith.constant 0 : i32
    %c0_i32_0 = arith.constant 0 : i32
    %c0_i32_1 = arith.constant 0 : i32
    return %c0_i32, %c0_i32_0 : i32, i32
  }
  func.func @transform_8(%arg0: i32) -> (i32, i32) {
    %c0_i32 = arith.constant 0 : i32
    %c0_i32_0 = arith.constant 0 : i32
    %c0_i32_1 = arith.constant 0 : i32
    return %c0_i32, %c0_i32_0 : i32, i32
  }
  func.func @transform_9(%arg0: i32) -> (i32, i32) {
    %c0_i32 = arith.constant 0 : i32
    %c0_i32_0 = arith.constant 0 : i32
    %c0_i32_1 = arith.constant 0 : i32
    return %c0_i32, %c0_i32_0 : i32, i32
  }
  func.func @transform_10(%arg0: i32) -> (i32, i32) {
    %c0_i32 = arith.constant 0 : i32
    %c0_i32_0 = arith.constant 0 : i32
    %c0_i32_1 = arith.constant 0 : i32
    return %c0_i32, %c0_i32_0 : i32, i32
  }
  func.func @transform_11(%arg0: i32) -> (i32, i32) {
    %c0_i32 = arith.constant 0 : i32
    %c0_i32_0 = arith.constant 0 : i32
    return %arg0, %c0_i32 : i32, i32
  }
  func.func @transform_12(%arg0: i32) -> (i32, i32) {
    %c0_i32 = arith.constant 0 : i32
    %c0_i32_0 = arith.constant 0 : i32
    return %arg0, %c0_i32 : i32, i32
  }
}

</mosaic_0001>

<llo_original>
// kernel: tpu_custom_call.1
$region0: #{tpu_custom_call.1}
  #allocation0 [shape = 'u32[]', space=smem, size = 0x4, offset = 0x4, fixed_abs, tag = 'smem constant byte address 0x4 - core index']
  #allocation1 [shape = 'u32[144,128]{1,0:T(1,128)}', space=vmem, size = 0x12000, scoped, tag = 'internal scratch']
  %s0 = inlined_call_operand.hbm [shape: bf16[32,768], index: 0, kind: input, shape index: {}]
  %s1 = inlined_call_operand.hbm [shape: bf16[768,512], index: 1, kind: input, shape index: {}]
  %s2 = inlined_call_operand.hbm [shape: f32[1,512], index: 2, kind: input, shape index: {}]
  %s3 = inlined_call_operand.hbm [shape: bf16[512,64], index: 3, kind: input, shape index: {}]
  %s4 = inlined_call_operand.hbm [shape: bf16[512,256], index: 4, kind: input, shape index: {}]
  %s5 = inlined_call_operand.hbm [shape: f32[1,256], index: 5, kind: input, shape index: {}]
  %s6 = inlined_call_operand.hbm [shape: f32[1,256], index: 6, kind: input, shape index: {}]
  %s7 = inlined_call_operand.hbm [shape: f32[1,256], index: 7, kind: input, shape index: {}]
  %s8 = inlined_call_operand.hbm [shape: bf16[256,64], index: 8, kind: input, shape index: {}]
  %s9 = inlined_call_operand.hbm [shape: f32[1,64], index: 9, kind: input, shape index: {}]
  %s10 = inlined_call_operand.hbm [shape: f32[64,256], index: 10, kind: input, shape index: {}]
  %s11 = inlined_call_operand.hbm [shape: s32[32,1], index: 11, kind: input, shape index: {}]
  %s12 = inlined_call_operand.hbm [shape: f32[32,256], index: 12, kind: output, shape index: {}]
  %s13 = sld [smem:[#allocation0]]
  $region106: #{tpu_custom_call.1} parent=0
    _
  %s15 = ssub.s32 1, %s13
  %s16 = scalar_select 0, %s15, %s13
  $region1: #{tpu_custom_call.1} parent=0
    #allocation2 [shape = 'u8[49152]{0}', space=vmem, size = 0xc000, scoped, tag = 'input window, operand 0, single buffered']
    #allocation3 [shape = 's32[1]{0}', space=sflag, size = 0x4, scoped, tag = 'scoped memory for tpu_custom_call.1']
    #allocation4 [shape = 's32[1]{0}', space=sflag, size = 0x4, scoped, tag = 'scoped memory for tpu_custom_call.1']
    #allocation5 [shape = 'u8[786432]{0}', space=vmem, size = 0xc0000, scoped, tag = 'input window, operand 1, single buffered']
    #allocation6 [shape = 's32[1]{0}', space=sflag, size = 0x4, scoped, tag = 'scoped memory for tpu_custom_call.1']
    #allocation7 [shape = 'u8[2048]{0}', space=vmem, size = 0x800, scoped, tag = 'input window, operand 2, single buffered']
    #allocation8 [shape = 'u8[131072]{0}', space=vmem, size = 0x20000, scoped, tag = 'input window, operand 3, single buffered']
    #allocation9 [shape = 's32[1]{0}', space=sflag, size = 0x4, scoped, tag = 'scoped memory for tpu_custom_call.1']
    #allocation10 [shape = 'u8[262144]{0}', space=vmem, size = 0x40000, scoped, tag = 'input window, operand 4, single buffered']
    #allocation11 [shape = 'u8[1024]{0}', space=vmem, size = 0x400, scoped, tag = 'input window, operand 5, single buffered']
    #allocation12 [shape = 's32[1]{0}', space=sflag, size = 0x4, scoped, tag = 'scoped memory for tpu_custom_call.1']
    #allocation13 [shape = 'u8[1024]{0}', space=vmem, size = 0x400, scoped, tag = 'input window, operand 6, single buffered']
    #allocation14 [shape = 'u8[1024]{0}', space=vmem, size = 0x400, scoped, tag = 'input window, operand 7, single buffered']
    #allocation15 [shape = 's32[1]{0}', space=sflag, size = 0x4, scoped, tag = 'scoped memory for tpu_custom_call.1']
    #allocation16 [shape = 'u8[65536]{0}', space=vmem, size = 0x10000, scoped, tag = 'input window, operand 8, single buffered']
    #allocation17 [shape = 'u8[512]{0}', space=vmem, size = 0x400, scoped, tag = 'input window, operand 9, single buffered']
    #allocation18 [shape = 's32[1]{0}', space=sflag, size = 0x4, scoped, tag = 'scoped memory for tpu_custom_call.1']
    #allocation19 [shape = 'u8[65536]{0}', space=vmem, size = 0x10000, scoped, tag = 'input window, operand 10, single buffered']
    #allocation20 [shape = 'u8[16384]{0}', space=vmem, size = 0x4000, scoped, tag = 'input window, operand 11, single buffered']
    #allocation21 [shape = 's32[1]{0}', space=sflag, size = 0x4, scoped, tag = 'scoped memory for tpu_custom_call.1']
    #allocation22 [shape = 'u8[32768]{0}', space=vmem, size = 0x8000, scoped, tag = 'output window, operand 0, single buffered']
    %17 = vsyncpa [#allocation3], 0
    %18 = vsyncpa [#allocation6], 0
    %19 = vsyncpa [#allocation9], 0
    %20 = vsyncpa [#allocation12], 0
    %21 = vsyncpa [#allocation15], 0
    %22 = vsyncpa [#allocation18], 0
    %23 = vsyncpa [#allocation21], 0
    %24 = vsyncpa [#allocation4], 0
    // Predicated region
    $region2: #{tpu_custom_call.1} parent=1 // pred_check
      _
    $region3: #{tpu_custom_call.1} parent=1 // pred_check_branch
      %26 = sbr.rel (0) target = $region5
    $region4: #{tpu_custom_call.1} parent=1 // pred_region
      %s28 = ssub.s32 1536, 1536
      %29 = vsyncadd [#allocation3], %s28
      %s30 = sshll.u32 [#allocation2], 4
      %s31 = int_to_ptr.vmem [resolvable:$true] %s30
      %36 = dma.hbm_to_vmem [thread:$0]  %s0, 1536, %s31, [#allocation3], 384, 384, 24
    $region5: #{tpu_custom_call.1} parent=1 // pred_fallthru
      _
    // Predicated region
    $region6: #{tpu_custom_call.1} parent=1 // pred_check
      _
    $region7: #{tpu_custom_call.1} parent=1 // pred_check_branch
      %38 = sbr.rel (0) target = $region9
    $region8: #{tpu_custom_call.1} parent=1 // pred_region
      %s40 = ssub.s32 24576, 24576
      %41 = vsyncadd [#allocation6], %s40
      %s42 = sshll.u32 [#allocation5], 4
      %s43 = int_to_ptr.vmem [resolvable:$true] %s42
      %48 = dma.hbm_to_vmem [thread:$0]  %s1, 24576, %s43, [#allocation6], 256, 256, 16
    $region9: #{tpu_custom_call.1} parent=1 // pred_fallthru
      _
    // Predicated region
    $region10: #{tpu_custom_call.1} parent=1 // pred_check
      _
    $region11: #{tpu_custom_call.1} parent=1 // pred_check_branch
      %50 = sbr.rel (0) target = $region13
    $region12: #{tpu_custom_call.1} parent=1 // pred_region
      %s52 = ssub.s32 64, 64
      %53 = vsyncadd [#allocation6], %s52
      %s55 = sshll.u32 [#allocation7], 4
      %s56 = int_to_ptr.vmem [resolvable:$true] %s55
      %58 = dma.hbm_to_vmem [thread:$0]  %s2, 64, %s56, [#allocation6]
    $region13: #{tpu_custom_call.1} parent=1 // pred_fallthru
      _
    // Predicated region
    $region14: #{tpu_custom_call.1} parent=1 // pred_check
      _
    $region15: #{tpu_custom_call.1} parent=1 // pred_check_branch
      %60 = sbr.rel (0) target = $region17
    $region16: #{tpu_custom_call.1} parent=1 // pred_region
      %s62 = ssub.s32 4096, 4096
      %63 = vsyncadd [#allocation9], %s62
      %s64 = sshll.u32 [#allocation8], 4
      %s65 = int_to_ptr.vmem [resolvable:$true] %s64
      %70 = dma.hbm_to_vmem [thread:$0]  %s3, 4096, %s65, [#allocation9], 64, 64, 4
    $region17: #{tpu_custom_call.1} parent=1 // pred_fallthru
      _
    // Predicated region
    $region18: #{tpu_custom_call.1} parent=1 // pred_check
      _
    $region19: #{tpu_custom_call.1} parent=1 // pred_check_branch
      %72 = sbr.rel (0) target = $region21
    $region20: #{tpu_custom_call.1} parent=1 // pred_region
      %s74 = ssub.s32 8192, 8192
      %75 = vsyncadd [#allocation9], %s74
      %s76 = sshll.u32 [#allocation10], 4
      %s77 = int_to_ptr.vmem [resolvable:$true] %s76
      %82 = dma.hbm_to_vmem [thread:$0]  %s4, 8192, %s77, [#allocation9], 128, 128, 8
    $region21: #{tpu_custom_call.1} parent=1 // pred_fallthru
      _
    // Predicated region
    $region22: #{tpu_custom_call.1} parent=1 // pred_check
      _
    $region23: #{tpu_custom_call.1} parent=1 // pred_check_branch
      %84 = sbr.rel (0) target = $region25
    $region24: #{tpu_custom_call.1} parent=1 // pred_region
      %s86 = ssub.s32 32, 32
      %87 = vsyncadd [#allocation12], %s86
      %s89 = sshll.u32 [#allocation11], 4
      %s90 = int_to_ptr.vmem [resolvable:$true] %s89
      %92 = dma.hbm_to_vmem [thread:$0]  %s5, 32, %s90, [#allocation12]
    $region25: #{tpu_custom_call.1} parent=1 // pred_fallthru
      _
    // Predicated region
    $region26: #{tpu_custom_call.1} parent=1 // pred_check
      _
    $region27: #{tpu_custom_call.1} parent=1 // pred_check_branch
      %94 = sbr.rel (0) target = $region29
    $region28: #{tpu_custom_call.1} parent=1 // pred_region
      %s96 = ssub.s32 32, 32
      %97 = vsyncadd [#allocation12], %s96
      %s99 = sshll.u32 [#allocation13], 4
      %s100 = int_to_ptr.vmem [resolvable:$true] %s99
      %102 = dma.hbm_to_vmem [thread:$0]  %s6, 32, %s100, [#allocation12]
    $region29: #{tpu_custom_call.1} parent=1 // pred_fallthru
      _
    // Predicated region
    $region30: #{tpu_custom_call.1} parent=1 // pred_check
      _
    $region31: #{tpu_custom_call.1} parent=1 // pred_check_branch
      %104 = sbr.rel (0) target = $region33
    $region32: #{tpu_custom_call.1} parent=1 // pred_region
      %s106 = ssub.s32 32, 32
      %107 = vsyncadd [#allocation15], %s106
      %s109 = sshll.u32 [#allocation14], 4
      %s110 = int_to_ptr.vmem [resolvable:$true] %s109
      %112 = dma.hbm_to_vmem [thread:$0]  %s7, 32, %s110, [#allocation15]
    $region33: #{tpu_custom_call.1} parent=1 // pred_fallthru
      _
    // Predicated region
    $region34: #{tpu_custom_call.1} parent=1 // pred_check
      _
    $region35: #{tpu_custom_call.1} parent=1 // pred_check_branch
      %114 = sbr.rel (0) target = $region37
    $region36: #{tpu_custom_call.1} parent=1 // pred_region
      %s116 = ssub.s32 2048, 2048
      %117 = vsyncadd [#allocation15], %s116
      %s118 = sshll.u32 [#allocation16], 4
      %s119 = int_to_ptr.vmem [resolvable:$true] %s118
      %124 = dma.hbm_to_vmem [thread:$0]  %s8, 2048, %s119, [#allocation15], 64, 64, 4
    $region37: #{tpu_custom_call.1} parent=1 // pred_fallthru
      _
    // Predicated region
    $region38: #{tpu_custom_call.1} parent=1 // pred_check
      _
    $region39: #{tpu_custom_call.1} parent=1 // pred_check_branch
      %126 = sbr.rel (0) target = $region41
    $region40: #{tpu_custom_call.1} parent=1 // pred_region
      %s128 = ssub.s32 16, 16
      %129 = vsyncadd [#allocation18], %s128
      %s131 = sshll.u32 [#allocation17], 4
      %s132 = int_to_ptr.vmem [resolvable:$true] %s131
      %134 = dma.hbm_to_vmem [thread:$0]  %s9, 16, %s132, [#allocation18]
    $region41: #{tpu_custom_call.1} parent=1 // pred_fallthru
      _
    // Predicated region
    $region42: #{tpu_custom_call.1} parent=1 // pred_check
      _
    $region43: #{tpu_custom_call.1} parent=1 // pred_check_branch
      %136 = sbr.rel (0) target = $region45
    $region44: #{tpu_custom_call.1} parent=1 // pred_region
      %s138 = ssub.s32 2048, 2048
      %139 = vsyncadd [#allocation18], %s138
      %s140 = sshll.u32 [#allocation19], 4
      %s141 = int_to_ptr.vmem [resolvable:$true] %s140
      %146 = dma.hbm_to_vmem [thread:$0]  %s10, 2048, %s141, [#allocation18], 256, 256, 16
    $region45: #{tpu_custom_call.1} parent=1 // pred_fallthru
      _
    // Predicated region
    $region46: #{tpu_custom_call.1} parent=1 // pred_check
      _
    $region47: #{tpu_custom_call.1} parent=1 // pred_check_branch
      %148 = sbr.rel (0) target = $region49
    $region48: #{tpu_custom_call.1} parent=1 // pred_region
      %s150 = ssub.s32 512, 512
      %151 = vsyncadd [#allocation21], %s150
      %s152 = sshll.u32 [#allocation20], 4
      %s153 = int_to_ptr.vmem [resolvable:$true] %s152
      %158 = dma.hbm_to_vmem [thread:$0]  %s11, 512, %s153, [#allocation21], 128, 128, 8
    $region49: #{tpu_custom_call.1} parent=1 // pred_fallthru
      _
    // Predicated region
    $region50: #{tpu_custom_call.1} parent=1 // pred_check
      _
    $region51: #{tpu_custom_call.1} parent=1 // pred_check_branch
      %160 = sbr.rel (0) target = $region53
    $region52: #{tpu_custom_call.1} parent=1 // pred_region
      %161 = dma.done [#allocation3], 1536
    $region53: #{tpu_custom_call.1} parent=1 // pred_fallthru
      _
    // Predicated region
    $region54: #{tpu_custom_call.1} parent=1 // pred_check
      _
    $region55: #{tpu_custom_call.1} parent=1 // pred_check_branch
      %163 = sbr.rel (0) target = $region57
    $region56: #{tpu_custom_call.1} parent=1 // pred_region
      %164 = dma.done [#allocation6], 24576
    $region57: #{tpu_custom_call.1} parent=1 // pred_fallthru
      _
    // Predicated region
    $region58: #{tpu_custom_call.1} parent=1 // pred_check
      _
    $region59: #{tpu_custom_call.1} parent=1 // pred_check_branch
      %166 = sbr.rel (0) target = $region61
    $region60: #{tpu_custom_call.1} parent=1 // pred_region
      %167 = dma.done [#allocation6], 64
    $region61: #{tpu_custom_call.1} parent=1 // pred_fallthru
      _
    // Predicated region
    $region62: #{tpu_custom_call.1} parent=1 // pred_check
      _
    $region63: #{tpu_custom_call.1} parent=1 // pred_check_branch
      %169 = sbr.rel (0) target = $region65
    $region64: #{tpu_custom_call.1} parent=1 // pred_region
      %170 = dma.done [#allocation9], 4096
    $region65: #{tpu_custom_call.1} parent=1 // pred_fallthru
      _
    // Predicated region
    $region66: #{tpu_custom_call.1} parent=1 // pred_check
      _
    $region67: #{tpu_custom_call.1} parent=1 // pred_check_branch
      %172 = sbr.rel (0) target = $region69
    $region68: #{tpu_custom_call.1} parent=1 // pred_region
      %173 = dma.done [#allocation9], 8192
    $region69: #{tpu_custom_call.1} parent=1 // pred_fallthru
      _
    // Predicated region
    $region70: #{tpu_custom_call.1} parent=1 // pred_check
      _
    $region71: #{tpu_custom_call.1} parent=1 // pred_check_branch
      %175 = sbr.rel (0) target = $region73
    $region72: #{tpu_custom_call.1} parent=1 // pred_region
      %176 = dma.done [#allocation12], 32
    $region73: #{tpu_custom_call.1} parent=1 // pred_fallthru
      _
    // Predicated region
    $region74: #{tpu_custom_call.1} parent=1 // pred_check
      _
    $region75: #{tpu_custom_call.1} parent=1 // pred_check_branch
      %178 = sbr.rel (0) target = $region77
    $region76: #{tpu_custom_call.1} parent=1 // pred_region
      %179 = dma.done [#allocation12], 32
    $region77: #{tpu_custom_call.1} parent=1 // pred_fallthru
      _
    // Predicated region
    $region78: #{tpu_custom_call.1} parent=1 // pred_check
      _
    $region79: #{tpu_custom_call.1} parent=1 // pred_check_branch
      %181 = sbr.rel (0) target = $region81
    $region80: #{tpu_custom_call.1} parent=1 // pred_region
      %182 = dma.done [#allocation15], 32
    $region81: #{tpu_custom_call.1} parent=1 // pred_fallthru
      _
    // Predicated region
    $region82: #{tpu_custom_call.1} parent=1 // pred_check
      _
    $region83: #{tpu_custom_call.1} parent=1 // pred_check_branch
      %184 = sbr.rel (0) target = $region85
    $region84: #{tpu_custom_call.1} parent=1 // pred_region
      %185 = dma.done [#allocation15], 2048
    $region85: #{tpu_custom_call.1} parent=1 // pred_fallthru
      _
    // Predicated region
    $region86: #{tpu_custom_call.1} parent=1 // pred_check
      _
    $region87: #{tpu_custom_call.1} parent=1 // pred_check_branch
      %187 = sbr.rel (0) target = $region89
    $region88: #{tpu_custom_call.1} parent=1 // pred_region
      %188 = dma.done [#allocation18], 16
    $region89: #{tpu_custom_call.1} parent=1 // pred_fallthru
      _
    // Predicated region
    $region90: #{tpu_custom_call.1} parent=1 // pred_check
      _
    $region91: #{tpu_custom_call.1} parent=1 // pred_check_branch
      %190 = sbr.rel (0) target = $region93
    $region92: #{tpu_custom_call.1} parent=1 // pred_region
      %191 = dma.done [#allocation18], 2048
    $region93: #{tpu_custom_call.1} parent=1 // pred_fallthru
      _
    // Predicated region
    $region94: #{tpu_custom_call.1} parent=1 // pred_check
      _
    $region95: #{tpu_custom_call.1} parent=1 // pred_check_branch
      %193 = sbr.rel (0) target = $region97
    $region96: #{tpu_custom_call.1} parent=1 // pred_region
      %194 = dma.done [#allocation21], 512
    $region97: #{tpu_custom_call.1} parent=1 // pred_fallthru
      _
    %v196 = vld [vmem:[#allocation2] sm:$0xff]
    %v197 = vld [vmem:[#allocation2 + $0x8] sm:$0xff]
    %v198 = vld [vmem:[#allocation2 + $0x10] sm:$0xff]
    %v199 = vld [vmem:[#allocation2 + $0x18] sm:$0xff]
    %v200 = vld [vmem:[#allocation2 + $0x20] sm:$0xff]
    %v201 = vld [vmem:[#allocation2 + $0x28] sm:$0xff]
    %v202 = vld [vmem:[#allocation2 + $0x30] sm:$0xff]
    %v203 = vld [vmem:[#allocation2 + $0x38] sm:$0xff]
    %v204 = vld [vmem:[#allocation2 + $0x40] sm:$0xff]
    %v205 = vld [vmem:[#allocation2 + $0x48] sm:$0xff]
    %v206 = vld [vmem:[#allocation2 + $0x50] sm:$0xff]
    %v207 = vld [vmem:[#allocation2 + $0x58] sm:$0xff]
    %v208 = vld [vmem:[#allocation5] sm:$0xff]
    %v209 = vld [vmem:[#allocation5 + $0x8] sm:$0xff]
    %v210 = vld [vmem:[#allocation5 + $0x10] sm:$0xff]
    %v211 = vld [vmem:[#allocation5 + $0x18] sm:$0xff]
    %v212 = vld [vmem:[#allocation5 + $0x20] sm:$0xff]
    %v213 = vld [vmem:[#allocation5 + $0x28] sm:$0xff]
    %v214 = vld [vmem:[#allocation5 + $0x30] sm:$0xff]
    %v215 = vld [vmem:[#allocation5 + $0x38] sm:$0xff]
    %v216 = vld [vmem:[#allocation5 + $0x40] sm:$0xff]
    %v217 = vld [vmem:[#allocation5 + $0x48] sm:$0xff]
    %v218 = vld [vmem:[#allocation5 + $0x50] sm:$0xff]
    %v219 = vld [vmem:[#allocation5 + $0x58] sm:$0xff]
    %v220 = vld [vmem:[#allocation5 + $0x60] sm:$0xff]
    %v221 = vld [vmem:[#allocation5 + $0x68] sm:$0xff]
    %v222 = vld [vmem:[#allocation5 + $0x70] sm:$0xff]
    %v223 = vld [vmem:[#allocation5 + $0x78] sm:$0xff]
    %v224 = vld [vmem:[#allocation5 + $0x80] sm:$0xff]
    %v225 = vld [vmem:[#allocation5 + $0x88] sm:$0xff]
    %v226 = vld [vmem:[#allocation5 + $0x90] sm:$0xff]
    %v227 = vld [vmem:[#allocation5 + $0x98] sm:$0xff]
    %v228 = vld [vmem:[#allocation5 + $0xa0] sm:$0xff]
    %v229 = vld [vmem:[#allocation5 + $0xa8] sm:$0xff]
    %v230 = vld [vmem:[#allocation5 + $0xb0] sm:$0xff]
    %v231 = vld [vmem:[#allocation5 + $0xb8] sm:$0xff]
    %v232 = vld [vmem:[#allocation5 + $0xc0] sm:$0xff]
    %v233 = vld [vmem:[#allocation5 + $0xc8] sm:$0xff]
    %v234 = vld [vmem:[#allocation5 + $0xd0] sm:$0xff]
    %v235 = vld [vmem:[#allocation5 + $0xd8] sm:$0xff]
    %v236 = vld [vmem:[#allocation5 + $0xe0] sm:$0xff]
    %v237 = vld [vmem:[#allocation5 + $0xe8] sm:$0xff]
    %v238 = vld [vmem:[#allocation5 + $0xf0] sm:$0xff]
    %v239 = vld [vmem:[#allocation5 + $0xf8] sm:$0xff]
    %v240 = vld [vmem:[#allocation5 + $0x100] sm:$0xff]
    %v241 = vld [vmem:[#allocation5 + $0x108] sm:$0xff]
    %v242 = vld [vmem:[#allocation5 + $0x110] sm:$0xff]
    %v243 = vld [vmem:[#allocation5 + $0x118] sm:$0xff]
    %v244 = vld [vmem:[#allocation5 + $0x120] sm:$0xff]
    %v245 = vld [vmem:[#allocation5 + $0x128] sm:$0xff]
    %v246 = vld [vmem:[#allocation5 + $0x130] sm:$0xff]
    %v247 = vld [vmem:[#allocation5 + $0x138] sm:$0xff]
    %v248 = vld [vmem:[#allocation5 + $0x140] sm:$0xff]
    %v249 = vld [vmem:[#allocation5 + $0x148] sm:$0xff]
    %v250 = vld [vmem:[#allocation5 + $0x150] sm:$0xff]
    %v251 = vld [vmem:[#allocation5 + $0x158] sm:$0xff]
    %v252 = vld [vmem:[#allocation5 + $0x160] sm:$0xff]
    %v253 = vld [vmem:[#allocation5 + $0x168] sm:$0xff]
    %v254 = vld [vmem:[#allocation5 + $0x170] sm:$0xff]
    %v255 = vld [vmem:[#allocation5 + $0x178] sm:$0xff]
    %v256 = vld [vmem:[#allocation5 + $0x180] sm:$0xff]
    %v257 = vld [vmem:[#allocation5 + $0x188] sm:$0xff]
    %v258 = vld [vmem:[#allocation5 + $0x190] sm:$0xff]
    %v259 = vld [vmem:[#allocation5 + $0x198] sm:$0xff]
    %v260 = vld [vmem:[#allocation5 + $0x1a0] sm:$0xff]
    %v261 = vld [vmem:[#allocation5 + $0x1a8] sm:$0xff]
    %v262 = vld [vmem:[#allocation5 + $0x1b0] sm:$0xff]
    %v263 = vld [vmem:[#allocation5 + $0x1b8] sm:$0xff]
    %v264 = vld [vmem:[#allocation5 + $0x1c0] sm:$0xff]
    %v265 = vld [vmem:[#allocation5 + $0x1c8] sm:$0xff]
    %v266 = vld [vmem:[#allocation5 + $0x1d0] sm:$0xff]
    %v267 = vld [vmem:[#allocation5 + $0x1d8] sm:$0xff]
    %v268 = vld [vmem:[#allocation5 + $0x1e0] sm:$0xff]
    %v269 = vld [vmem:[#allocation5 + $0x1e8] sm:$0xff]
    %v270 = vld [vmem:[#allocation5 + $0x1f0] sm:$0xff]
    %v271 = vld [vmem:[#allocation5 + $0x1f8] sm:$0xff]
    %v272 = vld [vmem:[#allocation5 + $0x200] sm:$0xff]
    %v273 = vld [vmem:[#allocation5 + $0x208] sm:$0xff]
    %v274 = vld [vmem:[#allocation5 + $0x210] sm:$0xff]
    %v275 = vld [vmem:[#allocation5 + $0x218] sm:$0xff]
    %v276 = vld [vmem:[#allocation5 + $0x220] sm:$0xff]
    %v277 = vld [vmem:[#allocation5 + $0x228] sm:$0xff]
    %v278 = vld [vmem:[#allocation5 + $0x230] sm:$0xff]
    %v279 = vld [vmem:[#allocation5 + $0x238] sm:$0xff]
    %v280 = vld [vmem:[#allocation5 + $0x240] sm:$0xff]
    %v281 = vld [vmem:[#allocation5 + $0x248] sm:$0xff]
    %v282 = vld [vmem:[#allocation5 + $0x250] sm:$0xff]
    %v283 = vld [vmem:[#allocation5 + $0x258] sm:$0xff]
    %v284 = vld [vmem:[#allocation5 + $0x260] sm:$0xff]
    %v285 = vld [vmem:[#allocation5 + $0x268] sm:$0xff]
    %v286 = vld [vmem:[#allocation5 + $0x270] sm:$0xff]
    %v287 = vld [vmem:[#allocation5 + $0x278] sm:$0xff]
    %v288 = vld [vmem:[#allocation5 + $0x280] sm:$0xff]
    %v289 = vld [vmem:[#allocation5 + $0x288] sm:$0xff]
    %v290 = vld [vmem:[#allocation5 + $0x290] sm:$0xff]
    %v291 = vld [vmem:[#allocation5 + $0x298] sm:$0xff]
    %v292 = vld [vmem:[#allocation5 + $0x2a0] sm:$0xff]
    %v293 = vld [vmem:[#allocation5 + $0x2a8] sm:$0xff]
    %v294 = vld [vmem:[#allocation5 + $0x2b0] sm:$0xff]
    %v295 = vld [vmem:[#allocation5 + $0x2b8] sm:$0xff]
    %v296 = vld [vmem:[#allocation5 + $0x2c0] sm:$0xff]
    %v297 = vld [vmem:[#allocation5 + $0x2c8] sm:$0xff]
    %v298 = vld [vmem:[#allocation5 + $0x2d0] sm:$0xff]
    %v299 = vld [vmem:[#allocation5 + $0x2d8] sm:$0xff]
    %v300 = vld [vmem:[#allocation5 + $0x2e0] sm:$0xff]
    %v301 = vld [vmem:[#allocation5 + $0x2e8] sm:$0xff]
    %v302 = vld [vmem:[#allocation5 + $0x2f0] sm:$0xff]
    %v303 = vld [vmem:[#allocation5 + $0x2f8] sm:$0xff]
    %v304 = vld [vmem:[#allocation5 + $0x300] sm:$0xff]
    %v305 = vld [vmem:[#allocation5 + $0x308] sm:$0xff]
    %v306 = vld [vmem:[#allocation5 + $0x310] sm:$0xff]
    %v307 = vld [vmem:[#allocation5 + $0x318] sm:$0xff]
    %v308 = vld [vmem:[#allocation5 + $0x320] sm:$0xff]
    %v309 = vld [vmem:[#allocation5 + $0x328] sm:$0xff]
    %v310 = vld [vmem:[#allocation5 + $0x330] sm:$0xff]
    %v311 = vld [vmem:[#allocation5 + $0x338] sm:$0xff]
    %v312 = vld [vmem:[#allocation5 + $0x340] sm:$0xff]
    %v313 = vld [vmem:[#allocation5 + $0x348] sm:$0xff]
    %v314 = vld [vmem:[#allocation5 + $0x350] sm:$0xff]
    %v315 = vld [vmem:[#allocation5 + $0x358] sm:$0xff]
    %v316 = vld [vmem:[#allocation5 + $0x360] sm:$0xff]
    %v317 = vld [vmem:[#allocation5 + $0x368] sm:$0xff]
    %v318 = vld [vmem:[#allocation5 + $0x370] sm:$0xff]
    %v319 = vld [vmem:[#allocation5 + $0x378] sm:$0xff]
    %v320 = vld [vmem:[#allocation5 + $0x380] sm:$0xff]
    %v321 = vld [vmem:[#allocation5 + $0x388] sm:$0xff]
    %v322 = vld [vmem:[#allocation5 + $0x390] sm:$0xff]
    %v323 = vld [vmem:[#allocation5 + $0x398] sm:$0xff]
    %v324 = vld [vmem:[#allocation5 + $0x3a0] sm:$0xff]
    %v325 = vld [vmem:[#allocation5 + $0x3a8] sm:$0xff]
    %v326 = vld [vmem:[#allocation5 + $0x3b0] sm:$0xff]
    %v327 = vld [vmem:[#allocation5 + $0x3b8] sm:$0xff]
    %v328 = vld [vmem:[#allocation5 + $0x3c0] sm:$0xff]
    %v329 = vld [vmem:[#allocation5 + $0x3c8] sm:$0xff]
    %v330 = vld [vmem:[#allocation5 + $0x3d0] sm:$0xff]
    %v331 = vld [vmem:[#allocation5 + $0x3d8] sm:$0xff]
    %v332 = vld [vmem:[#allocation5 + $0x3e0] sm:$0xff]
    %v333 = vld [vmem:[#allocation5 + $0x3e8] sm:$0xff]
    %v334 = vld [vmem:[#allocation5 + $0x3f0] sm:$0xff]
    %v335 = vld [vmem:[#allocation5 + $0x3f8] sm:$0xff]
    %v336 = vld [vmem:[#allocation5 + $0x400] sm:$0xff]
    %v337 = vld [vmem:[#allocation5 + $0x408] sm:$0xff]
    %v338 = vld [vmem:[#allocation5 + $0x410] sm:$0xff]
    %v339 = vld [vmem:[#allocation5 + $0x418] sm:$0xff]
    %v340 = vld [vmem:[#allocation5 + $0x420] sm:$0xff]
    %v341 = vld [vmem:[#allocation5 + $0x428] sm:$0xff]
    %v342 = vld [vmem:[#allocation5 + $0x430] sm:$0xff]
    %v343 = vld [vmem:[#allocation5 + $0x438] sm:$0xff]
    %v344 = vld [vmem:[#allocation5 + $0x440] sm:$0xff]
    %v345 = vld [vmem:[#allocation5 + $0x448] sm:$0xff]
    %v346 = vld [vmem:[#allocation5 + $0x450] sm:$0xff]
    %v347 = vld [vmem:[#allocation5 + $0x458] sm:$0xff]
    %v348 = vld [vmem:[#allocation5 + $0x460] sm:$0xff]
    %v349 = vld [vmem:[#allocation5 + $0x468] sm:$0xff]
    %v350 = vld [vmem:[#allocation5 + $0x470] sm:$0xff]
    %v351 = vld [vmem:[#allocation5 + $0x478] sm:$0xff]
    %v352 = vld [vmem:[#allocation5 + $0x480] sm:$0xff]
    %v353 = vld [vmem:[#allocation5 + $0x488] sm:$0xff]
    %v354 = vld [vmem:[#allocation5 + $0x490] sm:$0xff]
    %v355 = vld [vmem:[#allocation5 + $0x498] sm:$0xff]
    %v356 = vld [vmem:[#allocation5 + $0x4a0] sm:$0xff]
    %v357 = vld [vmem:[#allocation5 + $0x4a8] sm:$0xff]
    %v358 = vld [vmem:[#allocation5 + $0x4b0] sm:$0xff]
    %v359 = vld [vmem:[#allocation5 + $0x4b8] sm:$0xff]
    %v360 = vld [vmem:[#allocation5 + $0x4c0] sm:$0xff]
    %v361 = vld [vmem:[#allocation5 + $0x4c8] sm:$0xff]
    %v362 = vld [vmem:[#allocation5 + $0x4d0] sm:$0xff]
    %v363 = vld [vmem:[#allocation5 + $0x4d8] sm:$0xff]
    %v364 = vld [vmem:[#allocation5 + $0x4e0] sm:$0xff]
    %v365 = vld [vmem:[#allocation5 + $0x4e8] sm:$0xff]
    %v366 = vld [vmem:[#allocation5 + $0x4f0] sm:$0xff]
    %v367 = vld [vmem:[#allocation5 + $0x4f8] sm:$0xff]
    %v368 = vld [vmem:[#allocation5 + $0x500] sm:$0xff]
    %v369 = vld [vmem:[#allocation5 + $0x508] sm:$0xff]
    %v370 = vld [vmem:[#allocation5 + $0x510] sm:$0xff]
    %v371 = vld [vmem:[#allocation5 + $0x518] sm:$0xff]
    %v372 = vld [vmem:[#allocation5 + $0x520] sm:$0xff]
    %v373 = vld [vmem:[#allocation5 + $0x528] sm:$0xff]
    %v374 = vld [vmem:[#allocation5 + $0x530] sm:$0xff]
    %v375 = vld [vmem:[#allocation5 + $0x538] sm:$0xff]
    %v376 = vld [vmem:[#allocation5 + $0x540] sm:$0xff]
    %v377 = vld [vmem:[#allocation5 + $0x548] sm:$0xff]
    %v378 = vld [vmem:[#allocation5 + $0x550] sm:$0xff]
    %v379 = vld [vmem:[#allocation5 + $0x558] sm:$0xff]
    %v380 = vld [vmem:[#allocation5 + $0x560] sm:$0xff]
    %v381 = vld [vmem:[#allocation5 + $0x568] sm:$0xff]
    %v382 = vld [vmem:[#allocation5 + $0x570] sm:$0xff]
    %v383 = vld [vmem:[#allocation5 + $0x578] sm:$0xff]
    %v384 = vld [vmem:[#allocation5 + $0x580] sm:$0xff]
    %v385 = vld [vmem:[#allocation5 + $0x588] sm:$0xff]
    %v386 = vld [vmem:[#allocation5 + $0x590] sm:$0xff]
    %v387 = vld [vmem:[#allocation5 + $0x598] sm:$0xff]
    %v388 = vld [vmem:[#allocation5 + $0x5a0] sm:$0xff]
    %v389 = vld [vmem:[#allocation5 + $0x5a8] sm:$0xff]
    %v390 = vld [vmem:[#allocation5 + $0x5b0] sm:$0xff]
    %v391 = vld [vmem:[#allocation5 + $0x5b8] sm:$0xff]
    %v392 = vld [vmem:[#allocation5 + $0x5c0] sm:$0xff]
    %v393 = vld [vmem:[#allocation5 + $0x5c8] sm:$0xff]
    %v394 = vld [vmem:[#allocation5 + $0x5d0] sm:$0xff]
    %v395 = vld [vmem:[#allocation5 + $0x5d8] sm:$0xff]
    %v396 = vld [vmem:[#allocation5 + $0x5e0] sm:$0xff]
    %v397 = vld [vmem:[#allocation5 + $0x5e8] sm:$0xff]
    %v398 = vld [vmem:[#allocation5 + $0x5f0] sm:$0xff]
    %v399 = vld [vmem:[#allocation5 + $0x5f8] sm:$0xff]
    %v400 = vld [vmem:[#allocation7] sm:$0xf]
    %v402 = vlaneseq
    %v403 = vshrl.u32 %v402, 7
    %v404 = vsub.s32 0, %v403
    %v405 = vrot.slane %v400, %v404
    %v406 = vlaneseq
    %v407 = vshrl.u32 %v406, 7
    %v408 = vsub.s32 1, %v407
    %v409 = vrot.slane %v400, %v408
    %v410 = vlaneseq
    %v411 = vshrl.u32 %v410, 7
    %v412 = vsub.s32 2, %v411
    %v413 = vrot.slane %v400, %v412
    %v414 = vlaneseq
    %v415 = vshrl.u32 %v414, 7
    %v416 = vsub.s32 3, %v415
    %v417 = vrot.slane %v400, %v416
    %v434 = vunpack.c.l.b16 %v196
    %v435 = vunpack.c.h.b16 %v196
    %v436 = vunpack.c.l.b16 %v197
    %v437 = vunpack.c.h.b16 %v197
    %v438 = vunpack.c.l.b16 %v198
    %v439 = vunpack.c.h.b16 %v198
    %v440 = vunpack.c.l.b16 %v199
    %v441 = vunpack.c.h.b16 %v199
    %v442 = vunpack.c.l.b16 %v200
    %v443 = vunpack.c.h.b16 %v200
    %v444 = vunpack.c.l.b16 %v201
    %v445 = vunpack.c.h.b16 %v201
    %v446 = vunpack.c.l.b16 %v202
    %v447 = vunpack.c.h.b16 %v202
    %v448 = vunpack.c.l.b16 %v203
    %v449 = vunpack.c.h.b16 %v203
    %v450 = vunpack.c.l.b16 %v204
    %v451 = vunpack.c.h.b16 %v204
    %v452 = vunpack.c.l.b16 %v205
    %v453 = vunpack.c.h.b16 %v205
    %v454 = vunpack.c.l.b16 %v206
    %v455 = vunpack.c.h.b16 %v206
    %v456 = vunpack.c.l.b16 %v207
    %v457 = vunpack.c.h.b16 %v207
    %v458 = vpack.c.b16 %v440, %v434
    %v459 = vpack.c.b16 %v441, %v435
    %v460 = vpack.c.b16 %v442, %v436
    %v461 = vpack.c.b16 %v443, %v437
    %v462 = vpack.c.b16 %v444, %v438
    %v463 = vpack.c.b16 %v445, %v439
    %v464 = vpack.c.b16 %v452, %v446
    %v465 = vpack.c.b16 %v453, %v447
    %v466 = vpack.c.b16 %v454, %v448
    %v467 = vpack.c.b16 %v455, %v449
    %v468 = vpack.c.b16 %v456, %v450
    %v469 = vpack.c.b16 %v457, %v451
    %v674 = vunpack.c.l.b16 %v208
    %v675 = vunpack.c.h.b16 %v208
    %v676 = vunpack.c.l.b16 %v209
    %v677 = vunpack.c.h.b16 %v209
    %v678 = vunpack.c.l.b16 %v210
    %v679 = vunpack.c.h.b16 %v210
    %v680 = vunpack.c.l.b16 %v211
    %v681 = vunpack.c.h.b16 %v211
    %v682 = vunpack.c.l.b16 %v212
    %v683 = vunpack.c.h.b16 %v212
    %v684 = vunpack.c.l.b16 %v213
    %v685 = vunpack.c.h.b16 %v213
    %v686 = vunpack.c.l.b16 %v214
    %v687 = vunpack.c.h.b16 %v214
    %v688 = vunpack.c.l.b16 %v215
    %v689 = vunpack.c.h.b16 %v215
    %v690 = vunpack.c.l.b16 %v216
    %v691 = vunpack.c.h.b16 %v216
    %v692 = vunpack.c.l.b16 %v217
    %v693 = vunpack.c.h.b16 %v217
    %v694 = vunpack.c.l.b16 %v218
    %v695 = vunpack.c.h.b16 %v218
    %v696 = vunpack.c.l.b16 %v219
    %v697 = vunpack.c.h.b16 %v219
    %v698 = vunpack.c.l.b16 %v220
    %v699 = vunpack.c.h.b16 %v220
    %v700 = vunpack.c.l.b16 %v221
    %v701 = vunpack.c.h.b16 %v221
    %v702 = vunpack.c.l.b16 %v222
    %v703 = vunpack.c.h.b16 %v222
    %v704 = vunpack.c.l.b16 %v223
    %v705 = vunpack.c.h.b16 %v223
    %v706 = vunpack.c.l.b16 %v224
    %v707 = vunpack.c.h.b16 %v224
    %v708 = vunpack.c.l.b16 %v225
    %v709 = vunpack.c.h.b16 %v225
    %v710 = vunpack.c.l.b16 %v226
    %v711 = vunpack.c.h.b16 %v226
    %v712 = vunpack.c.l.b16 %v227
    %v713 = vunpack.c.h.b16 %v227
    %v714 = vunpack.c.l.b16 %v228
    %v715 = vunpack.c.h.b16 %v228
    %v716 = vunpack.c.l.b16 %v229
    %v717 = vunpack.c.h.b16 %v229
    %v718 = vunpack.c.l.b16 %v230
    %v719 = vunpack.c.h.b16 %v230
    %v720 = vunpack.c.l.b16 %v231
    %v721 = vunpack.c.h.b16 %v231
    %v722 = vunpack.c.l.b16 %v232
    %v723 = vunpack.c.h.b16 %v232
    %v724 = vunpack.c.l.b16 %v233
    %v725 = vunpack.c.h.b16 %v233
    %v726 = vunpack.c.l.b16 %v234
    %v727 = vunpack.c.h.b16 %v234
    %v728 = vunpack.c.l.b16 %v235
    %v729 = vunpack.c.h.b16 %v235
    %v730 = vunpack.c.l.b16 %v236
    %v731 = vunpack.c.h.b16 %v236
    %v732 = vunpack.c.l.b16 %v237
    %v733 = vunpack.c.h.b16 %v237
    %v734 = vunpack.c.l.b16 %v238
    %v735 = vunpack.c.h.b16 %v238
    %v736 = vunpack.c.l.b16 %v239
    %v737 = vunpack.c.h.b16 %v239
    %v738 = vunpack.c.l.b16 %v240
    %v739 = vunpack.c.h.b16 %v240
    %v740 = vunpack.c.l.b16 %v241
    %v741 = vunpack.c.h.b16 %v241
    %v742 = vunpack.c.l.b16 %v242
    %v743 = vunpack.c.h.b16 %v242
    %v744 = vunpack.c.l.b16 %v243
    %v745 = vunpack.c.h.b16 %v243
    %v746 = vunpack.c.l.b16 %v244
    %v747 = vunpack.c.h.b16 %v244
    %v748 = vunpack.c.l.b16 %v245
    %v749 = vunpack.c.h.b16 %v245
    %v750 = vunpack.c.l.b16 %v246
    %v751 = vunpack.c.h.b16 %v246
    %v752 = vunpack.c.l.b16 %v247
    %v753 = vunpack.c.h.b16 %v247
    %v754 = vunpack.c.l.b16 %v248
    %v755 = vunpack.c.h.b16 %v248
    %v756 = vunpack.c.l.b16 %v249
    %v757 = vunpack.c.h.b16 %v249
    %v758 = vunpack.c.l.b16 %v250
    %v759 = vunpack.c.h.b16 %v250
    %v760 = vunpack.c.l.b16 %v251
    %v761 = vunpack.c.h.b16 %v251
    %v762 = vunpack.c.l.b16 %v252
    %v763 = vunpack.c.h.b16 %v252
    %v764 = vunpack.c.l.b16 %v253
    %v765 = vunpack.c.h.b16 %v253
    %v766 = vunpack.c.l.b16 %v254
    %v767 = vunpack.c.h.b16 %v254
    %v768 = vunpack.c.l.b16 %v255
    %v769 = vunpack.c.h.b16 %v255
    %v770 = vunpack.c.l.b16 %v256
    %v771 = vunpack.c.h.b16 %v256
    %v772 = vunpack.c.l.b16 %v257
    %v773 = vunpack.c.h.b16 %v257
    %v774 = vunpack.c.l.b16 %v258
    %v775 = vunpack.c.h.b16 %v258
    %v776 = vunpack.c.l.b16 %v259
    %v777 = vunpack.c.h.b16 %v259
    %v778 = vunpack.c.l.b16 %v260
    %v779 = vunpack.c.h.b16 %v260
    %v780 = vunpack.c.l.b16 %v261
    %v781 = vunpack.c.h.b16 %v261
    %v782 = vunpack.c.l.b16 %v262
    %v783 = vunpack.c.h.b16 %v262
    %v784 = vunpack.c.l.b16 %v263
    %v785 = vunpack.c.h.b16 %v263
    %v786 = vunpack.c.l.b16 %v264
    %v787 = vunpack.c.h.b16 %v264
    %v788 = vunpack.c.l.b16 %v265
    %v789 = vunpack.c.h.b16 %v265
    %v790 = vunpack.c.l.b16 %v266
    %v791 = vunpack.c.h.b16 %v266
    %v792 = vunpack.c.l.b16 %v267
    %v793 = vunpack.c.h.b16 %v267
    %v794 = vunpack.c.l.b16 %v268
    %v795 = vunpack.c.h.b16 %v268
    %v796 = vunpack.c.l.b16 %v269
    %v797 = vunpack.c.h.b16 %v269
    %v798 = vunpack.c.l.b16 %v270
    %v799 = vunpack.c.h.b16 %v270
    %v800 = vunpack.c.l.b16 %v271
    %v801 = vunpack.c.h.b16 %v271
    %v802 = vunpack.c.l.b16 %v272
    %v803 = vunpack.c.h.b16 %v272
    %v804 = vunpack.c.l.b16 %v273
    %v805 = vunpack.c.h.b16 %v273
    %v806 = vunpack.c.l.b16 %v274
    %v807 = vunpack.c.h.b16 %v274
    %v808 = vunpack.c.l.b16 %v275
    %v809 = vunpack.c.h.b16 %v275
    %v810 = vunpack.c.l.b16 %v276
    %v811 = vunpack.c.h.b16 %v276
    %v812 = vunpack.c.l.b16 %v277
    %v813 = vunpack.c.h.b16 %v277
    %v814 = vunpack.c.l.b16 %v278
    %v815 = vunpack.c.h.b16 %v278
    %v816 = vunpack.c.l.b16 %v279
    %v817 = vunpack.c.h.b16 %v279
    %v818 = vunpack.c.l.b16 %v280
    %v819 = vunpack.c.h.b16 %v280
    %v820 = vunpack.c.l.b16 %v281
    %v821 = vunpack.c.h.b16 %v281
    %v822 = vunpack.c.l.b16 %v282
    %v823 = vunpack.c.h.b16 %v282
    %v824 = vunpack.c.l.b16 %v283
    %v825 = vunpack.c.h.b16 %v283
    %v826 = vunpack.c.l.b16 %v284
    %v827 = vunpack.c.h.b16 %v284
    %v828 = vunpack.c.l.b16 %v285
    %v829 = vunpack.c.h.b16 %v285
    %v830 = vunpack.c.l.b16 %v286
    %v831 = vunpack.c.h.b16 %v286
    %v832 = vunpack.c.l.b16 %v287
    %v833 = vunpack.c.h.b16 %v287
    %v834 = vunpack.c.l.b16 %v288
    %v835 = vunpack.c.h.b16 %v288
    %v836 = vunpack.c.l.b16 %v289
    %v837 = vunpack.c.h.b16 %v289
    %v838 = vunpack.c.l.b16 %v290
    %v839 = vunpack.c.h.b16 %v290
    %v840 = vunpack.c.l.b16 %v291
    %v841 = vunpack.c.h.b16 %v291
    %v842 = vunpack.c.l.b16 %v292
    %v843 = vunpack.c.h.b16 %v292
    %v844 = vunpack.c.l.b16 %v293
    %v845 = vunpack.c.h.b16 %v293
    %v846 = vunpack.c.l.b16 %v294
    %v847 = vunpack.c.h.b16 %v294
    %v848 = vunpack.c.l.b16 %v295
    %v849 = vunpack.c.h.b16 %v295
    %v850 = vunpack.c.l.b16 %v296
    %v851 = vunpack.c.h.b16 %v296
    %v852 = vunpack.c.l.b16 %v297
    %v853 = vunpack.c.h.b16 %v297
    %v854 = vunpack.c.l.b16 %v298
    %v855 = vunpack.c.h.b16 %v298
    %v856 = vunpack.c.l.b16 %v299
    %v857 = vunpack.c.h.b16 %v299
    %v858 = vunpack.c.l.b16 %v300
    %v859 = vunpack.c.h.b16 %v300
    %v860 = vunpack.c.l.b16 %v301
    %v861 = vunpack.c.h.b16 %v301
    %v862 = vunpack.c.l.b16 %v302
    %v863 = vunpack.c.h.b16 %v302
    %v864 = vunpack.c.l.b16 %v303
    %v865 = vunpack.c.h.b16 %v303
    %v866 = vunpack.c.l.b16 %v304
    %v867 = vunpack.c.h.b16 %v304
    %v868 = vunpack.c.l.b16 %v305
    %v869 = vunpack.c.h.b16 %v305
    %v870 = vunpack.c.l.b16 %v306
    %v871 = vunpack.c.h.b16 %v306
    %v872 = vunpack.c.l.b16 %v307
    %v873 = vunpack.c.h.b16 %v307
    %v874 = vunpack.c.l.b16 %v308
    %v875 = vunpack.c.h.b16 %v308
    %v876 = vunpack.c.l.b16 %v309
    %v877 = vunpack.c.h.b16 %v309
    %v878 = vunpack.c.l.b16 %v310
    %v879 = vunpack.c.h.b16 %v310
    %v880 = vunpack.c.l.b16 %v311
    %v881 = vunpack.c.h.b16 %v311
    %v882 = vunpack.c.l.b16 %v312
    %v883 = vunpack.c.h.b16 %v312
    %v884 = vunpack.c.l.b16 %v313
    %v885 = vunpack.c.h.b16 %v313
    %v886 = vunpack.c.l.b16 %v314
    %v887 = vunpack.c.h.b16 %v314
    %v888 = vunpack.c.l.b16 %v315
    %v889 = vunpack.c.h.b16 %v315
    %v890 = vunpack.c.l.b16 %v316
    %v891 = vunpack.c.h.b16 %v316
    %v892 = vunpack.c.l.b16 %v317
    %v893 = vunpack.c.h.b16 %v317
    %v894 = vunpack.c.l.b16 %v318
    %v895 = vunpack.c.h.b16 %v318
    %v896 = vunpack.c.l.b16 %v319
    %v897 = vunpack.c.h.b16 %v319
    %v898 = vunpack.c.l.b16 %v320
    %v899 = vunpack.c.h.b16 %v320
    %v900 = vunpack.c.l.b16 %v321
    %v901 = vunpack.c.h.b16 %v321
    %v902 = vunpack.c.l.b16 %v322
    %v903 = vunpack.c.h.b16 %v322
    %v904 = vunpack.c.l.b16 %v323
    %v905 = vunpack.c.h.b16 %v323
    %v906 = vunpack.c.l.b16 %v324
    %v907 = vunpack.c.h.b16 %v324
    %v908 = vunpack.c.l.b16 %v325
    %v909 = vunpack.c.h.b16 %v325
    %v910 = vunpack.c.l.b16 %v326
    %v911 = vunpack.c.h.b16 %v326
    %v912 = vunpack.c.l.b16 %v327
    %v913 = vunpack.c.h.b16 %v327
    %v914 = vunpack.c.l.b16 %v328
    %v915 = vunpack.c.h.b16 %v328
    %v916 = vunpack.c.l.b16 %v329
    %v917 = vunpack.c.h.b16 %v329
    %v918 = vunpack.c.l.b16 %v330
    %v919 = vunpack.c.h.b16 %v330
    %v920 = vunpack.c.l.b16 %v331
    %v921 = vunpack.c.h.b16 %v331
    %v922 = vunpack.c.l.b16 %v332
    %v923 = vunpack.c.h.b16 %v332
    %v924 = vunpack.c.l.b16 %v333
    %v925 = vunpack.c.h.b16 %v333
    %v926 = vunpack.c.l.b16 %v334
    %v927 = vunpack.c.h.b16 %v334
    %v928 = vunpack.c.l.b16 %v335
    %v929 = vunpack.c.h.b16 %v335
    %v930 = vunpack.c.l.b16 %v336
    %v931 = vunpack.c.h.b16 %v336
    %v932 = vunpack.c.l.b16 %v337
    %v933 = vunpack.c.h.b16 %v337
    %v934 = vunpack.c.l.b16 %v338
    %v935 = vunpack.c.h.b16 %v338
    %v936 = vunpack.c.l.b16 %v339
    %v937 = vunpack.c.h.b16 %v339
    %v938 = vunpack.c.l.b16 %v340
    %v939 = vunpack.c.h.b16 %v340
    %v940 = vunpack.c.l.b16 %v341
    %v941 = vunpack.c.h.b16 %v341
    %v942 = vunpack.c.l.b16 %v342
    %v943 = vunpack.c.h.b16 %v342
    %v944 = vunpack.c.l.b16 %v343
    %v945 = vunpack.c.h.b16 %v343
    %v946 = vunpack.c.l.b16 %v344
    %v947 = vunpack.c.h.b16 %v344
    %v948 = vunpack.c.l.b16 %v345
    %v949 = vunpack.c.h.b16 %v345
    %v950 = vunpack.c.l.b16 %v346
    %v951 = vunpack.c.h.b16 %v346
    %v952 = vunpack.c.l.b16 %v347
    %v953 = vunpack.c.h.b16 %v347
    %v954 = vunpack.c.l.b16 %v348
    %v955 = vunpack.c.h.b16 %v348
    %v956 = vunpack.c.l.b16 %v349
    %v957 = vunpack.c.h.b16 %v349
    %v958 = vunpack.c.l.b16 %v350
    %v959 = vunpack.c.h.b16 %v350
    %v960 = vunpack.c.l.b16 %v351
    %v961 = vunpack.c.h.b16 %v351
    %v962 = vunpack.c.l.b16 %v352
    %v963 = vunpack.c.h.b16 %v352
    %v964 = vunpack.c.l.b16 %v353
    %v965 = vunpack.c.h.b16 %v353
    %v966 = vunpack.c.l.b16 %v354
    %v967 = vunpack.c.h.b16 %v354
    %v968 = vunpack.c.l.b16 %v355
    %v969 = vunpack.c.h.b16 %v355
    %v970 = vunpack.c.l.b16 %v356
    %v971 = vunpack.c.h.b16 %v356
    %v972 = vunpack.c.l.b16 %v357
    %v973 = vunpack.c.h.b16 %v357
    %v974 = vunpack.c.l.b16 %v358
    %v975 = vunpack.c.h.b16 %v358
    %v976 = vunpack.c.l.b16 %v359
    %v977 = vunpack.c.h.b16 %v359
    %v978 = vunpack.c.l.b16 %v360
    %v979 = vunpack.c.h.b16 %v360
    %v980 = vunpack.c.l.b16 %v361
    %v981 = vunpack.c.h.b16 %v361
    %v982 = vunpack.c.l.b16 %v362
    %v983 = vunpack.c.h.b16 %v362
    %v984 = vunpack.c.l.b16 %v363
    %v985 = vunpack.c.h.b16 %v363
    %v986 = vunpack.c.l.b16 %v364
    %v987 = vunpack.c.h.b16 %v364
    %v988 = vunpack.c.l.b16 %v365
    %v989 = vunpack.c.h.b16 %v365
    %v990 = vunpack.c.l.b16 %v366
    %v991 = vunpack.c.h.b16 %v366
    %v992 = vunpack.c.l.b16 %v367
    %v993 = vunpack.c.h.b16 %v367
    %v994 = vunpack.c.l.b16 %v368
    %v995 = vunpack.c.h.b16 %v368
    %v996 = vunpack.c.l.b16 %v369
    %v997 = vunpack.c.h.b16 %v369
    %v998 = vunpack.c.l.b16 %v370
    %v999 = vunpack.c.h.b16 %v370
    %v1000 = vunpack.c.l.b16 %v371
    %v1001 = vunpack.c.h.b16 %v371
    %v1002 = vunpack.c.l.b16 %v372
    %v1003 = vunpack.c.h.b16 %v372
    %v1004 = vunpack.c.l.b16 %v373
    %v1005 = vunpack.c.h.b16 %v373
    %v1006 = vunpack.c.l.b16 %v374
    %v1007 = vunpack.c.h.b16 %v374
    %v1008 = vunpack.c.l.b16 %v375
    %v1009 = vunpack.c.h.b16 %v375
    %v1010 = vunpack.c.l.b16 %v376
    %v1011 = vunpack.c.h.b16 %v376
    %v1012 = vunpack.c.l.b16 %v377
    %v1013 = vunpack.c.h.b16 %v377
    %v1014 = vunpack.c.l.b16 %v378
    %v1015 = vunpack.c.h.b16 %v378
    %v1016 = vunpack.c.l.b16 %v379
    %v1017 = vunpack.c.h.b16 %v379
    %v1018 = vunpack.c.l.b16 %v380
    %v1019 = vunpack.c.h.b16 %v380
    %v1020 = vunpack.c.l.b16 %v381
    %v1021 = vunpack.c.h.b16 %v381
    %v1022 = vunpack.c.l.b16 %v382
    %v1023 = vunpack.c.h.b16 %v382
    %v1024 = vunpack.c.l.b16 %v383
    %v1025 = vunpack.c.h.b16 %v383
    %v1026 = vunpack.c.l.b16 %v384
    %v1027 = vunpack.c.h.b16 %v384
    %v1028 = vunpack.c.l.b16 %v385
    %v1029 = vunpack.c.h.b16 %v385
    %v1030 = vunpack.c.l.b16 %v386
    %v1031 = vunpack.c.h.b16 %v386
    %v1032 = vunpack.c.l.b16 %v387
    %v1033 = vunpack.c.h.b16 %v387
    %v1034 = vunpack.c.l.b16 %v388
    %v1035 = vunpack.c.h.b16 %v388
    %v1036 = vunpack.c.l.b16 %v389
    %v1037 = vunpack.c.h.b16 %v389
    %v1038 = vunpack.c.l.b16 %v390
    %v1039 = vunpack.c.h.b16 %v390
    %v1040 = vunpack.c.l.b16 %v391
    %v1041 = vunpack.c.h.b16 %v391
    %v1042 = vunpack.c.l.b16 %v392
    %v1043 = vunpack.c.h.b16 %v392
    %v1044 = vunpack.c.l.b16 %v393
    %v1045 = vunpack.c.h.b16 %v393
    %v1046 = vunpack.c.l.b16 %v394
    %v1047 = vunpack.c.h.b16 %v394
    %v1048 = vunpack.c.l.b16 %v395
    %v1049 = vunpack.c.h.b16 %v395
    %v1050 = vunpack.c.l.b16 %v396
    %v1051 = vunpack.c.h.b16 %v396
    %v1052 = vunpack.c.l.b16 %v397
    %v1053 = vunpack.c.h.b16 %v397
    %v1054 = vunpack.c.l.b16 %v398
    %v1055 = vunpack.c.h.b16 %v398
    %v1056 = vunpack.c.l.b16 %v399
    %v1057 = vunpack.c.h.b16 %v399
    %v1058 = vpack.c.b16 %v678, %v674
    %v1059 = vpack.c.b16 %v679, %v675
    %v1060 = vpack.c.b16 %v680, %v676
    %v1061 = vpack.c.b16 %v681, %v677
    %v1062 = vpack.c.b16 %v686, %v682
    %v1063 = vpack.c.b16 %v687, %v683
    %v1064 = vpack.c.b16 %v688, %v684
    %v1065 = vpack.c.b16 %v689, %v685
    %v1066 = vpack.c.b16 %v694, %v690
    %v1067 = vpack.c.b16 %v695, %v691
    %v1068 = vpack.c.b16 %v696, %v692
    %v1069 = vpack.c.b16 %v697, %v693
    %v1070 = vpack.c.b16 %v702, %v698
    %v1071 = vpack.c.b16 %v703, %v699
    %v1072 = vpack.c.b16 %v704, %v700
    %v1073 = vpack.c.b16 %v705, %v701
    %v1074 = vpack.c.b16 %v710, %v706
    %v1075 = vpack.c.b16 %v711, %v707
    %v1076 = vpack.c.b16 %v712, %v708
    %v1077 = vpack.c.b16 %v713, %v709
    %v1078 = vpack.c.b16 %v718, %v714
    %v1079 = vpack.c.b16 %v719, %v715
    %v1080 = vpack.c.b16 %v720, %v716
    %v1081 = vpack.c.b16 %v721, %v717
    %v1082 = vpack.c.b16 %v726, %v722
    %v1083 = vpack.c.b16 %v727, %v723
    %v1084 = vpack.c.b16 %v728, %v724
    %v1085 = vpack.c.b16 %v729, %v725
    %v1086 = vpack.c.b16 %v734, %v730
    %v1087 = vpack.c.b16 %v735, %v731
    %v1088 = vpack.c.b16 %v736, %v732
    %v1089 = vpack.c.b16 %v737, %v733
    %v1090 = vpack.c.b16 %v742, %v738
    %v1091 = vpack.c.b16 %v743, %v739
    %v1092 = vpack.c.b16 %v744, %v740
    %v1093 = vpack.c.b16 %v745, %v741
    %v1094 = vpack.c.b16 %v750, %v746
    %v1095 = vpack.c.b16 %v751, %v747
    %v1096 = vpack.c.b16 %v752, %v748
    %v1097 = vpack.c.b16 %v753, %v749
    %v1098 = vpack.c.b16 %v758, %v754
    %v1099 = vpack.c.b16 %v759, %v755
    %v1100 = vpack.c.b16 %v760, %v756
    %v1101 = vpack.c.b16 %v761, %v757
    %v1102 = vpack.c.b16 %v766, %v762
    %v1103 = vpack.c.b16 %v767, %v763
    %v1104 = vpack.c.b16 %v768, %v764
    %v1105 = vpack.c.b16 %v769, %v765
    %v1106 = vpack.c.b16 %v774, %v770
    %v1107 = vpack.c.b16 %v775, %v771
    %v1108 = vpack.c.b16 %v776, %v772
    %v1109 = vpack.c.b16 %v777, %v773
    %v1110 = vpack.c.b16 %v782, %v778
    %v1111 = vpack.c.b16 %v783, %v779
    %v1112 = vpack.c.b16 %v784, %v780
    %v1113 = vpack.c.b16 %v785, %v781
    %v1114 = vpack.c.b16 %v790, %v786
    %v1115 = vpack.c.b16 %v791, %v787
    %v1116 = vpack.c.b16 %v792, %v788
    %v1117 = vpack.c.b16 %v793, %v789
    %v1118 = vpack.c.b16 %v798, %v794
    %v1119 = vpack.c.b16 %v799, %v795
    %v1120 = vpack.c.b16 %v800, %v796
    %v1121 = vpack.c.b16 %v801, %v797
    %v1122 = vpack.c.b16 %v806, %v802
    %v1123 = vpack.c.b16 %v807, %v803
    %v1124 = vpack.c.b16 %v808, %v804
    %v1125 = vpack.c.b16 %v809, %v805
    %v1126 = vpack.c.b16 %v814, %v810
    %v1127 = vpack.c.b16 %v815, %v811
    %v1128 = vpack.c.b16 %v816, %v812
    %v1129 = vpack.c.b16 %v817, %v813
    %v1130 = vpack.c.b16 %v822, %v818
    %v1131 = vpack.c.b16 %v823, %v819
    %v1132 = vpack.c.b16 %v824, %v820
    %v1133 = vpack.c.b16 %v825, %v821
    %v1134 = vpack.c.b16 %v830, %v826
    %v1135 = vpack.c.b16 %v831, %v827
    %v1136 = vpack.c.b16 %v832, %v828
    %v1137 = vpack.c.b16 %v833, %v829
    %v1138 = vpack.c.b16 %v838, %v834
    %v1139 = vpack.c.b16 %v839, %v835
    %v1140 = vpack.c.b16 %v840, %v836
    %v1141 = vpack.c.b16 %v841, %v837
    %v1142 = vpack.c.b16 %v846, %v842
    %v1143 = vpack.c.b16 %v847, %v843
    %v1144 = vpack.c.b16 %v848, %v844
    %v1145 = vpack.c.b16 %v849, %v845
    %v1146 = vpack.c.b16 %v854, %v850
    %v1147 = vpack.c.b16 %v855, %v851
    %v1148 = vpack.c.b16 %v856, %v852
    %v1149 = vpack.c.b16 %v857, %v853
    %v1150 = vpack.c.b16 %v862, %v858
    %v1151 = vpack.c.b16 %v863, %v859
    %v1152 = vpack.c.b16 %v864, %v860
    %v1153 = vpack.c.b16 %v865, %v861
    %v1154 = vpack.c.b16 %v870, %v866
    %v1155 = vpack.c.b16 %v871, %v867
    %v1156 = vpack.c.b16 %v872, %v868
    %v1157 = vpack.c.b16 %v873, %v869
    %v1158 = vpack.c.b16 %v878, %v874
    %v1159 = vpack.c.b16 %v879, %v875
    %v1160 = vpack.c.b16 %v880, %v876
    %v1161 = vpack.c.b16 %v881, %v877
    %v1162 = vpack.c.b16 %v886, %v882
    %v1163 = vpack.c.b16 %v887, %v883
    %v1164 = vpack.c.b16 %v888, %v884
    %v1165 = vpack.c.b16 %v889, %v885
    %v1166 = vpack.c.b16 %v894, %v890
    %v1167 = vpack.c.b16 %v895, %v891
    %v1168 = vpack.c.b16 %v896, %v892
    %v1169 = vpack.c.b16 %v897, %v893
    %v1170 = vpack.c.b16 %v902, %v898
    %v1171 = vpack.c.b16 %v903, %v899
    %v1172 = vpack.c.b16 %v904, %v900
    %v1173 = vpack.c.b16 %v905, %v901
    %v1174 = vpack.c.b16 %v910, %v906
    %v1175 = vpack.c.b16 %v911, %v907
    %v1176 = vpack.c.b16 %v912, %v908
    %v1177 = vpack.c.b16 %v913, %v909
    %v1178 = vpack.c.b16 %v918, %v914
    %v1179 = vpack.c.b16 %v919, %v915
    %v1180 = vpack.c.b16 %v920, %v916
    %v1181 = vpack.c.b16 %v921, %v917
    %v1182 = vpack.c.b16 %v926, %v922
    %v1183 = vpack.c.b16 %v927, %v923
    %v1184 = vpack.c.b16 %v928, %v924
    %v1185 = vpack.c.b16 %v929, %v925
    %v1186 = vpack.c.b16 %v934, %v930
    %v1187 = vpack.c.b16 %v935, %v931
    %v1188 = vpack.c.b16 %v936, %v932
    %v1189 = vpack.c.b16 %v937, %v933
    %v1190 = vpack.c.b16 %v942, %v938
    %v1191 = vpack.c.b16 %v943, %v939
    %v1192 = vpack.c.b16 %v944, %v940
    %v1193 = vpack.c.b16 %v945, %v941
    %v1194 = vpack.c.b16 %v950, %v946
    %v1195 = vpack.c.b16 %v951, %v947
    %v1196 = vpack.c.b16 %v952, %v948
    %v1197 = vpack.c.b16 %v953, %v949
    %v1198 = vpack.c.b16 %v958, %v954
    %v1199 = vpack.c.b16 %v959, %v955
    %v1200 = vpack.c.b16 %v960, %v956
    %v1201 = vpack.c.b16 %v961, %v957
    %v1202 = vpack.c.b16 %v966, %v962
    %v1203 = vpack.c.b16 %v967, %v963
    %v1204 = vpack.c.b16 %v968, %v964
    %v1205 = vpack.c.b16 %v969, %v965
    %v1206 = vpack.c.b16 %v974, %v970
    %v1207 = vpack.c.b16 %v975, %v971
    %v1208 = vpack.c.b16 %v976, %v972
    %v1209 = vpack.c.b16 %v977, %v973
    %v1210 = vpack.c.b16 %v982, %v978
    %v1211 = vpack.c.b16 %v983, %v979
    %v1212 = vpack.c.b16 %v984, %v980
    %v1213 = vpack.c.b16 %v985, %v981
    %v1214 = vpack.c.b16 %v990, %v986
    %v1215 = vpack.c.b16 %v991, %v987
    %v1216 = vpack.c.b16 %v992, %v988
    %v1217 = vpack.c.b16 %v993, %v989
    %v1218 = vpack.c.b16 %v998, %v994
    %v1219 = vpack.c.b16 %v999, %v995
    %v1220 = vpack.c.b16 %v1000, %v996
    %v1221 = vpack.c.b16 %v1001, %v997
    %v1222 = vpack.c.b16 %v1006, %v1002
    %v1223 = vpack.c.b16 %v1007, %v1003
    %v1224 = vpack.c.b16 %v1008, %v1004
    %v1225 = vpack.c.b16 %v1009, %v1005
    %v1226 = vpack.c.b16 %v1014, %v1010
    %v1227 = vpack.c.b16 %v1015, %v1011
    %v1228 = vpack.c.b16 %v1016, %v1012
    %v1229 = vpack.c.b16 %v1017, %v1013
    %v1230 = vpack.c.b16 %v1022, %v1018
    %v1231 = vpack.c.b16 %v1023, %v1019
    %v1232 = vpack.c.b16 %v1024, %v1020
    %v1233 = vpack.c.b16 %v1025, %v1021
    %v1234 = vpack.c.b16 %v1030, %v1026
    %v1235 = vpack.c.b16 %v1031, %v1027
    %v1236 = vpack.c.b16 %v1032, %v1028
    %v1237 = vpack.c.b16 %v1033, %v1029
    %v1238 = vpack.c.b16 %v1038, %v1034
    %v1239 = vpack.c.b16 %v1039, %v1035
    %v1240 = vpack.c.b16 %v1040, %v1036
    %v1241 = vpack.c.b16 %v1041, %v1037
    %v1242 = vpack.c.b16 %v1046, %v1042
    %v1243 = vpack.c.b16 %v1047, %v1043
    %v1244 = vpack.c.b16 %v1048, %v1044
    %v1245 = vpack.c.b16 %v1049, %v1045
    %v1246 = vpack.c.b16 %v1054, %v1050
    %v1247 = vpack.c.b16 %v1055, %v1051
    %v1248 = vpack.c.b16 %v1056, %v1052
    %v1249 = vpack.c.b16 %v1057, %v1053
    %1442 = vmatprep.subr.bf16.mxu0 %v1059
    %1443 = vmatpush1.bf16.msra.mxu0 %v1058
    %1444 = vmatprep.subr.bf16.mxu0 %v1063
    %1445 = vmatpush1.bf16.msra.mxu0 %v1062
    %1446 = vmatprep.subr.bf16.mxu0 %v1067
    %1447 = vmatpush1.bf16.msra.mxu0 %v1066
    %1448 = vmatprep.subr.bf16.mxu0 %v1071
    %1449 = vmatpush1.bf16.msra.mxu0 %v1070
    %1450 = vmatprep.subr.bf16.mxu0 %v1075
    %1451 = vmatpush1.bf16.msra.mxu0 %v1074
    %1452 = vmatprep.subr.bf16.mxu0 %v1079
    %1453 = vmatpush1.bf16.msra.mxu0 %v1078
    %1454 = vmatprep.subr.bf16.mxu0 %v1083
    %1455 = vmatpush1.bf16.msra.mxu0 %v1082
    %1456 = vmatprep.subr.bf16.mxu0 %v1087
    %1457 = vmatpush1.bf16.msra.mxu0 %v1086
    %1458 = vmatprep.subr.bf16.mxu0 %v1091
    %1459 = vmatpush1.bf16.msra.mxu0 %v1090
    %1460 = vmatprep.subr.bf16.mxu0 %v1095
    %1461 = vmatpush1.bf16.msra.mxu0 %v1094
    %1462 = vmatprep.subr.bf16.mxu0 %v1099
    %1463 = vmatpush1.bf16.msra.mxu0 %v1098
    %1464 = vmatprep.subr.bf16.mxu0 %v1103
    %1465 = vmatpush1.bf16.msra.mxu0 %v1102
    %1466 = vmatprep.subr.bf16.mxu0 %v1107
    %1467 = vmatpush1.bf16.msra.mxu0 %v1106
    %1468 = vmatprep.subr.bf16.mxu0 %v1111
    %1469 = vmatpush1.bf16.msra.mxu0 %v1110
    %1470 = vmatprep.subr.bf16.mxu0 %v1115
    %1471 = vmatpush1.bf16.msra.mxu0 %v1114
    %1472 = vmatprep.subr.bf16.mxu0 %v1119
    %1473 = vmatpush1.bf16.msra.mxu0 %v1118
    %1474 = vmatprep.mubr.bf16.mxu0 %v459
    %1475 = vmatmul.mubr.bf16.gmra.mrb[0].mxu0 %v458
    %v1476 = vpop.f32.mrb[0].mxu0
    %v1477 = vadd.f32 %v405, %v1476
    %v1478 = vpop.f32.mrb[0].mxu0
    %v1479 = vadd.f32 %v409, %v1478
    %v1480 = vpop.f32.mrb[0].mxu0
    %v1481 = vadd.f32 %v405, %v1480
    %v1482 = vpop.f32.mrb[0].mxu0
    %v1483 = vadd.f32 %v409, %v1482
    %1484 = vmatprep.mubr.bf16.mxu0 %v465
    %1485 = vmatmul.mubr.bf16.gmra.mrb[0].mxu0 %v464
    %v1486 = vpop.f32.mrb[0].mxu0
    %v1487 = vadd.f32 %v405, %v1486
    %v1488 = vpop.f32.mrb[0].mxu0
    %v1489 = vadd.f32 %v409, %v1488
    %v1490 = vpop.f32.mrb[0].mxu0
    %v1491 = vadd.f32 %v405, %v1490
    %v1492 = vpop.f32.mrb[0].mxu0
    %v1493 = vadd.f32 %v409, %v1492
    %1494 = vdwg.mxu0
    %1495 = vmatprep.subr.bf16.mxu0 %v1123
    %1496 = vmatpush1.bf16.msra.mxu0 %v1122
    %1497 = vmatprep.subr.bf16.mxu0 %v1127
    %1498 = vmatpush1.bf16.msra.mxu0 %v1126
    %1499 = vmatprep.subr.bf16.mxu0 %v1131
    %1500 = vmatpush1.bf16.msra.mxu0 %v1130
    %1501 = vmatprep.subr.bf16.mxu0 %v1135
    %1502 = vmatpush1.bf16.msra.mxu0 %v1134
    %1503 = vmatprep.subr.bf16.mxu0 %v1139
    %1504 = vmatpush1.bf16.msra.mxu0 %v1138
    %1505 = vmatprep.subr.bf16.mxu0 %v1143
    %1506 = vmatpush1.bf16.msra.mxu0 %v1142
    %1507 = vmatprep.subr.bf16.mxu0 %v1147
    %1508 = vmatpush1.bf16.msra.mxu0 %v1146
    %1509 = vmatprep.subr.bf16.mxu0 %v1151
    %1510 = vmatpush1.bf16.msra.mxu0 %v1150
    %1511 = vmatprep.subr.bf16.mxu0 %v1155
    %1512 = vmatpush1.bf16.msra.mxu0 %v1154
    %1513 = vmatprep.subr.bf16.mxu0 %v1159
    %1514 = vmatpush1.bf16.msra.mxu0 %v1158
    %1515 = vmatprep.subr.bf16.mxu0 %v1163
    %1516 = vmatpush1.bf16.msra.mxu0 %v1162
    %1517 = vmatprep.subr.bf16.mxu0 %v1167
    %1518 = vmatpush1.bf16.msra.mxu0 %v1166
    %1519 = vmatprep.subr.bf16.mxu0 %v1171
    %1520 = vmatpush1.bf16.msra.mxu0 %v1170
    %1521 = vmatprep.subr.bf16.mxu0 %v1175
    %1522 = vmatpush1.bf16.msra.mxu0 %v1174
    %1523 = vmatprep.subr.bf16.mxu0 %v1179
    %1524 = vmatpush1.bf16.msra.mxu0 %v1178
    %1525 = vmatprep.subr.bf16.mxu0 %v1183
    %1526 = vmatpush1.bf16.msra.mxu0 %v1182
    %1527 = vmatprep.mubr.bf16.mxu0 %v461
    %1528 = vmatmul.mubr.bf16.gmra.mrb[0].mxu0 %v460
    %v1529 = vpop.f32.mrb[0].mxu0
    %v1530 = vadd.f32 %v1477, %v1529
    %v1531 = vpop.f32.mrb[0].mxu0
    %v1532 = vadd.f32 %v1479, %v1531
    %v1533 = vpop.f32.mrb[0].mxu0
    %v1534 = vadd.f32 %v1481, %v1533
    %v1535 = vpop.f32.mrb[0].mxu0
    %v1536 = vadd.f32 %v1483, %v1535
    %1537 = vmatprep.mubr.bf16.mxu0 %v467
    %1538 = vmatmul.mubr.bf16.gmra.mrb[0].mxu0 %v466
    %v1539 = vpop.f32.mrb[0].mxu0
    %v1540 = vadd.f32 %v1487, %v1539
    %v1541 = vpop.f32.mrb[0].mxu0
    %v1542 = vadd.f32 %v1489, %v1541
    %v1543 = vpop.f32.mrb[0].mxu0
    %v1544 = vadd.f32 %v1491, %v1543
    %v1545 = vpop.f32.mrb[0].mxu0
    %v1546 = vadd.f32 %v1493, %v1545
    %1547 = vdwg.mxu0
    %1548 = vmatprep.subr.bf16.mxu0 %v1187
    %1549 = vmatpush1.bf16.msra.mxu0 %v1186
    %1550 = vmatprep.subr.bf16.mxu0 %v1191
    %1551 = vmatpush1.bf16.msra.mxu0 %v1190
    %1552 = vmatprep.subr.bf16.mxu0 %v1195
    %1553 = vmatpush1.bf16.msra.mxu0 %v1194
    %1554 = vmatprep.subr.bf16.mxu0 %v1199
    %1555 = vmatpush1.bf16.msra.mxu0 %v1198
    %1556 = vmatprep.subr.bf16.mxu0 %v1203
    %1557 = vmatpush1.bf16.msra.mxu0 %v1202
    %1558 = vmatprep.subr.bf16.mxu0 %v1207
    %1559 = vmatpush1.bf16.msra.mxu0 %v1206
    %1560 = vmatprep.subr.bf16.mxu0 %v1211
    %1561 = vmatpush1.bf16.msra.mxu0 %v1210
    %1562 = vmatprep.subr.bf16.mxu0 %v1215
    %1563 = vmatpush1.bf16.msra.mxu0 %v1214
    %1564 = vmatprep.subr.bf16.mxu0 %v1219
    %1565 = vmatpush1.bf16.msra.mxu0 %v1218
    %1566 = vmatprep.subr.bf16.mxu0 %v1223
    %1567 = vmatpush1.bf16.msra.mxu0 %v1222
    %1568 = vmatprep.subr.bf16.mxu0 %v1227
    %1569 = vmatpush1.bf16.msra.mxu0 %v1226
    %1570 = vmatprep.subr.bf16.mxu0 %v1231
    %1571 = vmatpush1.bf16.msra.mxu0 %v1230
    %1572 = vmatprep.subr.bf16.mxu0 %v1235
    %1573 = vmatpush1.bf16.msra.mxu0 %v1234
    %1574 = vmatprep.subr.bf16.mxu0 %v1239
    %1575 = vmatpush1.bf16.msra.mxu0 %v1238
    %1576 = vmatprep.subr.bf16.mxu0 %v1243
    %1577 = vmatpush1.bf16.msra.mxu0 %v1242
    %1578 = vmatprep.subr.bf16.mxu0 %v1247
    %1579 = vmatpush1.bf16.msra.mxu0 %v1246
    %1580 = vmatprep.mubr.bf16.mxu0 %v463
    %1581 = vmatmul.mubr.bf16.gmra.mrb[0].mxu0 %v462
    %v1582 = vpop.f32.mrb[0].mxu0
    %v1583 = vadd.f32 %v1530, %v1582
    %v1584 = vpop.f32.mrb[0].mxu0
    %v1585 = vadd.f32 %v1532, %v1584
    %v1586 = vpop.f32.mrb[0].mxu0
    %v1587 = vadd.f32 %v1534, %v1586
    %v1588 = vpop.f32.mrb[0].mxu0
    %v1589 = vadd.f32 %v1536, %v1588
    %1590 = vmatprep.mubr.bf16.mxu0 %v469
    %1591 = vmatmul.mubr.bf16.gmra.mrb[0].mxu0 %v468
    %v1592 = vpop.f32.mrb[0].mxu0
    %v1593 = vadd.f32 %v1540, %v1592
    %v1594 = vpop.f32.mrb[0].mxu0
    %v1595 = vadd.f32 %v1542, %v1594
    %v1596 = vpop.f32.mrb[0].mxu0
    %v1597 = vadd.f32 %v1544, %v1596
    %v1598 = vpop.f32.mrb[0].mxu0
    %v1599 = vadd.f32 %v1546, %v1598
    %1600 = vdwg.mxu0
    %1601 = vmatprep.subr.bf16.mxu0 %v1061
    %1602 = vmatpush1.bf16.msra.mxu0 %v1060
    %1603 = vmatprep.subr.bf16.mxu0 %v1065
    %1604 = vmatpush1.bf16.msra.mxu0 %v1064
    %1605 = vmatprep.subr.bf16.mxu0 %v1069
    %1606 = vmatpush1.bf16.msra.mxu0 %v1068
    %1607 = vmatprep.subr.bf16.mxu0 %v1073
    %1608 = vmatpush1.bf16.msra.mxu0 %v1072
    %1609 = vmatprep.subr.bf16.mxu0 %v1077
    %1610 = vmatpush1.bf16.msra.mxu0 %v1076
    %1611 = vmatprep.subr.bf16.mxu0 %v1081
    %1612 = vmatpush1.bf16.msra.mxu0 %v1080
    %1613 = vmatprep.subr.bf16.mxu0 %v1085
    %1614 = vmatpush1.bf16.msra.mxu0 %v1084
    %1615 = vmatprep.subr.bf16.mxu0 %v1089
    %1616 = vmatpush1.bf16.msra.mxu0 %v1088
    %1617 = vmatprep.subr.bf16.mxu0 %v1093
    %1618 = vmatpush1.bf16.msra.mxu0 %v1092
    %1619 = vmatprep.subr.bf16.mxu0 %v1097
    %1620 = vmatpush1.bf16.msra.mxu0 %v1096
    %1621 = vmatprep.subr.bf16.mxu0 %v1101
    %1622 = vmatpush1.bf16.msra.mxu0 %v1100
    %1623 = vmatprep.subr.bf16.mxu0 %v1105
    %1624 = vmatpush1.bf16.msra.mxu0 %v1104
    %1625 = vmatprep.subr.bf16.mxu0 %v1109
    %1626 = vmatpush1.bf16.msra.mxu0 %v1108
    %1627 = vmatprep.subr.bf16.mxu0 %v1113
    %1628 = vmatpush1.bf16.msra.mxu0 %v1112
    %1629 = vmatprep.subr.bf16.mxu0 %v1117
    %1630 = vmatpush1.bf16.msra.mxu0 %v1116
    %1631 = vmatprep.subr.bf16.mxu0 %v1121
    %1632 = vmatpush1.bf16.msra.mxu0 %v1120
    %1633 = vmatprep.mubr.bf16.mxu0 %v459
    %1634 = vmatmul.mubr.bf16.gmra.mrb[0].mxu0 %v458
    %v1635 = vpop.f32.mrb[0].mxu0
    %v1636 = vadd.f32 %v413, %v1635
    %v1637 = vpop.f32.mrb[0].mxu0
    %v1638 = vadd.f32 %v417, %v1637
    %v1639 = vpop.f32.mrb[0].mxu0
    %v1640 = vadd.f32 %v413, %v1639
    %v1641 = vpop.f32.mrb[0].mxu0
    %v1642 = vadd.f32 %v417, %v1641
    %1643 = vmatprep.mubr.bf16.mxu0 %v465
    %1644 = vmatmul.mubr.bf16.gmra.mrb[0].mxu0 %v464
    %v1645 = vpop.f32.mrb[0].mxu0
    %v1646 = vadd.f32 %v413, %v1645
    %v1647 = vpop.f32.mrb[0].mxu0
    %v1648 = vadd.f32 %v417, %v1647
    %v1649 = vpop.f32.mrb[0].mxu0
    %v1650 = vadd.f32 %v413, %v1649
    %v1651 = vpop.f32.mrb[0].mxu0
    %v1652 = vadd.f32 %v417, %v1651
    %1653 = vdwg.mxu0
    %1654 = vmatprep.subr.bf16.mxu0 %v1125
    %1655 = vmatpush1.bf16.msra.mxu0 %v1124
    %1656 = vmatprep.subr.bf16.mxu0 %v1129
    %1657 = vmatpush1.bf16.msra.mxu0 %v1128
    %1658 = vmatprep.subr.bf16.mxu0 %v1133
    %1659 = vmatpush1.bf16.msra.mxu0 %v1132
    %1660 = vmatprep.subr.bf16.mxu0 %v1137
    %1661 = vmatpush1.bf16.msra.mxu0 %v1136
    %1662 = vmatprep.subr.bf16.mxu0 %v1141
    %1663 = vmatpush1.bf16.msra.mxu0 %v1140
    %1664 = vmatprep.subr.bf16.mxu0 %v1145
    %1665 = vmatpush1.bf16.msra.mxu0 %v1144
    %1666 = vmatprep.subr.bf16.mxu0 %v1149
    %1667 = vmatpush1.bf16.msra.mxu0 %v1148
    %1668 = vmatprep.subr.bf16.mxu0 %v1153
    %1669 = vmatpush1.bf16.msra.mxu0 %v1152
    %1670 = vmatprep.subr.bf16.mxu0 %v1157
    %1671 = vmatpush1.bf16.msra.mxu0 %v1156
    %1672 = vmatprep.subr.bf16.mxu0 %v1161
    %1673 = vmatpush1.bf16.msra.mxu0 %v1160
    %1674 = vmatprep.subr.bf16.mxu0 %v1165
    %1675 = vmatpush1.bf16.msra.mxu0 %v1164
    %1676 = vmatprep.subr.bf16.mxu0 %v1169
    %1677 = vmatpush1.bf16.msra.mxu0 %v1168
    %1678 = vmatprep.subr.bf16.mxu0 %v1173
    %1679 = vmatpush1.bf16.msra.mxu0 %v1172
    %1680 = vmatprep.subr.bf16.mxu0 %v1177
    %1681 = vmatpush1.bf16.msra.mxu0 %v1176
    %1682 = vmatprep.subr.bf16.mxu0 %v1181
    %1683 = vmatpush1.bf16.msra.mxu0 %v1180
    %1684 = vmatprep.subr.bf16.mxu0 %v1185
    %1685 = vmatpush1.bf16.msra.mxu0 %v1184
    %1686 = vmatprep.mubr.bf16.mxu0 %v461
    %1687 = vmatmul.mubr.bf16.gmra.mrb[0].mxu0 %v460
    %v1688 = vpop.f32.mrb[0].mxu0
    %v1689 = vadd.f32 %v1636, %v1688
    %v1690 = vpop.f32.mrb[0].mxu0
    %v1691 = vadd.f32 %v1638, %v1690
    %v1692 = vpop.f32.mrb[0].mxu0
    %v1693 = vadd.f32 %v1640, %v1692
    %v1694 = vpop.f32.mrb[0].mxu0
    %v1695 = vadd.f32 %v1642, %v1694
    %1696 = vmatprep.mubr.bf16.mxu0 %v467
    %1697 = vmatmul.mubr.bf16.gmra.mrb[0].mxu0 %v466
    %v1698 = vpop.f32.mrb[0].mxu0
    %v1699 = vadd.f32 %v1646, %v1698
    %v1700 = vpop.f32.mrb[0].mxu0
    %v1701 = vadd.f32 %v1648, %v1700
    %v1702 = vpop.f32.mrb[0].mxu0
    %v1703 = vadd.f32 %v1650, %v1702
    %v1704 = vpop.f32.mrb[0].mxu0
    %v1705 = vadd.f32 %v1652, %v1704
    %1706 = vdwg.mxu0
    %1707 = vmatprep.subr.bf16.mxu0 %v1189
    %1708 = vmatpush1.bf16.msra.mxu0 %v1188
    %1709 = vmatprep.subr.bf16.mxu0 %v1193
    %1710 = vmatpush1.bf16.msra.mxu0 %v1192
    %1711 = vmatprep.subr.bf16.mxu0 %v1197
    %1712 = vmatpush1.bf16.msra.mxu0 %v1196
    %1713 = vmatprep.subr.bf16.mxu0 %v1201
    %1714 = vmatpush1.bf16.msra.mxu0 %v1200
    %1715 = vmatprep.subr.bf16.mxu0 %v1205
    %1716 = vmatpush1.bf16.msra.mxu0 %v1204
    %1717 = vmatprep.subr.bf16.mxu0 %v1209
    %1718 = vmatpush1.bf16.msra.mxu0 %v1208
    %1719 = vmatprep.subr.bf16.mxu0 %v1213
    %1720 = vmatpush1.bf16.msra.mxu0 %v1212
    %1721 = vmatprep.subr.bf16.mxu0 %v1217
    %1722 = vmatpush1.bf16.msra.mxu0 %v1216
    %1723 = vmatprep.subr.bf16.mxu0 %v1221
    %1724 = vmatpush1.bf16.msra.mxu0 %v1220
    %1725 = vmatprep.subr.bf16.mxu0 %v1225
    %1726 = vmatpush1.bf16.msra.mxu0 %v1224
    %1727 = vmatprep.subr.bf16.mxu0 %v1229
    %1728 = vmatpush1.bf16.msra.mxu0 %v1228
    %1729 = vmatprep.subr.bf16.mxu0 %v1233
    %1730 = vmatpush1.bf16.msra.mxu0 %v1232
    %1731 = vmatprep.subr.bf16.mxu0 %v1237
    %1732 = vmatpush1.bf16.msra.mxu0 %v1236
    %1733 = vmatprep.subr.bf16.mxu0 %v1241
    %1734 = vmatpush1.bf16.msra.mxu0 %v1240
    %1735 = vmatprep.subr.bf16.mxu0 %v1245
    %1736 = vmatpush1.bf16.msra.mxu0 %v1244
    %1737 = vmatprep.subr.bf16.mxu0 %v1249
    %1738 = vmatpush1.bf16.msra.mxu0 %v1248
    %1739 = vmatprep.mubr.bf16.mxu0 %v463
    %1740 = vmatmul.mubr.bf16.gmra.mrb[0].mxu0 %v462
    %v1741 = vpop.f32.mrb[0].mxu0
    %v1742 = vadd.f32 %v1689, %v1741
    %v1743 = vpop.f32.mrb[0].mxu0
    %v1744 = vadd.f32 %v1691, %v1743
    %v1745 = vpop.f32.mrb[0].mxu0
    %v1746 = vadd.f32 %v1693, %v1745
    %v1747 = vpop.f32.mrb[0].mxu0
    %v1748 = vadd.f32 %v1695, %v1747
    %1749 = vmatprep.mubr.bf16.mxu0 %v469
    %1750 = vmatmul.mubr.bf16.gmra.mrb[0].mxu0 %v468
    %v1751 = vpop.f32.mrb[0].mxu0
    %v1752 = vadd.f32 %v1699, %v1751
    %v1753 = vpop.f32.mrb[0].mxu0
    %v1754 = vadd.f32 %v1701, %v1753
    %v1755 = vpop.f32.mrb[0].mxu0
    %v1756 = vadd.f32 %v1703, %v1755
    %v1757 = vpop.f32.mrb[0].mxu0
    %v1758 = vadd.f32 %v1705, %v1757
    %1759 = vdwg.mxu0
    %v1760 = vpack.c.bf16 %v1587, %v1583
    %v1761 = vpack.c.bf16 %v1589, %v1585
    %v1762 = vpack.c.bf16 %v1746, %v1742
    %v1763 = vpack.c.bf16 %v1748, %v1744
    %v1764 = vpack.c.bf16 %v1597, %v1593
    %v1765 = vpack.c.bf16 %v1599, %v1595
    %v1766 = vpack.c.bf16 %v1756, %v1752
    %v1767 = vpack.c.bf16 %v1758, %v1754
    %v1768 = vld [vmem:[#allocation8] sm:$0xf]
    %v1769 = vld [vmem:[#allocation8 + $0x4] sm:$0xf]
    %v1770 = vld [vmem:[#allocation8 + $0x8] sm:$0xf]
    %v1771 = vld [vmem:[#allocation8 + $0xc] sm:$0xf]
    %v1772 = vld [vmem:[#allocation8 + $0x10] sm:$0xf]
    %v1773 = vld [vmem:[#allocation8 + $0x14] sm:$0xf]
    %v1774 = vld [vmem:[#allocation8 + $0x18] sm:$0xf]
    %v1775 = vld [vmem:[#allocation8 + $0x1c] sm:$0xf]
    %v1776 = vld [vmem:[#allocation8 + $0x20] sm:$0xf]
    %v1777 = vld [vmem:[#allocation8 + $0x24] sm:$0xf]
    %v1778 = vld [vmem:[#allocation8 + $0x28] sm:$0xf]
    %v1779 = vld [vmem:[#allocation8 + $0x2c] sm:$0xf]
    %v1780 = vld [vmem:[#allocation8 + $0x30] sm:$0xf]
    %v1781 = vld [vmem:[#allocation8 + $0x34] sm:$0xf]
    %v1782 = vld [vmem:[#allocation8 + $0x38] sm:$0xf]
    %v1783 = vld [vmem:[#allocation8 + $0x3c] sm:$0xf]
    %v1784 = vld [vmem:[#allocation8 + $0x40] sm:$0xf]
    %v1785 = vld [vmem:[#allocation8 + $0x44] sm:$0xf]
    %v1786 = vld [vmem:[#allocation8 + $0x48] sm:$0xf]
    %v1787 = vld [vmem:[#allocation8 + $0x4c] sm:$0xf]
    %v1788 = vld [vmem:[#allocation8 + $0x50] sm:$0xf]
    %v1789 = vld [vmem:[#allocation8 + $0x54] sm:$0xf]
    %v1790 = vld [vmem:[#allocation8 + $0x58] sm:$0xf]
    %v1791 = vld [vmem:[#allocation8 + $0x5c] sm:$0xf]
    %v1792 = vld [vmem:[#allocation8 + $0x60] sm:$0xf]
    %v1793 = vld [vmem:[#allocation8 + $0x64] sm:$0xf]
    %v1794 = vld [vmem:[#allocation8 + $0x68] sm:$0xf]
    %v1795 = vld [vmem:[#allocation8 + $0x6c] sm:$0xf]
    %v1796 = vld [vmem:[#allocation8 + $0x70] sm:$0xf]
    %v1797 = vld [vmem:[#allocation8 + $0x74] sm:$0xf]
    %v1798 = vld [vmem:[#allocation8 + $0x78] sm:$0xf]
    %v1799 = vld [vmem:[#allocation8 + $0x7c] sm:$0xf]
    %v1800 = vld [vmem:[#allocation8 + $0x80] sm:$0xf]
    %v1801 = vld [vmem:[#allocation8 + $0x84] sm:$0xf]
    %v1802 = vld [vmem:[#allocation8 + $0x88] sm:$0xf]
    %v1803 = vld [vmem:[#allocation8 + $0x8c] sm:$0xf]
    %v1804 = vld [vmem:[#allocation8 + $0x90] sm:$0xf]
    %v1805 = vld [vmem:[#allocation8 + $0x94] sm:$0xf]
    %v1806 = vld [vmem:[#allocation8 + $0x98] sm:$0xf]
    %v1807 = vld [vmem:[#allocation8 + $0x9c] sm:$0xf]
    %v1808 = vld [vmem:[#allocation8 + $0xa0] sm:$0xf]
    %v1809 = vld [vmem:[#allocation8 + $0xa4] sm:$0xf]
    %v1810 = vld [vmem:[#allocation8 + $0xa8] sm:$0xf]
    %v1811 = vld [vmem:[#allocation8 + $0xac] sm:$0xf]
    %v1812 = vld [vmem:[#allocation8 + $0xb0] sm:$0xf]
    %v1813 = vld [vmem:[#allocation8 + $0xb4] sm:$0xf]
    %v1814 = vld [vmem:[#allocation8 + $0xb8] sm:$0xf]
    %v1815 = vld [vmem:[#allocation8 + $0xbc] sm:$0xf]
    %v1816 = vld [vmem:[#allocation8 + $0xc0] sm:$0xf]
    %v1817 = vld [vmem:[#allocation8 + $0xc4] sm:$0xf]
    %v1818 = vld [vmem:[#allocation8 + $0xc8] sm:$0xf]
    %v1819 = vld [vmem:[#allocation8 + $0xcc] sm:$0xf]
    %v1820 = vld [vmem:[#allocation8 + $0xd0] sm:$0xf]
    %v1821 = vld [vmem:[#allocation8 + $0xd4] sm:$0xf]
    %v1822 = vld [vmem:[#allocation8 + $0xd8] sm:$0xf]
    %v1823 = vld [vmem:[#allocation8 + $0xdc] sm:$0xf]
    %v1824 = vld [vmem:[#allocation8 + $0xe0] sm:$0xf]
    %v1825 = vld [vmem:[#allocation8 + $0xe4] sm:$0xf]
    %v1826 = vld [vmem:[#allocation8 + $0xe8] sm:$0xf]
    %v1827 = vld [vmem:[#allocation8 + $0xec] sm:$0xf]
    %v1828 = vld [vmem:[#allocation8 + $0xf0] sm:$0xf]
    %v1829 = vld [vmem:[#allocation8 + $0xf4] sm:$0xf]
    %v1830 = vld [vmem:[#allocation8 + $0xf8] sm:$0xf]
    %v1831 = vld [vmem:[#allocation8 + $0xfc] sm:$0xf]
    %v1896 = vunpack.c.l.b16 %v1768
    %v1897 = vunpack.c.l.b16 %v1769
    %v1898 = vunpack.c.l.b16 %v1770
    %v1899 = vunpack.c.l.b16 %v1771
    %v1900 = vunpack.c.l.b16 %v1772
    %v1901 = vunpack.c.l.b16 %v1773
    %v1902 = vunpack.c.l.b16 %v1774
    %v1903 = vunpack.c.l.b16 %v1775
    %v1904 = vunpack.c.l.b16 %v1776
    %v1905 = vunpack.c.l.b16 %v1777
    %v1906 = vunpack.c.l.b16 %v1778
    %v1907 = vunpack.c.l.b16 %v1779
    %v1908 = vunpack.c.l.b16 %v1780
    %v1909 = vunpack.c.l.b16 %v1781
    %v1910 = vunpack.c.l.b16 %v1782
    %v1911 = vunpack.c.l.b16 %v1783
    %v1912 = vunpack.c.l.b16 %v1784
    %v1913 = vunpack.c.l.b16 %v1785
    %v1914 = vunpack.c.l.b16 %v1786
    %v1915 = vunpack.c.l.b16 %v1787
    %v1916 = vunpack.c.l.b16 %v1788
    %v1917 = vunpack.c.l.b16 %v1789
    %v1918 = vunpack.c.l.b16 %v1790
    %v1919 = vunpack.c.l.b16 %v1791
    %v1920 = vunpack.c.l.b16 %v1792
    %v1921 = vunpack.c.l.b16 %v1793
    %v1922 = vunpack.c.l.b16 %v1794
    %v1923 = vunpack.c.l.b16 %v1795
    %v1924 = vunpack.c.l.b16 %v1796
    %v1925 = vunpack.c.l.b16 %v1797
    %v1926 = vunpack.c.l.b16 %v1798
    %v1927 = vunpack.c.l.b16 %v1799
    %v1928 = vunpack.c.l.b16 %v1800
    %v1929 = vunpack.c.l.b16 %v1801
    %v1930 = vunpack.c.l.b16 %v1802
    %v1931 = vunpack.c.l.b16 %v1803
    %v1932 = vunpack.c.l.b16 %v1804
    %v1933 = vunpack.c.l.b16 %v1805
    %v1934 = vunpack.c.l.b16 %v1806
    %v1935 = vunpack.c.l.b16 %v1807
    %v1936 = vunpack.c.l.b16 %v1808
    %v1937 = vunpack.c.l.b16 %v1809
    %v1938 = vunpack.c.l.b16 %v1810
    %v1939 = vunpack.c.l.b16 %v1811
    %v1940 = vunpack.c.l.b16 %v1812
    %v1941 = vunpack.c.l.b16 %v1813
    %v1942 = vunpack.c.l.b16 %v1814
    %v1943 = vunpack.c.l.b16 %v1815
    %v1944 = vunpack.c.l.b16 %v1816
    %v1945 = vunpack.c.l.b16 %v1817
    %v1946 = vunpack.c.l.b16 %v1818
    %v1947 = vunpack.c.l.b16 %v1819
    %v1948 = vunpack.c.l.b16 %v1820
    %v1949 = vunpack.c.l.b16 %v1821
    %v1950 = vunpack.c.l.b16 %v1822
    %v1951 = vunpack.c.l.b16 %v1823
    %v1952 = vunpack.c.l.b16 %v1824
    %v1953 = vunpack.c.l.b16 %v1825
    %v1954 = vunpack.c.l.b16 %v1826
    %v1955 = vunpack.c.l.b16 %v1827
    %v1956 = vunpack.c.l.b16 %v1828
    %v1957 = vunpack.c.l.b16 %v1829
    %v1958 = vunpack.c.l.b16 %v1830
    %v1959 = vunpack.c.l.b16 %v1831
    %v1960 = vpack.c.b16 %v1897, %v1896
    %v1961 = vpack.c.b16 %v1899, %v1898
    %v1962 = vpack.c.b16 %v1901, %v1900
    %v1963 = vpack.c.b16 %v1903, %v1902
    %v1964 = vpack.c.b16 %v1905, %v1904
    %v1965 = vpack.c.b16 %v1907, %v1906
    %v1966 = vpack.c.b16 %v1909, %v1908
    %v1967 = vpack.c.b16 %v1911, %v1910
    %v1968 = vpack.c.b16 %v1913, %v1912
    %v1969 = vpack.c.b16 %v1915, %v1914
    %v1970 = vpack.c.b16 %v1917, %v1916
    %v1971 = vpack.c.b16 %v1919, %v1918
    %v1972 = vpack.c.b16 %v1921, %v1920
    %v1973 = vpack.c.b16 %v1923, %v1922
    %v1974 = vpack.c.b16 %v1925, %v1924
    %v1975 = vpack.c.b16 %v1927, %v1926
    %v1976 = vpack.c.b16 %v1929, %v1928
    %v1977 = vpack.c.b16 %v1931, %v1930
    %v1978 = vpack.c.b16 %v1933, %v1932
    %v1979 = vpack.c.b16 %v1935, %v1934
    %v1980 = vpack.c.b16 %v1937, %v1936
    %v1981 = vpack.c.b16 %v1939, %v1938
    %v1982 = vpack.c.b16 %v1941, %v1940
    %v1983 = vpack.c.b16 %v1943, %v1942
    %v1984 = vpack.c.b16 %v1945, %v1944
    %v1985 = vpack.c.b16 %v1947, %v1946
    %v1986 = vpack.c.b16 %v1949, %v1948
    %v1987 = vpack.c.b16 %v1951, %v1950
    %v1988 = vpack.c.b16 %v1953, %v1952
    %v1989 = vpack.c.b16 %v1955, %v1954
    %v1990 = vpack.c.b16 %v1957, %v1956
    %v1991 = vpack.c.b16 %v1959, %v1958
    %2024 = vmatprep.subr.bf16.mxu0 0
    %2025 = vmatpush1.bf16.msra.mxu0 %v1960
    %2026 = vmatprep.subr.bf16.mxu0 0
    %2027 = vmatpush1.bf16.msra.mxu0 %v1961
    %2028 = vmatprep.subr.bf16.mxu0 0
    %2029 = vmatpush1.bf16.msra.mxu0 %v1962
    %2030 = vmatprep.subr.bf16.mxu0 0
    %2031 = vmatpush1.bf16.msra.mxu0 %v1963
    %2032 = vmatprep.subr.bf16.mxu0 0
    %2033 = vmatpush1.bf16.msra.mxu0 %v1964
    %2034 = vmatprep.subr.bf16.mxu0 0
    %2035 = vmatpush1.bf16.msra.mxu0 %v1965
    %2036 = vmatprep.subr.bf16.mxu0 0
    %2037 = vmatpush1.bf16.msra.mxu0 %v1966
    %2038 = vmatprep.subr.bf16.mxu0 0
    %2039 = vmatpush1.bf16.msra.mxu0 %v1967
    %2040 = vmatprep.subr.bf16.mxu0 0
    %2041 = vmatpush1.bf16.msra.mxu0 %v1968
    %2042 = vmatprep.subr.bf16.mxu0 0
    %2043 = vmatpush1.bf16.msra.mxu0 %v1969
    %2044 = vmatprep.subr.bf16.mxu0 0
    %2045 = vmatpush1.bf16.msra.mxu0 %v1970
    %2046 = vmatprep.subr.bf16.mxu0 0
    %2047 = vmatpush1.bf16.msra.mxu0 %v1971
    %2048 = vmatprep.subr.bf16.mxu0 0
    %2049 = vmatpush1.bf16.msra.mxu0 %v1972
    %2050 = vmatprep.subr.bf16.mxu0 0
    %2051 = vmatpush1.bf16.msra.mxu0 %v1973
    %2052 = vmatprep.subr.bf16.mxu0 0
    %2053 = vmatpush1.bf16.msra.mxu0 %v1974
    %2054 = vmatprep.subr.bf16.mxu0 0
    %2055 = vmatpush1.bf16.msra.mxu0 %v1975
    %2056 = vmatprep.mubr.bf16.mxu0 %v1761
    %2057 = vmatmul.mubr.bf16.gmra.mrb[0].mxu0 %v1760
    %v2058 = vpop.f32.mrb[0].mxu0
    %v2059 = vadd.f32 0.0, %v2058
    %v2060 = vpop.f32.mrb[0].mxu0
    %v2061 = vpop.f32.mrb[0].mxu0
    %v2062 = vadd.f32 0.0, %v2061
    %v2063 = vpop.f32.mrb[0].mxu0
    %2064 = vmatprep.mubr.bf16.mxu0 %v1765
    %2065 = vmatmul.mubr.bf16.gmra.mrb[0].mxu0 %v1764
    %v2066 = vpop.f32.mrb[0].mxu0
    %v2067 = vadd.f32 0.0, %v2066
    %v2068 = vpop.f32.mrb[0].mxu0
    %v2069 = vpop.f32.mrb[0].mxu0
    %v2070 = vadd.f32 0.0, %v2069
    %v2071 = vpop.f32.mrb[0].mxu0
    %2072 = vdwg.mxu0
    %2073 = vmatprep.subr.bf16.mxu0 0
    %2074 = vmatpush1.bf16.msra.mxu0 %v1976
    %2075 = vmatprep.subr.bf16.mxu0 0
    %2076 = vmatpush1.bf16.msra.mxu0 %v1977
    %2077 = vmatprep.subr.bf16.mxu0 0
    %2078 = vmatpush1.bf16.msra.mxu0 %v1978
    %2079 = vmatprep.subr.bf16.mxu0 0
    %2080 = vmatpush1.bf16.msra.mxu0 %v1979
    %2081 = vmatprep.subr.bf16.mxu0 0
    %2082 = vmatpush1.bf16.msra.mxu0 %v1980
    %2083 = vmatprep.subr.bf16.mxu0 0
    %2084 = vmatpush1.bf16.msra.mxu0 %v1981
    %2085 = vmatprep.subr.bf16.mxu0 0
    %2086 = vmatpush1.bf16.msra.mxu0 %v1982
    %2087 = vmatprep.subr.bf16.mxu0 0
    %2088 = vmatpush1.bf16.msra.mxu0 %v1983
    %2089 = vmatprep.subr.bf16.mxu0 0
    %2090 = vmatpush1.bf16.msra.mxu0 %v1984
    %2091 = vmatprep.subr.bf16.mxu0 0
    %2092 = vmatpush1.bf16.msra.mxu0 %v1985
    %2093 = vmatprep.subr.bf16.mxu0 0
    %2094 = vmatpush1.bf16.msra.mxu0 %v1986
    %2095 = vmatprep.subr.bf16.mxu0 0
    %2096 = vmatpush1.bf16.msra.mxu0 %v1987
    %2097 = vmatprep.subr.bf16.mxu0 0
    %2098 = vmatpush1.bf16.msra.mxu0 %v1988
    %2099 = vmatprep.subr.bf16.mxu0 0
    %2100 = vmatpush1.bf16.msra.mxu0 %v1989
    %2101 = vmatprep.subr.bf16.mxu0 0
    %2102 = vmatpush1.bf16.msra.mxu0 %v1990
    %2103 = vmatprep.subr.bf16.mxu0 0
    %2104 = vmatpush1.bf16.msra.mxu0 %v1991
    %2105 = vmatprep.mubr.bf16.mxu0 %v1763
    %2106 = vmatmul.mubr.bf16.gmra.mrb[0].mxu0 %v1762
    %v2107 = vpop.f32.mrb[0].mxu0
    %v2108 = vadd.f32 %v2059, %v2107
    %v2109 = vpop.f32.mrb[0].mxu0
    %v2110 = vpop.f32.mrb[0].mxu0
    %v2111 = vadd.f32 %v2062, %v2110
    %v2112 = vpop.f32.mrb[0].mxu0
    %2113 = vmatprep.mubr.bf16.mxu0 %v1767
    %2114 = vmatmul.mubr.bf16.gmra.mrb[0].mxu0 %v1766
    %v2115 = vpop.f32.mrb[0].mxu0
    %v2116 = vadd.f32 %v2067, %v2115
    %v2117 = vpop.f32.mrb[0].mxu0
    %v2118 = vpop.f32.mrb[0].mxu0
    %v2119 = vadd.f32 %v2070, %v2118
    %v2120 = vpop.f32.mrb[0].mxu0
    %2121 = vdwg.mxu0
    %v2122 = vld [vmem:[#allocation10] sm:$0xff]
    %v2123 = vld [vmem:[#allocation10 + $0x8] sm:$0xff]
    %v2124 = vld [vmem:[#allocation10 + $0x10] sm:$0xff]
    %v2125 = vld [vmem:[#allocation10 + $0x18] sm:$0xff]
    %v2126 = vld [vmem:[#allocation10 + $0x20] sm:$0xff]
    %v2127 = vld [vmem:[#allocation10 + $0x28] sm:$0xff]
    %v2128 = vld [vmem:[#allocation10 + $0x30] sm:$0xff]
    %v2129 = vld [vmem:[#allocation10 + $0x38] sm:$0xff]
    %v2130 = vld [vmem:[#allocation10 + $0x40] sm:$0xff]
    %v2131 = vld [vmem:[#allocation10 + $0x48] sm:$0xff]
    %v2132 = vld [vmem:[#allocation10 + $0x50] sm:$0xff]
    %v2133 = vld [vmem:[#allocation10 + $0x58] sm:$0xff]
    %v2134 = vld [vmem:[#allocation10 + $0x60] sm:$0xff]
    %v2135 = vld [vmem:[#allocation10 + $0x68] sm:$0xff]
    %v2136 = vld [vmem:[#allocation10 + $0x70] sm:$0xff]
    %v2137 = vld [vmem:[#allocation10 + $0x78] sm:$0xff]
    %v2138 = vld [vmem:[#allocation10 + $0x80] sm:$0xff]
    %v2139 = vld [vmem:[#allocation10 + $0x88] sm:$0xff]
    %v2140 = vld [vmem:[#allocation10 + $0x90] sm:$0xff]
    %v2141 = vld [vmem:[#allocation10 + $0x98] sm:$0xff]
    %v2142 = vld [vmem:[#allocation10 + $0xa0] sm:$0xff]
    %v2143 = vld [vmem:[#allocation10 + $0xa8] sm:$0xff]
    %v2144 = vld [vmem:[#allocation10 + $0xb0] sm:$0xff]
    %v2145 = vld [vmem:[#allocation10 + $0xb8] sm:$0xff]
    %v2146 = vld [vmem:[#allocation10 + $0xc0] sm:$0xff]
    %v2147 = vld [vmem:[#allocation10 + $0xc8] sm:$0xff]
    %v2148 = vld [vmem:[#allocation10 + $0xd0] sm:$0xff]
    %v2149 = vld [vmem:[#allocation10 + $0xd8] sm:$0xff]
    %v2150 = vld [vmem:[#allocation10 + $0xe0] sm:$0xff]
    %v2151 = vld [vmem:[#allocation10 + $0xe8] sm:$0xff]
    %v2152 = vld [vmem:[#allocation10 + $0xf0] sm:$0xff]
    %v2153 = vld [vmem:[#allocation10 + $0xf8] sm:$0xff]
    %v2154 = vld [vmem:[#allocation10 + $0x100] sm:$0xff]
    %v2155 = vld [vmem:[#allocation10 + $0x108] sm:$0xff]
    %v2156 = vld [vmem:[#allocation10 + $0x110] sm:$0xff]
    %v2157 = vld [vmem:[#allocation10 + $0x118] sm:$0xff]
    %v2158 = vld [vmem:[#allocation10 + $0x120] sm:$0xff]
    %v2159 = vld [vmem:[#allocation10 + $0x128] sm:$0xff]
    %v2160 = vld [vmem:[#allocation10 + $0x130] sm:$0xff]
    %v2161 = vld [vmem:[#allocation10 + $0x138] sm:$0xff]
    %v2162 = vld [vmem:[#allocation10 + $0x140] sm:$0xff]
    %v2163 = vld [vmem:[#allocation10 + $0x148] sm:$0xff]
    %v2164 = vld [vmem:[#allocation10 + $0x150] sm:$0xff]
    %v2165 = vld [vmem:[#allocation10 + $0x158] sm:$0xff]
    %v2166 = vld [vmem:[#allocation10 + $0x160] sm:$0xff]
    %v2167 = vld [vmem:[#allocation10 + $0x168] sm:$0xff]
    %v2168 = vld [vmem:[#allocation10 + $0x170] sm:$0xff]
    %v2169 = vld [vmem:[#allocation10 + $0x178] sm:$0xff]
    %v2170 = vld [vmem:[#allocation10 + $0x180] sm:$0xff]
    %v2171 = vld [vmem:[#allocation10 + $0x188] sm:$0xff]
    %v2172 = vld [vmem:[#allocation10 + $0x190] sm:$0xff]
    %v2173 = vld [vmem:[#allocation10 + $0x198] sm:$0xff]
    %v2174 = vld [vmem:[#allocation10 + $0x1a0] sm:$0xff]
    %v2175 = vld [vmem:[#allocation10 + $0x1a8] sm:$0xff]
    %v2176 = vld [vmem:[#allocation10 + $0x1b0] sm:$0xff]
    %v2177 = vld [vmem:[#allocation10 + $0x1b8] sm:$0xff]
    %v2178 = vld [vmem:[#allocation10 + $0x1c0] sm:$0xff]
    %v2179 = vld [vmem:[#allocation10 + $0x1c8] sm:$0xff]
    %v2180 = vld [vmem:[#allocation10 + $0x1d0] sm:$0xff]
    %v2181 = vld [vmem:[#allocation10 + $0x1d8] sm:$0xff]
    %v2182 = vld [vmem:[#allocation10 + $0x1e0] sm:$0xff]
    %v2183 = vld [vmem:[#allocation10 + $0x1e8] sm:$0xff]
    %v2184 = vld [vmem:[#allocation10 + $0x1f0] sm:$0xff]
    %v2185 = vld [vmem:[#allocation10 + $0x1f8] sm:$0xff]
    %v2186 = vld [vmem:[#allocation11] sm:$0x3]
    %v2188 = vlaneseq
    %v2189 = vshrl.u32 %v2188, 7
    %v2190 = vsub.s32 0, %v2189
    %v2191 = vrot.slane %v2186, %v2190
    %v2192 = vlaneseq
    %v2193 = vshrl.u32 %v2192, 7
    %v2194 = vsub.s32 1, %v2193
    %v2195 = vrot.slane %v2186, %v2194
    %v2262 = vunpack.c.l.b16 %v2122
    %v2263 = vunpack.c.h.b16 %v2122
    %v2264 = vunpack.c.l.b16 %v2123
    %v2265 = vunpack.c.h.b16 %v2123
    %v2266 = vunpack.c.l.b16 %v2124
    %v2267 = vunpack.c.h.b16 %v2124
    %v2268 = vunpack.c.l.b16 %v2125
    %v2269 = vunpack.c.h.b16 %v2125
    %v2270 = vunpack.c.l.b16 %v2126
    %v2271 = vunpack.c.h.b16 %v2126
    %v2272 = vunpack.c.l.b16 %v2127
    %v2273 = vunpack.c.h.b16 %v2127
    %v2274 = vunpack.c.l.b16 %v2128
    %v2275 = vunpack.c.h.b16 %v2128
    %v2276 = vunpack.c.l.b16 %v2129
    %v2277 = vunpack.c.h.b16 %v2129
    %v2278 = vunpack.c.l.b16 %v2130
    %v2279 = vunpack.c.h.b16 %v2130
    %v2280 = vunpack.c.l.b16 %v2131
    %v2281 = vunpack.c.h.b16 %v2131
    %v2282 = vunpack.c.l.b16 %v2132
    %v2283 = vunpack.c.h.b16 %v2132
    %v2284 = vunpack.c.l.b16 %v2133
    %v2285 = vunpack.c.h.b16 %v2133
    %v2286 = vunpack.c.l.b16 %v2134
    %v2287 = vunpack.c.h.b16 %v2134
    %v2288 = vunpack.c.l.b16 %v2135
    %v2289 = vunpack.c.h.b16 %v2135
    %v2290 = vunpack.c.l.b16 %v2136
    %v2291 = vunpack.c.h.b16 %v2136
    %v2292 = vunpack.c.l.b16 %v2137
    %v2293 = vunpack.c.h.b16 %v2137
    %v2294 = vunpack.c.l.b16 %v2138
    %v2295 = vunpack.c.h.b16 %v2138
    %v2296 = vunpack.c.l.b16 %v2139
    %v2297 = vunpack.c.h.b16 %v2139
    %v2298 = vunpack.c.l.b16 %v2140
    %v2299 = vunpack.c.h.b16 %v2140
    %v2300 = vunpack.c.l.b16 %v2141
    %v2301 = vunpack.c.h.b16 %v2141
    %v2302 = vunpack.c.l.b16 %v2142
    %v2303 = vunpack.c.h.b16 %v2142
    %v2304 = vunpack.c.l.b16 %v2143
    %v2305 = vunpack.c.h.b16 %v2143
    %v2306 = vunpack.c.l.b16 %v2144
    %v2307 = vunpack.c.h.b16 %v2144
    %v2308 = vunpack.c.l.b16 %v2145
    %v2309 = vunpack.c.h.b16 %v2145
    %v2310 = vunpack.c.l.b16 %v2146
    %v2311 = vunpack.c.h.b16 %v2146
    %v2312 = vunpack.c.l.b16 %v2147
    %v2313 = vunpack.c.h.b16 %v2147
    %v2314 = vunpack.c.l.b16 %v2148
    %v2315 = vunpack.c.h.b16 %v2148
    %v2316 = vunpack.c.l.b16 %v2149
    %v2317 = vunpack.c.h.b16 %v2149
    %v2318 = vunpack.c.l.b16 %v2150
    %v2319 = vunpack.c.h.b16 %v2150
    %v2320 = vunpack.c.l.b16 %v2151
    %v2321 = vunpack.c.h.b16 %v2151
    %v2322 = vunpack.c.l.b16 %v2152
    %v2323 = vunpack.c.h.b16 %v2152
    %v2324 = vunpack.c.l.b16 %v2153
    %v2325 = vunpack.c.h.b16 %v2153
    %v2326 = vunpack.c.l.b16 %v2154
    %v2327 = vunpack.c.h.b16 %v2154
    %v2328 = vunpack.c.l.b16 %v2155
    %v2329 = vunpack.c.h.b16 %v2155
    %v2330 = vunpack.c.l.b16 %v2156
    %v2331 = vunpack.c.h.b16 %v2156
    %v2332 = vunpack.c.l.b16 %v2157
    %v2333 = vunpack.c.h.b16 %v2157
    %v2334 = vunpack.c.l.b16 %v2158
    %v2335 = vunpack.c.h.b16 %v2158
    %v2336 = vunpack.c.l.b16 %v2159
    %v2337 = vunpack.c.h.b16 %v2159
    %v2338 = vunpack.c.l.b16 %v2160
    %v2339 = vunpack.c.h.b16 %v2160
    %v2340 = vunpack.c.l.b16 %v2161
    %v2341 = vunpack.c.h.b16 %v2161
    %v2342 = vunpack.c.l.b16 %v2162
    %v2343 = vunpack.c.h.b16 %v2162
    %v2344 = vunpack.c.l.b16 %v2163
    %v2345 = vunpack.c.h.b16 %v2163
    %v2346 = vunpack.c.l.b16 %v2164
    %v2347 = vunpack.c.h.b16 %v2164
    %v2348 = vunpack.c.l.b16 %v2165
    %v2349 = vunpack.c.h.b16 %v2165
    %v2350 = vunpack.c.l.b16 %v2166
    %v2351 = vunpack.c.h.b16 %v2166
    %v2352 = vunpack.c.l.b16 %v2167
    %v2353 = vunpack.c.h.b16 %v2167
    %v2354 = vunpack.c.l.b16 %v2168
    %v2355 = vunpack.c.h.b16 %v2168
    %v2356 = vunpack.c.l.b16 %v2169
    %v2357 = vunpack.c.h.b16 %v2169
    %v2358 = vunpack.c.l.b16 %v2170
    %v2359 = vunpack.c.h.b16 %v2170
    %v2360 = vunpack.c.l.b16 %v2171
    %v2361 = vunpack.c.h.b16 %v2171
    %v2362 = vunpack.c.l.b16 %v2172
    %v2363 = vunpack.c.h.b16 %v2172
    %v2364 = vunpack.c.l.b16 %v2173
    %v2365 = vunpack.c.h.b16 %v2173
    %v2366 = vunpack.c.l.b16 %v2174
    %v2367 = vunpack.c.h.b16 %v2174
    %v2368 = vunpack.c.l.b16 %v2175
    %v2369 = vunpack.c.h.b16 %v2175
    %v2370 = vunpack.c.l.b16 %v2176
    %v2371 = vunpack.c.h.b16 %v2176
    %v2372 = vunpack.c.l.b16 %v2177
    %v2373 = vunpack.c.h.b16 %v2177
    %v2374 = vunpack.c.l.b16 %v2178
    %v2375 = vunpack.c.h.b16 %v2178
    %v2376 = vunpack.c.l.b16 %v2179
    %v2377 = vunpack.c.h.b16 %v2179
    %v2378 = vunpack.c.l.b16 %v2180
    %v2379 = vunpack.c.h.b16 %v2180
    %v2380 = vunpack.c.l.b16 %v2181
    %v2381 = vunpack.c.h.b16 %v2181
    %v2382 = vunpack.c.l.b16 %v2182
    %v2383 = vunpack.c.h.b16 %v2182
    %v2384 = vunpack.c.l.b16 %v2183
    %v2385 = vunpack.c.h.b16 %v2183
    %v2386 = vunpack.c.l.b16 %v2184
    %v2387 = vunpack.c.h.b16 %v2184
    %v2388 = vunpack.c.l.b16 %v2185
    %v2389 = vunpack.c.h.b16 %v2185
    %v2390 = vpack.c.b16 %v2264, %v2262
    %v2391 = vpack.c.b16 %v2265, %v2263
    %v2392 = vpack.c.b16 %v2268, %v2266
    %v2393 = vpack.c.b16 %v2269, %v2267
    %v2394 = vpack.c.b16 %v2272, %v2270
    %v2395 = vpack.c.b16 %v2273, %v2271
    %v2396 = vpack.c.b16 %v2276, %v2274
    %v2397 = vpack.c.b16 %v2277, %v2275
    %v2398 = vpack.c.b16 %v2280, %v2278
    %v2399 = vpack.c.b16 %v2281, %v2279
    %v2400 = vpack.c.b16 %v2284, %v2282
    %v2401 = vpack.c.b16 %v2285, %v2283
    %v2402 = vpack.c.b16 %v2288, %v2286
    %v2403 = vpack.c.b16 %v2289, %v2287
    %v2404 = vpack.c.b16 %v2292, %v2290
    %v2405 = vpack.c.b16 %v2293, %v2291
    %v2406 = vpack.c.b16 %v2296, %v2294
    %v2407 = vpack.c.b16 %v2297, %v2295
    %v2408 = vpack.c.b16 %v2300, %v2298
    %v2409 = vpack.c.b16 %v2301, %v2299
    %v2410 = vpack.c.b16 %v2304, %v2302
    %v2411 = vpack.c.b16 %v2305, %v2303
    %v2412 = vpack.c.b16 %v2308, %v2306
    %v2413 = vpack.c.b16 %v2309, %v2307
    %v2414 = vpack.c.b16 %v2312, %v2310
    %v2415 = vpack.c.b16 %v2313, %v2311
    %v2416 = vpack.c.b16 %v2316, %v2314
    %v2417 = vpack.c.b16 %v2317, %v2315
    %v2418 = vpack.c.b16 %v2320, %v2318
    %v2419 = vpack.c.b16 %v2321, %v2319
    %v2420 = vpack.c.b16 %v2324, %v2322
    %v2421 = vpack.c.b16 %v2325, %v2323
    %v2422 = vpack.c.b16 %v2328, %v2326
    %v2423 = vpack.c.b16 %v2329, %v2327
    %v2424 = vpack.c.b16 %v2332, %v2330
    %v2425 = vpack.c.b16 %v2333, %v2331
    %v2426 = vpack.c.b16 %v2336, %v2334
    %v2427 = vpack.c.b16 %v2337, %v2335
    %v2428 = vpack.c.b16 %v2340, %v2338
    %v2429 = vpack.c.b16 %v2341, %v2339
    %v2430 = vpack.c.b16 %v2344, %v2342
    %v2431 = vpack.c.b16 %v2345, %v2343
    %v2432 = vpack.c.b16 %v2348, %v2346
    %v2433 = vpack.c.b16 %v2349, %v2347
    %v2434 = vpack.c.b16 %v2352, %v2350
    %v2435 = vpack.c.b16 %v2353, %v2351
    %v2436 = vpack.c.b16 %v2356, %v2354
    %v2437 = vpack.c.b16 %v2357, %v2355
    %v2438 = vpack.c.b16 %v2360, %v2358
    %v2439 = vpack.c.b16 %v2361, %v2359
    %v2440 = vpack.c.b16 %v2364, %v2362
    %v2441 = vpack.c.b16 %v2365, %v2363
    %v2442 = vpack.c.b16 %v2368, %v2366
    %v2443 = vpack.c.b16 %v2369, %v2367
    %v2444 = vpack.c.b16 %v2372, %v2370
    %v2445 = vpack.c.b16 %v2373, %v2371
    %v2446 = vpack.c.b16 %v2376, %v2374
    %v2447 = vpack.c.b16 %v2377, %v2375
    %v2448 = vpack.c.b16 %v2380, %v2378
    %v2449 = vpack.c.b16 %v2381, %v2379
    %v2450 = vpack.c.b16 %v2384, %v2382
    %v2451 = vpack.c.b16 %v2385, %v2383
    %v2452 = vpack.c.b16 %v2388, %v2386
    %v2453 = vpack.c.b16 %v2389, %v2387
    %2518 = vmatprep.subr.bf16.mxu0 %v2391
    %2519 = vmatpush1.bf16.msra.mxu0 %v2390
    %2520 = vmatprep.subr.bf16.mxu0 %v2393
    %2521 = vmatpush1.bf16.msra.mxu0 %v2392
    %2522 = vmatprep.subr.bf16.mxu0 %v2395
    %2523 = vmatpush1.bf16.msra.mxu0 %v2394
    %2524 = vmatprep.subr.bf16.mxu0 %v2397
    %2525 = vmatpush1.bf16.msra.mxu0 %v2396
    %2526 = vmatprep.subr.bf16.mxu0 %v2399
    %2527 = vmatpush1.bf16.msra.mxu0 %v2398
    %2528 = vmatprep.subr.bf16.mxu0 %v2401
    %2529 = vmatpush1.bf16.msra.mxu0 %v2400
    %2530 = vmatprep.subr.bf16.mxu0 %v2403
    %2531 = vmatpush1.bf16.msra.mxu0 %v2402
    %2532 = vmatprep.subr.bf16.mxu0 %v2405
    %2533 = vmatpush1.bf16.msra.mxu0 %v2404
    %2534 = vmatprep.subr.bf16.mxu0 %v2407
    %2535 = vmatpush1.bf16.msra.mxu0 %v2406
    %2536 = vmatprep.subr.bf16.mxu0 %v2409
    %2537 = vmatpush1.bf16.msra.mxu0 %v2408
    %2538 = vmatprep.subr.bf16.mxu0 %v2411
    %2539 = vmatpush1.bf16.msra.mxu0 %v2410
    %2540 = vmatprep.subr.bf16.mxu0 %v2413
    %2541 = vmatpush1.bf16.msra.mxu0 %v2412
    %2542 = vmatprep.subr.bf16.mxu0 %v2415
    %2543 = vmatpush1.bf16.msra.mxu0 %v2414
    %2544 = vmatprep.subr.bf16.mxu0 %v2417
    %2545 = vmatpush1.bf16.msra.mxu0 %v2416
    %2546 = vmatprep.subr.bf16.mxu0 %v2419
    %2547 = vmatpush1.bf16.msra.mxu0 %v2418
    %2548 = vmatprep.subr.bf16.mxu0 %v2421
    %2549 = vmatpush1.bf16.msra.mxu0 %v2420
    %2550 = vmatprep.mubr.bf16.mxu0 %v1761
    %2551 = vmatmul.mubr.bf16.gmra.mrb[0].mxu0 %v1760
    %v2552 = vpop.f32.mrb[0].mxu0
    %v2553 = vadd.f32 %v2191, %v2552
    %v2554 = vpop.f32.mrb[0].mxu0
    %v2555 = vadd.f32 %v2195, %v2554
    %v2556 = vpop.f32.mrb[0].mxu0
    %v2557 = vadd.f32 %v2191, %v2556
    %v2558 = vpop.f32.mrb[0].mxu0
    %v2559 = vadd.f32 %v2195, %v2558
    %2560 = vmatprep.mubr.bf16.mxu0 %v1765
    %2561 = vmatmul.mubr.bf16.gmra.mrb[0].mxu0 %v1764
    %v2562 = vpop.f32.mrb[0].mxu0
    %v2563 = vadd.f32 %v2191, %v2562
    %v2564 = vpop.f32.mrb[0].mxu0
    %v2565 = vadd.f32 %v2195, %v2564
    %v2566 = vpop.f32.mrb[0].mxu0
    %v2567 = vadd.f32 %v2191, %v2566
    %v2568 = vpop.f32.mrb[0].mxu0
    %v2569 = vadd.f32 %v2195, %v2568
    %2570 = vdwg.mxu0
    %2571 = vmatprep.subr.bf16.mxu0 %v2423
    %2572 = vmatpush1.bf16.msra.mxu0 %v2422
    %2573 = vmatprep.subr.bf16.mxu0 %v2425
    %2574 = vmatpush1.bf16.msra.mxu0 %v2424
    %2575 = vmatprep.subr.bf16.mxu0 %v2427
    %2576 = vmatpush1.bf16.msra.mxu0 %v2426
    %2577 = vmatprep.subr.bf16.mxu0 %v2429
    %2578 = vmatpush1.bf16.msra.mxu0 %v2428
    %2579 = vmatprep.subr.bf16.mxu0 %v2431
    %2580 = vmatpush1.bf16.msra.mxu0 %v2430
    %2581 = vmatprep.subr.bf16.mxu0 %v2433
    %2582 = vmatpush1.bf16.msra.mxu0 %v2432
    %2583 = vmatprep.subr.bf16.mxu0 %v2435
    %2584 = vmatpush1.bf16.msra.mxu0 %v2434
    %2585 = vmatprep.subr.bf16.mxu0 %v2437
    %2586 = vmatpush1.bf16.msra.mxu0 %v2436
    %2587 = vmatprep.subr.bf16.mxu0 %v2439
    %2588 = vmatpush1.bf16.msra.mxu0 %v2438
    %2589 = vmatprep.subr.bf16.mxu0 %v2441
    %2590 = vmatpush1.bf16.msra.mxu0 %v2440
    %2591 = vmatprep.subr.bf16.mxu0 %v2443
    %2592 = vmatpush1.bf16.msra.mxu0 %v2442
    %2593 = vmatprep.subr.bf16.mxu0 %v2445
    %2594 = vmatpush1.bf16.msra.mxu0 %v2444
    %2595 = vmatprep.subr.bf16.mxu0 %v2447
    %2596 = vmatpush1.bf16.msra.mxu0 %v2446
    %2597 = vmatprep.subr.bf16.mxu0 %v2449
    %2598 = vmatpush1.bf16.msra.mxu0 %v2448
    %2599 = vmatprep.subr.bf16.mxu0 %v2451
    %2600 = vmatpush1.bf16.msra.mxu0 %v2450
    %2601 = vmatprep.subr.bf16.mxu0 %v2453
    %2602 = vmatpush1.bf16.msra.mxu0 %v2452
    %2603 = vmatprep.mubr.bf16.mxu0 %v1763
    %2604 = vmatmul.mubr.bf16.gmra.mrb[0].mxu0 %v1762
    %v2605 = vpop.f32.mrb[0].mxu0
    %v2606 = vadd.f32 %v2553, %v2605
    %v2607 = vpop.f32.mrb[0].mxu0
    %v2608 = vadd.f32 %v2555, %v2607
    %v2609 = vpop.f32.mrb[0].mxu0
    %v2610 = vadd.f32 %v2557, %v2609
    %v2611 = vpop.f32.mrb[0].mxu0
    %v2612 = vadd.f32 %v2559, %v2611
    %2613 = vmatprep.mubr.bf16.mxu0 %v1767
    %2614 = vmatmul.mubr.bf16.gmra.mrb[0].mxu0 %v1766
    %v2615 = vpop.f32.mrb[0].mxu0
    %v2616 = vadd.f32 %v2563, %v2615
    %v2617 = vpop.f32.mrb[0].mxu0
    %v2618 = vadd.f32 %v2565, %v2617
    %v2619 = vpop.f32.mrb[0].mxu0
    %v2620 = vadd.f32 %v2567, %v2619
    %v2621 = vpop.f32.mrb[0].mxu0
    %v2622 = vadd.f32 %v2569, %v2621
    %2623 = vdwg.mxu0
    %v2624 = vadd.f32 %v2606, %v2608
    %2625 = vadd.xlane.f32.xlu0 %v2624
    %v2626 = vpop.xlane.xlu0 %2625
    %v2627 = vadd.f32 %v2610, %v2612
    %2628 = vadd.xlane.f32.xlu0 %v2627
    %v2629 = vpop.xlane.xlu0 %2628
    %v2630 = vadd.f32 %v2616, %v2618
    %2631 = vadd.xlane.f32.xlu0 %v2630
    %v2632 = vpop.xlane.xlu0 %2631
    %v2633 = vadd.f32 %v2620, %v2622
    %2634 = vadd.xlane.f32.xlu0 %v2633
    %v2635 = vpop.xlane.xlu0 %2634
    %v2636 = vrcp.pop 256.0
    %v2637 = vmul.f32 %v2626, %v2636
    %v2638 = vmul.f32 %v2629, %v2636
    %v2639 = vmul.f32 %v2632, %v2636
    %v2640 = vmul.f32 %v2635, %v2636
    %v2641 = vsub.f32 %v2606, %v2637
    %v2642 = vsub.f32 %v2608, %v2637
    %v2643 = vsub.f32 %v2610, %v2638
    %v2644 = vsub.f32 %v2612, %v2638
    %v2645 = vsub.f32 %v2616, %v2639
    %v2646 = vsub.f32 %v2618, %v2639
    %v2647 = vsub.f32 %v2620, %v2640
    %v2648 = vsub.f32 %v2622, %v2640
    %v2649 = vmul.f32 %v2641, %v2641
    %v2650 = vmul.f32 %v2642, %v2642
    %v2651 = vmul.f32 %v2643, %v2643
    %v2652 = vmul.f32 %v2644, %v2644
    %v2653 = vmul.f32 %v2645, %v2645
    %v2654 = vmul.f32 %v2646, %v2646
    %v2655 = vmul.f32 %v2647, %v2647
    %v2656 = vmul.f32 %v2648, %v2648
    %v2657 = vadd.f32 %v2649, %v2650
    %2658 = vadd.xlane.f32.xlu0 %v2657
    %v2659 = vpop.xlane.xlu0 %2658
    %v2660 = vadd.f32 %v2651, %v2652
    %2661 = vadd.xlane.f32.xlu0 %v2660
    %v2662 = vpop.xlane.xlu0 %2661
    %v2663 = vadd.f32 %v2653, %v2654
    %2664 = vadd.xlane.f32.xlu0 %v2663
    %v2665 = vpop.xlane.xlu0 %2664
    %v2666 = vadd.f32 %v2655, %v2656
    %2667 = vadd.xlane.f32.xlu0 %v2666
    %v2668 = vpop.xlane.xlu0 %2667
    %v2669 = vmul.f32 %v2659, %v2636
    %v2670 = vmul.f32 %v2662, %v2636
    %v2671 = vmul.f32 %v2665, %v2636
    %v2672 = vmul.f32 %v2668, %v2636
    %v2673 = vadd.f32 %v2669, 1e-05
    %v2674 = vadd.f32 %v2670, 1e-05
    %v2675 = vadd.f32 %v2671, 1e-05
    %v2676 = vadd.f32 %v2672, 1e-05
    %v2677 = vrsqrt.pop %v2673
    %v2678 = vrsqrt.pop %v2674
    %v2679 = vrsqrt.pop %v2675
    %v2680 = vrsqrt.pop %v2676
    %v2681 = vmul.f32 %v2641, %v2677
    %v2682 = vmul.f32 %v2642, %v2677
    %v2683 = vmul.f32 %v2643, %v2678
    %v2684 = vmul.f32 %v2644, %v2678
    %v2685 = vmul.f32 %v2645, %v2679
    %v2686 = vmul.f32 %v2646, %v2679
    %v2687 = vmul.f32 %v2647, %v2680
    %v2688 = vmul.f32 %v2648, %v2680
    %v2689 = vld [vmem:[#allocation13] sm:$0x3]
    %v2691 = vlaneseq
    %v2692 = vshrl.u32 %v2691, 7
    %v2693 = vsub.s32 0, %v2692
    %v2694 = vrot.slane %v2689, %v2693
    %v2695 = vlaneseq
    %v2696 = vshrl.u32 %v2695, 7
    %v2697 = vsub.s32 1, %v2696
    %v2698 = vrot.slane %v2689, %v2697
    %v2701 = vmul.f32 %v2681, %v2694
    %v2702 = vmul.f32 %v2682, %v2698
    %v2703 = vmul.f32 %v2683, %v2694
    %v2704 = vmul.f32 %v2684, %v2698
    %v2705 = vmul.f32 %v2685, %v2694
    %v2706 = vmul.f32 %v2686, %v2698
    %v2707 = vmul.f32 %v2687, %v2694
    %v2708 = vmul.f32 %v2688, %v2698
    %v2709 = vld [vmem:[#allocation14] sm:$0x3]
    %v2711 = vlaneseq
    %v2712 = vshrl.u32 %v2711, 7
    %v2713 = vsub.s32 0, %v2712
    %v2714 = vrot.slane %v2709, %v2713
    %v2715 = vlaneseq
    %v2716 = vshrl.u32 %v2715, 7
    %v2717 = vsub.s32 1, %v2716
    %v2718 = vrot.slane %v2709, %v2717
    %v2721 = vadd.f32 %v2701, %v2714
    %v2722 = vadd.f32 %v2702, %v2718
    %v2723 = vadd.f32 %v2703, %v2714
    %v2724 = vadd.f32 %v2704, %v2718
    %v2725 = vadd.f32 %v2705, %v2714
    %v2726 = vadd.f32 %v2706, %v2718
    %v2727 = vadd.f32 %v2707, %v2714
    %v2728 = vadd.f32 %v2708, %v2718
    %v2729 = vmul.f32 %v2721, 0.5
    %v2730 = vmul.f32 %v2722, 0.5
    %v2731 = vmul.f32 %v2723, 0.5
    %v2732 = vmul.f32 %v2724, 0.5
    %v2733 = vmul.f32 %v2725, 0.5
    %v2734 = vmul.f32 %v2726, 0.5
    %v2735 = vmul.f32 %v2727, 0.5
    %v2736 = vmul.f32 %v2728, 0.5
    %v2737 = vmul.f32 %v2721, 0.70710677
    %v2738 = vmul.f32 %v2722, 0.70710677
    %v2739 = vmul.f32 %v2723, 0.70710677
    %v2740 = vmul.f32 %v2724, 0.70710677
    %v2741 = vmul.f32 %v2725, 0.70710677
    %v2742 = vmul.f32 %v2726, 0.70710677
    %v2743 = vmul.f32 %v2727, 0.70710677
    %v2744 = vmul.f32 %v2728, 0.70710677
    %v2745 = verf.f32.pop %v2737
    %v2746 = verf.f32.pop %v2738
    %v2747 = verf.f32.pop %v2739
    %v2748 = verf.f32.pop %v2740
    %v2749 = verf.f32.pop %v2741
    %v2750 = verf.f32.pop %v2742
    %v2751 = verf.f32.pop %v2743
    %v2752 = verf.f32.pop %v2744
    %v2753 = vadd.f32 %v2745, 1.0
    %v2754 = vadd.f32 %v2746, 1.0
    %v2755 = vadd.f32 %v2747, 1.0
    %v2756 = vadd.f32 %v2748, 1.0
    %v2757 = vadd.f32 %v2749, 1.0
    %v2758 = vadd.f32 %v2750, 1.0
    %v2759 = vadd.f32 %v2751, 1.0
    %v2760 = vadd.f32 %v2752, 1.0
    %v2761 = vmul.f32 %v2729, %v2753
    %v2762 = vmul.f32 %v2730, %v2754
    %v2763 = vmul.f32 %v2731, %v2755
    %v2764 = vmul.f32 %v2732, %v2756
    %v2765 = vmul.f32 %v2733, %v2757
    %v2766 = vmul.f32 %v2734, %v2758
    %v2767 = vmul.f32 %v2735, %v2759
    %v2768 = vmul.f32 %v2736, %v2760
    %v2769 = vpack.c.bf16 %v2763, %v2761
    %v2770 = vpack.c.bf16 %v2764, %v2762
    %v2771 = vpack.c.bf16 %v2767, %v2765
    %v2772 = vpack.c.bf16 %v2768, %v2766
    %v2773 = vld [vmem:[#allocation16] sm:$0xf]
    %v2774 = vld [vmem:[#allocation16 + $0x4] sm:$0xf]
    %v2775 = vld [vmem:[#allocation16 + $0x8] sm:$0xf]
    %v2776 = vld [vmem:[#allocation16 + $0xc] sm:$0xf]
    %v2777 = vld [vmem:[#allocation16 + $0x10] sm:$0xf]
    %v2778 = vld [vmem:[#allocation16 + $0x14] sm:$0xf]
    %v2779 = vld [vmem:[#allocation16 + $0x18] sm:$0xf]
    %v2780 = vld [vmem:[#allocation16 + $0x1c] sm:$0xf]
    %v2781 = vld [vmem:[#allocation16 + $0x20] sm:$0xf]
    %v2782 = vld [vmem:[#allocation16 + $0x24] sm:$0xf]
    %v2783 = vld [vmem:[#allocation16 + $0x28] sm:$0xf]
    %v2784 = vld [vmem:[#allocation16 + $0x2c] sm:$0xf]
    %v2785 = vld [vmem:[#allocation16 + $0x30] sm:$0xf]
    %v2786 = vld [vmem:[#allocation16 + $0x34] sm:$0xf]
    %v2787 = vld [vmem:[#allocation16 + $0x38] sm:$0xf]
    %v2788 = vld [vmem:[#allocation16 + $0x3c] sm:$0xf]
    %v2789 = vld [vmem:[#allocation16 + $0x40] sm:$0xf]
    %v2790 = vld [vmem:[#allocation16 + $0x44] sm:$0xf]
    %v2791 = vld [vmem:[#allocation16 + $0x48] sm:$0xf]
    %v2792 = vld [vmem:[#allocation16 + $0x4c] sm:$0xf]
    %v2793 = vld [vmem:[#allocation16 + $0x50] sm:$0xf]
    %v2794 = vld [vmem:[#allocation16 + $0x54] sm:$0xf]
    %v2795 = vld [vmem:[#allocation16 + $0x58] sm:$0xf]
    %v2796 = vld [vmem:[#allocation16 + $0x5c] sm:$0xf]
    %v2797 = vld [vmem:[#allocation16 + $0x60] sm:$0xf]
    %v2798 = vld [vmem:[#allocation16 + $0x64] sm:$0xf]
    %v2799 = vld [vmem:[#allocation16 + $0x68] sm:$0xf]
    %v2800 = vld [vmem:[#allocation16 + $0x6c] sm:$0xf]
    %v2801 = vld [vmem:[#allocation16 + $0x70] sm:$0xf]
    %v2802 = vld [vmem:[#allocation16 + $0x74] sm:$0xf]
    %v2803 = vld [vmem:[#allocation16 + $0x78] sm:$0xf]
    %v2804 = vld [vmem:[#allocation16 + $0x7c] sm:$0xf]
    %v2805 = vld [vmem:[#allocation17] sm:$0x1]
    %v2807 = vlaneseq
    %v2808 = vshrl.u32 %v2807, 7
    %v2809 = vsub.s32 0, %v2808
    %v2810 = vrot.slane %v2805, %v2809
    %v2844 = vunpack.c.l.b16 %v2773
    %v2845 = vunpack.c.l.b16 %v2774
    %v2846 = vunpack.c.l.b16 %v2775
    %v2847 = vunpack.c.l.b16 %v2776
    %v2848 = vunpack.c.l.b16 %v2777
    %v2849 = vunpack.c.l.b16 %v2778
    %v2850 = vunpack.c.l.b16 %v2779
    %v2851 = vunpack.c.l.b16 %v2780
    %v2852 = vunpack.c.l.b16 %v2781
    %v2853 = vunpack.c.l.b16 %v2782
    %v2854 = vunpack.c.l.b16 %v2783
    %v2855 = vunpack.c.l.b16 %v2784
    %v2856 = vunpack.c.l.b16 %v2785
    %v2857 = vunpack.c.l.b16 %v2786
    %v2858 = vunpack.c.l.b16 %v2787
    %v2859 = vunpack.c.l.b16 %v2788
    %v2860 = vunpack.c.l.b16 %v2789
    %v2861 = vunpack.c.l.b16 %v2790
    %v2862 = vunpack.c.l.b16 %v2791
    %v2863 = vunpack.c.l.b16 %v2792
    %v2864 = vunpack.c.l.b16 %v2793
    %v2865 = vunpack.c.l.b16 %v2794
    %v2866 = vunpack.c.l.b16 %v2795
    %v2867 = vunpack.c.l.b16 %v2796
    %v2868 = vunpack.c.l.b16 %v2797
    %v2869 = vunpack.c.l.b16 %v2798
    %v2870 = vunpack.c.l.b16 %v2799
    %v2871 = vunpack.c.l.b16 %v2800
    %v2872 = vunpack.c.l.b16 %v2801
    %v2873 = vunpack.c.l.b16 %v2802
    %v2874 = vunpack.c.l.b16 %v2803
    %v2875 = vunpack.c.l.b16 %v2804
    %v2876 = vpack.c.b16 %v2845, %v2844
    %v2877 = vpack.c.b16 %v2847, %v2846
    %v2878 = vpack.c.b16 %v2849, %v2848
    %v2879 = vpack.c.b16 %v2851, %v2850
    %v2880 = vpack.c.b16 %v2853, %v2852
    %v2881 = vpack.c.b16 %v2855, %v2854
    %v2882 = vpack.c.b16 %v2857, %v2856
    %v2883 = vpack.c.b16 %v2859, %v2858
    %v2884 = vpack.c.b16 %v2861, %v2860
    %v2885 = vpack.c.b16 %v2863, %v2862
    %v2886 = vpack.c.b16 %v2865, %v2864
    %v2887 = vpack.c.b16 %v2867, %v2866
    %v2888 = vpack.c.b16 %v2869, %v2868
    %v2889 = vpack.c.b16 %v2871, %v2870
    %v2890 = vpack.c.b16 %v2873, %v2872
    %v2891 = vpack.c.b16 %v2875, %v2874
    %2908 = vmatprep.subr.bf16.mxu0 0
    %2909 = vmatpush1.bf16.msra.mxu0 %v2876
    %2910 = vmatprep.subr.bf16.mxu0 0
    %2911 = vmatpush1.bf16.msra.mxu0 %v2877
    %2912 = vmatprep.subr.bf16.mxu0 0
    %2913 = vmatpush1.bf16.msra.mxu0 %v2878
    %2914 = vmatprep.subr.bf16.mxu0 0
    %2915 = vmatpush1.bf16.msra.mxu0 %v2879
    %2916 = vmatprep.subr.bf16.mxu0 0
    %2917 = vmatpush1.bf16.msra.mxu0 %v2880
    %2918 = vmatprep.subr.bf16.mxu0 0
    %2919 = vmatpush1.bf16.msra.mxu0 %v2881
    %2920 = vmatprep.subr.bf16.mxu0 0
    %2921 = vmatpush1.bf16.msra.mxu0 %v2882
    %2922 = vmatprep.subr.bf16.mxu0 0
    %2923 = vmatpush1.bf16.msra.mxu0 %v2883
    %2924 = vmatprep.subr.bf16.mxu0 0
    %2925 = vmatpush1.bf16.msra.mxu0 %v2884
    %2926 = vmatprep.subr.bf16.mxu0 0
    %2927 = vmatpush1.bf16.msra.mxu0 %v2885
    %2928 = vmatprep.subr.bf16.mxu0 0
    %2929 = vmatpush1.bf16.msra.mxu0 %v2886
    %2930 = vmatprep.subr.bf16.mxu0 0
    %2931 = vmatpush1.bf16.msra.mxu0 %v2887
    %2932 = vmatprep.subr.bf16.mxu0 0
    %2933 = vmatpush1.bf16.msra.mxu0 %v2888
    %2934 = vmatprep.subr.bf16.mxu0 0
    %2935 = vmatpush1.bf16.msra.mxu0 %v2889
    %2936 = vmatprep.subr.bf16.mxu0 0
    %2937 = vmatpush1.bf16.msra.mxu0 %v2890
    %2938 = vmatprep.subr.bf16.mxu0 0
    %2939 = vmatpush1.bf16.msra.mxu0 %v2891
    %2940 = vmatprep.mubr.bf16.mxu0 %v2770
    %2941 = vmatmul.mubr.bf16.gmra.mrb[0].mxu0 %v2769
    %v2942 = vpop.f32.mrb[0].mxu0
    %v2943 = vadd.f32 %v2810, %v2942
    %v2944 = vpop.f32.mrb[0].mxu0
    %v2945 = vpop.f32.mrb[0].mxu0
    %v2946 = vadd.f32 %v2810, %v2945
    %v2947 = vpop.f32.mrb[0].mxu0
    %2948 = vmatprep.mubr.bf16.mxu0 %v2772
    %2949 = vmatmul.mubr.bf16.gmra.mrb[0].mxu0 %v2771
    %v2950 = vpop.f32.mrb[0].mxu0
    %v2951 = vadd.f32 %v2810, %v2950
    %v2952 = vpop.f32.mrb[0].mxu0
    %v2953 = vpop.f32.mrb[0].mxu0
    %v2954 = vadd.f32 %v2810, %v2953
    %v2955 = vpop.f32.mrb[0].mxu0
    %2956 = vdwg.mxu0
    %v2957 = vadd.f32 %v2943, %v2108
    %v2958 = vadd.f32 %v2946, %v2111
    %v2959 = vadd.f32 %v2951, %v2116
    %v2960 = vadd.f32 %v2954, %v2119
    %v2961 = vmul.f32 %v2957, %v2957
    %v2962 = vmul.f32 %v2958, %v2958
    %v2963 = vmul.f32 %v2959, %v2959
    %v2964 = vmul.f32 %v2960, %v2960
    %vm2965 = vcmask 523264
    %v2966 = vsel %vm2965, %v2961, 0.0
    %2967 = vadd.xlane.f32.xlu0 %v2966
    %v2968 = vpop.xlane.xlu0 %2967
    %v2969 = vsel %vm2965, %v2962, 0.0
    %2970 = vadd.xlane.f32.xlu0 %v2969
    %v2971 = vpop.xlane.xlu0 %2970
    %v2972 = vsel %vm2965, %v2963, 0.0
    %2973 = vadd.xlane.f32.xlu0 %v2972
    %v2974 = vpop.xlane.xlu0 %2973
    %v2975 = vsel %vm2965, %v2964, 0.0
    %2976 = vadd.xlane.f32.xlu0 %v2975
    %v2977 = vpop.xlane.xlu0 %2976
    %v2978 = vmax.f32 %v2968, 1e-24
    %v2979 = vmax.f32 %v2971, 1e-24
    %v2980 = vmax.f32 %v2974, 1e-24
    %v2981 = vmax.f32 %v2977, 1e-24
    %v2982 = vrsqrt.pop %v2978
    %v2983 = vrsqrt.pop %v2979
    %v2984 = vrsqrt.pop %v2980
    %v2985 = vrsqrt.pop %v2981
    %v2986 = vmul.f32 %v2957, %v2982
    %v2987 = vmul.f32 %v2958, %v2983
    %v2988 = vmul.f32 %v2959, %v2984
    %v2989 = vmul.f32 %v2960, %v2985
    %v2990 = vld [vmem:[#allocation19] sm:$0xff]
    %v2991 = vld [vmem:[#allocation19 + $0x8] sm:$0xff]
    %v2992 = vld [vmem:[#allocation19 + $0x10] sm:$0xff]
    %v2993 = vld [vmem:[#allocation19 + $0x18] sm:$0xff]
    %v2994 = vld [vmem:[#allocation19 + $0x20] sm:$0xff]
    %v2995 = vld [vmem:[#allocation19 + $0x28] sm:$0xff]
    %v2996 = vld [vmem:[#allocation19 + $0x30] sm:$0xff]
    %v2997 = vld [vmem:[#allocation19 + $0x38] sm:$0xff]
    %v2998 = vld [vmem:[#allocation19 + $0x40] sm:$0xff]
    %v2999 = vld [vmem:[#allocation19 + $0x48] sm:$0xff]
    %v3000 = vld [vmem:[#allocation19 + $0x50] sm:$0xff]
    %v3001 = vld [vmem:[#allocation19 + $0x58] sm:$0xff]
    %v3002 = vld [vmem:[#allocation19 + $0x60] sm:$0xff]
    %v3003 = vld [vmem:[#allocation19 + $0x68] sm:$0xff]
    %v3004 = vld [vmem:[#allocation19 + $0x70] sm:$0xff]
    %v3005 = vld [vmem:[#allocation19 + $0x78] sm:$0xff]
    %v3007 = vsel %vm2965, %v2986, 0
    %v3010 = vsel %vm2965, %v2987, 0
    %v3013 = vsel %vm2965, %v2988, 0
    %v3016 = vsel %vm2965, %v2989, 0
    %3018 = vmatprep.subr.mxu0 %v2991
    %3019 = vmatpush1.msra.mxu0 %v2990
    %3020 = vmatprep.subr.mxu0 %v2993
    %3021 = vmatpush1.msra.mxu0 %v2992
    %3022 = vmatprep.subr.mxu0 %v2995
    %3023 = vmatpush1.msra.mxu0 %v2994
    %3024 = vmatprep.subr.mxu0 %v2997
    %3025 = vmatpush1.msra.mxu0 %v2996
    %3026 = vmatprep.subr.mxu0 %v2999
    %3027 = vmatpush1.msra.mxu0 %v2998
    %3028 = vmatprep.subr.mxu0 %v3001
    %3029 = vmatpush1.msra.mxu0 %v3000
    %3030 = vmatprep.subr.mxu0 %v3003
    %3031 = vmatpush1.msra.mxu0 %v3002
    %3032 = vmatprep.subr.mxu0 %v3005
    %3033 = vmatpush1.msra.mxu0 %v3004
    %3034 = vmatprep.subr.mxu0 0.0
    %3035 = vmatpush1.msra.mxu0 0.0
    %3036 = vmatprep.subr.mxu0 0.0
    %3037 = vmatpush1.msra.mxu0 0.0
    %3038 = vmatprep.subr.mxu0 0.0
    %3039 = vmatpush1.msra.mxu0 0.0
    %3040 = vmatprep.subr.mxu0 0.0
    %3041 = vmatpush1.msra.mxu0 0.0
    %3042 = vmatprep.subr.mxu0 0.0
    %3043 = vmatpush1.msra.mxu0 0.0
    %3044 = vmatprep.subr.mxu0 0.0
    %3045 = vmatpush1.msra.mxu0 0.0
    %3046 = vmatprep.subr.mxu0 0.0
    %3047 = vmatpush1.msra.mxu0 0.0
    %3048 = vmatprep.subr.mxu0 0.0
    %3049 = vmatpush1.msra.mxu0 0.0
    %3050 = vmatprep.subr.mxu0 0.0
    %3051 = vmatpush1.msra.mxu0 0.0
    %3052 = vmatprep.subr.mxu0 0.0
    %3053 = vmatpush1.msra.mxu0 0.0
    %3054 = vmatprep.subr.mxu0 0.0
    %3055 = vmatpush1.msra.mxu0 0.0
    %3056 = vmatprep.subr.mxu0 0.0
    %3057 = vmatpush1.msra.mxu0 0.0
    %3058 = vmatprep.subr.mxu0 0.0
    %3059 = vmatpush1.msra.mxu0 0.0
    %3060 = vmatprep.subr.mxu0 0.0
    %3061 = vmatpush1.msra.mxu0 0.0
    %3062 = vmatprep.subr.mxu0 0.0
    %3063 = vmatpush1.msra.mxu0 0.0
    %3064 = vmatprep.subr.mxu0 0.0
    %3065 = vmatpush1.msra.mxu0 0.0
    %3066 = vmatprep.subr.mxu0 0.0
    %3067 = vmatpush1.msra.mxu0 0.0
    %3068 = vmatprep.subr.mxu0 0.0
    %3069 = vmatpush1.msra.mxu0 0.0
    %3070 = vmatprep.subr.mxu0 0.0
    %3071 = vmatpush1.msra.mxu0 0.0
    %3072 = vmatprep.subr.mxu0 0.0
    %3073 = vmatpush1.msra.mxu0 0.0
    %3074 = vmatprep.subr.mxu0 0.0
    %3075 = vmatpush1.msra.mxu0 0.0
    %3076 = vmatprep.subr.mxu0 0.0
    %3077 = vmatpush1.msra.mxu0 0.0
    %3078 = vmatprep.subr.mxu0 0.0
    %3079 = vmatpush1.msra.mxu0 0.0
    %3080 = vmatprep.subr.mxu0 0.0
    %3081 = vmatpush1.msra.mxu0 0.0
    %3082 = vmatprep.mubr.f32.mxu0 0.0
    %3083 = vmatmul.mubr.f32.gmra.mrb[0].mxu0 %v3007
    %v3084 = vpop.f32.mrb[0].mxu0
    %v3085 = vadd.f32 0.0, %v3084
    %v3086 = vpop.f32.mrb[0].mxu0
    %v3087 = vadd.f32 0.0, %v3086
    %3088 = vmatprep.mubr.f32.mxu0 0.0
    %3089 = vmatmul.mubr.f32.gmra.mrb[0].mxu0 %v3010
    %v3090 = vpop.f32.mrb[0].mxu0
    %v3091 = vadd.f32 0.0, %v3090
    %v3092 = vpop.f32.mrb[0].mxu0
    %v3093 = vadd.f32 0.0, %v3092
    %3094 = vmatprep.mubr.f32.mxu0 0.0
    %3095 = vmatmul.mubr.f32.gmra.mrb[0].mxu0 %v3013
    %v3096 = vpop.f32.mrb[0].mxu0
    %v3097 = vadd.f32 0.0, %v3096
    %v3098 = vpop.f32.mrb[0].mxu0
    %v3099 = vadd.f32 0.0, %v3098
    %3100 = vmatprep.mubr.f32.mxu0 0.0
    %3101 = vmatmul.mubr.f32.gmra.mrb[0].mxu0 %v3016
    %v3102 = vpop.f32.mrb[0].mxu0
    %v3103 = vadd.f32 0.0, %v3102
    %v3104 = vpop.f32.mrb[0].mxu0
    %v3105 = vadd.f32 0.0, %v3104
    %3106 = vdwg.mxu0
    %v3107 = vmul.f32 %v3085, %v3085
    %v3108 = vmul.f32 %v3087, %v3087
    %v3109 = vmul.f32 %v3091, %v3091
    %v3110 = vmul.f32 %v3093, %v3093
    %v3111 = vmul.f32 %v3097, %v3097
    %v3112 = vmul.f32 %v3099, %v3099
    %v3113 = vmul.f32 %v3103, %v3103
    %v3114 = vmul.f32 %v3105, %v3105
    %v3115 = vsub.f32 1.0, %v3107
    %v3116 = vsub.f32 1.0, %v3108
    %v3117 = vsub.f32 1.0, %v3109
    %v3118 = vsub.f32 1.0, %v3110
    %v3119 = vsub.f32 1.0, %v3111
    %v3120 = vsub.f32 1.0, %v3112
    %v3121 = vsub.f32 1.0, %v3113
    %v3122 = vsub.f32 1.0, %v3114
    %v3123 = vmax.f32 %v3115, 0.0
    %v3124 = vmax.f32 %v3116, 0.0
    %v3125 = vmax.f32 %v3117, 0.0
    %v3126 = vmax.f32 %v3118, 0.0
    %v3127 = vmax.f32 %v3119, 0.0
    %v3128 = vmax.f32 %v3120, 0.0
    %v3129 = vmax.f32 %v3121, 0.0
    %v3130 = vmax.f32 %v3122, 0.0
    %v3131 = vrsqrt.pop %v3123
    %v3132 = vmul.f32 %v3123, %v3131
    %vm3133 = vcmp.eq.f32.partialorder %v3123, inf
    %v3134 = vsel %vm3133, %v3123, %v3132
    %vm3135 = vcmp.eq.f32.partialorder %v3123, 0.0
    %v3136 = vand.u32 %v3123, 2147483648
    %v3137 = vsel %vm3135, %v3136, %v3134
    %v3138 = vrsqrt.pop %v3124
    %v3139 = vmul.f32 %v3124, %v3138
    %vm3140 = vcmp.eq.f32.partialorder %v3124, inf
    %v3141 = vsel %vm3140, %v3124, %v3139
    %vm3142 = vcmp.eq.f32.partialorder %v3124, 0.0
    %v3143 = vand.u32 %v3124, 2147483648
    %v3144 = vsel %vm3142, %v3143, %v3141
    %v3145 = vrsqrt.pop %v3125
    %v3146 = vmul.f32 %v3125, %v3145
    %vm3147 = vcmp.eq.f32.partialorder %v3125, inf
    %v3148 = vsel %vm3147, %v3125, %v3146
    %vm3149 = vcmp.eq.f32.partialorder %v3125, 0.0
    %v3150 = vand.u32 %v3125, 2147483648
    %v3151 = vsel %vm3149, %v3150, %v3148
    %v3152 = vrsqrt.pop %v3126
    %v3153 = vmul.f32 %v3126, %v3152
    %vm3154 = vcmp.eq.f32.partialorder %v3126, inf
    %v3155 = vsel %vm3154, %v3126, %v3153
    %vm3156 = vcmp.eq.f32.partialorder %v3126, 0.0
    %v3157 = vand.u32 %v3126, 2147483648
    %v3158 = vsel %vm3156, %v3157, %v3155
    %v3159 = vrsqrt.pop %v3127
    %v3160 = vmul.f32 %v3127, %v3159
    %vm3161 = vcmp.eq.f32.partialorder %v3127, inf
    %v3162 = vsel %vm3161, %v3127, %v3160
    %vm3163 = vcmp.eq.f32.partialorder %v3127, 0.0
    %v3164 = vand.u32 %v3127, 2147483648
    %v3165 = vsel %vm3163, %v3164, %v3162
    %v3166 = vrsqrt.pop %v3128
    %v3167 = vmul.f32 %v3128, %v3166
    %vm3168 = vcmp.eq.f32.partialorder %v3128, inf
    %v3169 = vsel %vm3168, %v3128, %v3167
    %vm3170 = vcmp.eq.f32.partialorder %v3128, 0.0
    %v3171 = vand.u32 %v3128, 2147483648
    %v3172 = vsel %vm3170, %v3171, %v3169
    %v3173 = vrsqrt.pop %v3129
    %v3174 = vmul.f32 %v3129, %v3173
    %vm3175 = vcmp.eq.f32.partialorder %v3129, inf
    %v3176 = vsel %vm3175, %v3129, %v3174
    %vm3177 = vcmp.eq.f32.partialorder %v3129, 0.0
    %v3178 = vand.u32 %v3129, 2147483648
    %v3179 = vsel %vm3177, %v3178, %v3176
    %v3180 = vrsqrt.pop %v3130
    %v3181 = vmul.f32 %v3130, %v3180
    %vm3182 = vcmp.eq.f32.partialorder %v3130, inf
    %v3183 = vsel %vm3182, %v3130, %v3181
    %vm3184 = vcmp.eq.f32.partialorder %v3130, 0.0
    %v3185 = vand.u32 %v3130, 2147483648
    %v3186 = vsel %vm3184, %v3185, %v3183
    %v3187 = vmul.f32 %v3085, 0.9553365
    %v3188 = vmul.f32 %v3087, 0.9553365
    %v3189 = vmul.f32 %v3091, 0.9553365
    %v3190 = vmul.f32 %v3093, 0.9553365
    %v3191 = vmul.f32 %v3097, 0.9553365
    %v3192 = vmul.f32 %v3099, 0.9553365
    %v3193 = vmul.f32 %v3103, 0.9553365
    %v3194 = vmul.f32 %v3105, 0.9553365
    %v3195 = vmul.f32 %v3137, 0.29552022
    %v3196 = vmul.f32 %v3144, 0.29552022
    %v3197 = vmul.f32 %v3151, 0.29552022
    %v3198 = vmul.f32 %v3158, 0.29552022
    %v3199 = vmul.f32 %v3165, 0.29552022
    %v3200 = vmul.f32 %v3172, 0.29552022
    %v3201 = vmul.f32 %v3179, 0.29552022
    %v3202 = vmul.f32 %v3186, 0.29552022
    %v3203 = vsub.f32 %v3187, %v3195
    %v3204 = vsub.f32 %v3188, %v3196
    %v3205 = vsub.f32 %v3189, %v3197
    %v3206 = vsub.f32 %v3190, %v3198
    %v3207 = vsub.f32 %v3191, %v3199
    %v3208 = vsub.f32 %v3192, %v3200
    %v3209 = vsub.f32 %v3193, %v3201
    %v3210 = vsub.f32 %v3194, %v3202
    %vm3211 = vcmp.gt.f32.partialorder %v3085, -0.9553365
    %vm3212 = vcmp.gt.f32.partialorder %v3087, -0.9553365
    %vm3213 = vcmp.gt.f32.partialorder %v3091, -0.9553365
    %vm3214 = vcmp.gt.f32.partialorder %v3093, -0.9553365
    %vm3215 = vcmp.gt.f32.partialorder %v3097, -0.9553365
    %vm3216 = vcmp.gt.f32.partialorder %v3099, -0.9553365
    %vm3217 = vcmp.gt.f32.partialorder %v3103, -0.9553365
    %vm3218 = vcmp.gt.f32.partialorder %v3105, -0.9553365
    %v3219 = vsub.f32 %v3085, 0.08865606
    %v3220 = vsub.f32 %v3087, 0.08865606
    %v3221 = vsub.f32 %v3091, 0.08865606
    %v3222 = vsub.f32 %v3093, 0.08865606
    %v3223 = vsub.f32 %v3097, 0.08865606
    %v3224 = vsub.f32 %v3099, 0.08865606
    %v3225 = vsub.f32 %v3103, 0.08865606
    %v3226 = vsub.f32 %v3105, 0.08865606
    %v3227 = vsel %vm3211, %v3203, %v3219
    %v3228 = vsel %vm3212, %v3204, %v3220
    %v3229 = vsel %vm3213, %v3205, %v3221
    %v3230 = vsel %vm3214, %v3206, %v3222
    %v3231 = vsel %vm3215, %v3207, %v3223
    %v3232 = vsel %vm3216, %v3208, %v3224
    %v3233 = vsel %vm3217, %v3209, %v3225
    %v3234 = vsel %vm3218, %v3210, %v3226
    %v3235 = vlaneseq
    %v3236 = vand.u32 %v3235, 127
    %v3237 = vadd.s32 %v3236, 128
    %v3238 = vld [vmem:[#allocation20] sm:$0xff]
    %v3239 = vld [vmem:[#allocation20 + $0x8] sm:$0xff]
    %v3240 = vld [vmem:[#allocation20 + $0x10] sm:$0xff]
    %v3241 = vld [vmem:[#allocation20 + $0x18] sm:$0xff]
    %3242 = vset.pattern.permute.xlu0 0
    %3243 = vperm.xlu0 %3242, %v3238
    %v3244 = vpop.permute.xlu0 %3243
    %3245 = vset.pattern.permute.xlu0 0
    %3246 = vperm.xlu0 %3245, %v3239
    %v3247 = vpop.permute.xlu0 %3246
    %3248 = vset.pattern.permute.xlu0 0
    %3249 = vperm.xlu0 %3248, %v3240
    %v3250 = vpop.permute.xlu0 %3249
    %3251 = vset.pattern.permute.xlu0 0
    %3252 = vperm.xlu0 %3251, %v3241
    %v3253 = vpop.permute.xlu0 %3252
    %vm3254 = vcmp.eq.s32.totalorder %v3236, %v3244
    %vm3255 = vcmp.eq.s32.totalorder %v3237, %v3244
    %vm3256 = vcmp.eq.s32.totalorder %v3236, %v3247
    %vm3257 = vcmp.eq.s32.totalorder %v3237, %v3247
    %vm3258 = vcmp.eq.s32.totalorder %v3236, %v3250
    %vm3259 = vcmp.eq.s32.totalorder %v3237, %v3250
    %vm3260 = vcmp.eq.s32.totalorder %v3236, %v3253
    %vm3261 = vcmp.eq.s32.totalorder %v3237, %v3253
    %v3262 = vsel %vm3254, %v3227, %v3085
    %v3263 = vsel %vm3255, %v3228, %v3087
    %v3264 = vsel %vm3256, %v3229, %v3091
    %v3265 = vsel %vm3257, %v3230, %v3093
    %v3266 = vsel %vm3258, %v3231, %v3097
    %v3267 = vsel %vm3259, %v3232, %v3099
    %v3268 = vsel %vm3260, %v3233, %v3103
    %v3269 = vsel %vm3261, %v3234, %v3105
    %v3270 = vmul.f32 %v3262, 30.0
    %v3271 = vmul.f32 %v3263, 30.0
    %v3272 = vmul.f32 %v3264, 30.0
    %v3273 = vmul.f32 %v3265, 30.0
    %v3274 = vmul.f32 %v3266, 30.0
    %v3275 = vmul.f32 %v3267, 30.0
    %v3276 = vmul.f32 %v3268, 30.0
    %v3277 = vmul.f32 %v3269, 30.0
    %3278 = vst [vmem:[#allocation22] sm:$0xff] %v3270
    %3279 = vst [vmem:[#allocation22 + $0x8] sm:$0xff] %v3271
    %3280 = vst [vmem:[#allocation22 + $0x10] sm:$0xff] %v3272
    %3281 = vst [vmem:[#allocation22 + $0x18] sm:$0xff] %v3273
    %3282 = vst [vmem:[#allocation22 + $0x20] sm:$0xff] %v3274
    %3283 = vst [vmem:[#allocation22 + $0x28] sm:$0xff] %v3275
    %3284 = vst [vmem:[#allocation22 + $0x30] sm:$0xff] %v3276
    %3285 = vst [vmem:[#allocation22 + $0x38] sm:$0xff] %v3277
    // Predicated region
    $region98: #{tpu_custom_call.1} parent=1 // pred_check
      _
    $region99: #{tpu_custom_call.1} parent=1 // pred_check_branch
      %3287 = sbr.rel (0) target = $region101
    $region100: #{tpu_custom_call.1} parent=1 // pred_region
      %s3289 = ssub.s32 1024, 1024
      %3290 = vsyncadd [#allocation4], %s3289
      %s3291 = sshll.u32 [#allocation22], 4
      %s3292 = int_to_ptr.vmem [resolvable:$true] %s3291
      %3297 = dma.vmem_to_hbm [thread:$0]  %s3292, 1024, %s12, [#allocation4], 256, 256, 16
    $region101: #{tpu_custom_call.1} parent=1 // pred_fallthru
      _
    // Predicated region
    $region102: #{tpu_custom_call.1} parent=1 // pred_check
      _
    $region103: #{tpu_custom_call.1} parent=1 // pred_check_branch
      %3299 = sbr.rel (0) target = $region105
    $region104: #{tpu_custom_call.1} parent=1 // pred_region
      %3300 = dma.done [#allocation4], 1024
    $region105: #{tpu_custom_call.1} parent=1 // pred_fallthru
      _
    %3301 = vsyncpa [#allocation3], 1
    %3302 = vsyncpa [#allocation6], 1
    %3303 = vsyncpa [#allocation9], 1
    %3304 = vsyncpa [#allocation12], 1
    %3305 = vsyncpa [#allocation15], 1
    %3306 = vsyncpa [#allocation18], 1
    %3307 = vsyncpa [#allocation21], 1
    %3308 = vsyncpa [#allocation4], 1

</llo_original>
